<compile_context>
chip_gen: v7x
topology: tpu7x:2x2x1
jax: 0.10.0
libtpu: 0.0.40
codegen_flags: <defaults>
</compile_context>

<pallas_src>
import functools
import math

import jax
import jax.numpy as jnp
from jax.experimental import pallas as pl
from jax.experimental.pallas import tpu as pltpu

E11_ID = 30522   # '[E11]' entity-marker token id
E21_ID = 30524   # '[E21]' entity-marker token id

LN_EPS = 1e-12


@functools.lru_cache(maxsize=None)
def _vmem_limit_bytes():
    """Per-chip scoped-VMEM cap: ~48 MiB on v7x (64 MiB phys), ~96 MiB on v5e/v6e."""
    try:
        cap = int(pltpu.get_tpu_info().vmem_capacity_bytes)
    except Exception:  # pragma: no cover - conservative fallback
        cap = 64 * 1024 * 1024
    return min(max(cap - 16 * 1024 * 1024, 32 * 1024 * 1024), 96 * 1024 * 1024)


def _tile(dim, preferred, align):
    """Largest tile <= preferred that divides `dim` and is `align`-aligned, else full dim."""
    if dim <= preferred:
        return dim
    t = (preferred // align) * align
    while t >= align:
        if dim % t == 0:
            return t
        t -= align
    return dim


def _as_bf16(v):
    return v if v.dtype == jnp.bfloat16 else v.astype(jnp.bfloat16)


# ----------------------- fused linear: bias (+ optional GELU) -----------------------

def _linear_kernel(x_ref, w_ref, b_ref, o_ref, acc_ref, *, activation):
    @pl.when(pl.program_id(2) == 0)
    def _():
        acc_ref[...] = jnp.zeros_like(acc_ref)

    acc_ref[...] += jnp.dot(_as_bf16(x_ref[...]), w_ref[...],
                            preferred_element_type=jnp.float32)

    @pl.when(pl.program_id(2) == pl.num_programs(2) - 1)
    def _():
        y = acc_ref[...] + b_ref[...]
        if activation == "gelu":
            # tanh-approx GELU in f32 (EUP tanh).
            # TODO(synk): HF BERT default hidden_act is erf-GELU; tanh approximation used here.
            c = jnp.float32(0.7978845608028654)
            y = 0.5 * y * (1.0 + jnp.tanh(c * (y + 0.044715 * y * y * y)))
        o_ref[...] = y.astype(o_ref.dtype)


def linear(x, w, b, activation=None, *, tm=512, tn=512, tk=512,
           out_dtype=jnp.bfloat16):
    """y = act(x @ w + b), tiled over (M/tm, N/tn, K/tk) with f32 VMEM accumulator."""
    M, K = x.shape
    K2, N = w.shape
    assert K == K2
    tm = _tile(M, tm, 16)      # bf16-friendly sublane alignment
    tn = _tile(N, tn, 128)
    tk = _tile(K, tk, 128)
    gm, gn, gk = M // tm, N // tn, K // tk
    out_isz = jnp.dtype(out_dtype).itemsize
    cost = pl.CostEstimate(
        flops=int(2 * M * N * K),
        transcendentals=int(M * N) if activation == "gelu" else 0,
        # x is re-DMA'd once per N tile, w once per M tile.
        bytes_accessed=int(M * K * x.dtype.itemsize * gn
                           + K * N * w.dtype.itemsize * gm
                           + M * N * out_isz + N * 4))
    return pl.pallas_call(
        functools.partial(_linear_kernel, activation=activation),
        out_shape=jax.ShapeDtypeStruct((M, N), out_dtype),
        grid_spec=pltpu.PrefetchScalarGridSpec(
            num_scalar_prefetch=0,
            grid=(gm, gn, gk),
            in_specs=[pl.BlockSpec((tm, tk), lambda i, j, k: (i, k)),
                      pl.BlockSpec((tk, tn), lambda i, j, k: (k, j)),
                      pl.BlockSpec((1, tn), lambda i, j, k: (0, j))],
            out_specs=pl.BlockSpec((tm, tn), lambda i, j, k: (i, j)),
            scratch_shapes=[pltpu.VMEM((tm, tn), jnp.float32)]),
        compiler_params=pltpu.CompilerParams(
            dimension_semantics=("parallel", "parallel", "arbitrary"),
            vmem_limit_bytes=_vmem_limit_bytes()),
        cost_estimate=cost,
    )(x, w, b.reshape(1, N))


# -------------------- fused linear + bias + residual + LayerNorm --------------------

def _linear_res_ln_kernel(x_ref, w_ref, b_ref, r_ref, g_ref, bt_ref, o_ref, acc_ref,
                          *, eps):
    @pl.when(pl.program_id(1) == 0)
    def _():
        acc_ref[...] = jnp.zeros_like(acc_ref)

    acc_ref[...] += jnp.dot(_as_bf16(x_ref[...]), w_ref[...],
                            preferred_element_type=jnp.float32)

    @pl.when(pl.program_id(1) == pl.num_programs(1) - 1)
    def _():
        y = acc_ref[...] + b_ref[...] + r_ref[...].astype(jnp.float32)   # residual in f32
        mu = jnp.mean(y, axis=-1, keepdims=True)
        yc = y - mu
        var = jnp.mean(yc * yc, axis=-1, keepdims=True)
        o_ref[...] = (yc * jax.lax.rsqrt(var + eps) * g_ref[...]
                      + bt_ref[...]).astype(o_ref.dtype)


def linear_residual_layernorm(x, w, b, res, gamma, beta, *, tm=512, tk=512, eps=LN_EPS):
    """y = LayerNorm(x @ w + b + res); tiled over (M/tm, K/tk); N kept whole (LN axis)."""
    M, K = x.shape
    K2, N = w.shape
    assert K == K2 and res.shape == (M, N)
    tm = _tile(M, tm, 16)
    tk = _tile(K, tk, 128)
    gm, gk = M // tm, K // tk
    cost = pl.CostEstimate(
        flops=int(2 * M * N * K + 8 * M * N),
        transcendentals=int(M),
        bytes_accessed=int(M * K * x.dtype.itemsize
                           + K * N * w.dtype.itemsize * gm
                           + 2 * M * N * 2 + 3 * N * 4))
    return pl.pallas_call(
        functools.partial(_linear_res_ln_kernel, eps=eps),
        out_shape=jax.ShapeDtypeStruct((M, N), jnp.bfloat16),
        grid_spec=pltpu.PrefetchScalarGridSpec(
            num_scalar_prefetch=0,
            grid=(gm, gk),
            in_specs=[pl.BlockSpec((tm, tk), lambda i, k: (i, k)),
                      pl.BlockSpec((tk, N), lambda i, k: (k, 0)),
                      pl.BlockSpec((1, N), lambda i, k: (0, 0)),
                      pl.BlockSpec((tm, N), lambda i, k: (i, 0)),
                      pl.BlockSpec((1, N), lambda i, k: (0, 0)),
                      pl.BlockSpec((1, N), lambda i, k: (0, 0))],
            out_specs=pl.BlockSpec((tm, N), lambda i, k: (i, 0)),
            scratch_shapes=[pltpu.VMEM((tm, N), jnp.float32)]),
        compiler_params=pltpu.CompilerParams(
            dimension_semantics=("parallel", "arbitrary"),
            vmem_limit_bytes=_vmem_limit_bytes()),
        cost_estimate=cost,
    )(x, w, b.reshape(1, N), res, gamma.reshape(1, N), beta.reshape(1, N))


# ----------------------------- plain LayerNorm (embeddings) -----------------------------

def _layernorm_kernel(x_ref, g_ref, b_ref, o_ref, *, eps):
    x = x_ref[...].astype(jnp.float32)
    mu = jnp.mean(x, axis=-1, keepdims=True)
    xc = x - mu
    var = jnp.mean(xc * xc, axis=-1, keepdims=True)
    o_ref[...] = (xc * jax.lax.rsqrt(var + eps) * g_ref[...] + b_ref[...]).astype(o_ref.dtype)


def layernorm(x, gamma, beta, *, tm=512, eps=LN_EPS):
    M, H = x.shape
    tm = _tile(M, tm, 16)
    grid = (M // tm,)
    return pl.pallas_call(
        functools.partial(_layernorm_kernel, eps=eps),
        out_shape=jax.ShapeDtypeStruct((M, H), jnp.bfloat16),
        grid_spec=pltpu.PrefetchScalarGridSpec(
            num_scalar_prefetch=0,
            grid=grid,
            in_specs=[pl.BlockSpec((tm, H), lambda i: (i, 0)),
                      pl.BlockSpec((1, H), lambda i: (0, 0)),
                      pl.BlockSpec((1, H), lambda i: (0, 0))],
            out_specs=pl.BlockSpec((tm, H), lambda i: (i, 0))),
        compiler_params=pltpu.CompilerParams(
            dimension_semantics=("parallel",),
            vmem_limit_bytes=_vmem_limit_bytes()),
    )(x, gamma.reshape(1, H), beta.reshape(1, H))


# --------------------------- fused multi-head self-attention ---------------------------

def _attention_kernel(q_ref, k_ref, v_ref, o_ref, *, hg, dh):
    # One (batch, head-group) grid step. 1/sqrt(dh) already folded into the Q weights.
    # Heads are sliced from the refs on demand to bound vreg live ranges.
    outs = []
    for h in range(hg):                                   # static unroll, hg small
        q = q_ref[:, h * dh:(h + 1) * dh]                 # bf16 [S, dh]
        k = k_ref[:, h * dh:(h + 1) * dh]
        v = v_ref[:, h * dh:(h + 1) * dh]
        # scores = q @ k^T via dot_general (contract last dims), MXU bf16 -> f32 acc.
        s = jax.lax.dot_general(q, k, (((1,), (1,)), ((), ())),
                                preferred_element_type=jnp.float32)
        m = jnp.max(s, axis=-1, keepdims=True)            # softmax stats in f32
        p = jnp.exp(s - m)
        p = p * pl.reciprocal(jnp.sum(p, axis=-1, keepdims=True), approx=True)
        outs.append(jnp.dot(p.astype(jnp.bfloat16), v,
                            preferred_element_type=jnp.float32))
    ctx = outs[0] if hg == 1 else jnp.concatenate(outs, axis=-1)
    o_ref[...] = ctx.astype(o_ref.dtype)                  # single lane-dense store


def attention(qkv, *, batch, seq, heads, hidden):
    # TODO(synk): for seq beyond a few hundred, restructure as an online-softmax (flash)
    # kernel with a KV grid axis so the per-step block footprint is independent of S
    # (required for v7x's 64 MiB VMEM at long sequences).
    dh = hidden // heads
    hg = math.gcd(heads, max(1, 128 // dh))   # heads per group; 128-lane groups for dh=64
    qw = hg * dh                              # group lane width
    n_groups = heads // hg
    k_off = hidden // qw
    v_off = 2 * hidden // qw
    qkv3 = qkv.reshape(batch, seq, 3 * hidden)
    out = pl.pallas_call(
        functools.partial(_attention_kernel, hg=hg, dh=dh),
        out_shape=jax.ShapeDtypeStruct((batch, seq, hidden), jnp.bfloat16),
        grid_spec=pltpu.PrefetchScalarGridSpec(
            num_scalar_prefetch=0,
            grid=(batch, n_groups),
            in_specs=[  # qkv passed 3x: Q / K / V column regions as 128-lane blocks
                pl.BlockSpec((pl.Squeezed(), seq, qw), lambda b, j: (b, 0, j)),
                pl.BlockSpec((pl.Squeezed(), seq, qw), lambda b, j: (b, 0, k_off + j)),
                pl.BlockSpec((pl.Squeezed(), seq, qw), lambda b, j: (b, 0, v_off + j)),
            ],
            out_specs=pl.BlockSpec((pl.Squeezed(), seq, qw), lambda b, j: (b, 0, j))),
        compiler_params=pltpu.CompilerParams(
            dimension_semantics=("parallel", "parallel"),
            vmem_limit_bytes=_vmem_limit_bytes()),
        cost_estimate=pl.CostEstimate(
            flops=int(4 * batch * heads * seq * seq * dh),
            transcendentals=int(batch * heads * seq * seq),
            bytes_accessed=int(batch * seq * 3 * hidden * 2 + batch * seq * hidden * 2)),
    )(qkv3, qkv3, qkv3)
    return out.reshape(batch * seq, hidden)


# --------------------------------- parameter creation ---------------------------------

def init_params(key, vocab, max_pos, hidden, inter, num_layers, out_size, heads):
    def nrm(k, shape):
        return 0.02 * jax.random.normal(k, shape, jnp.float32)

    dh = hidden // heads
    scale = 1.0 / (dh ** 0.5)

    keys = iter(jax.random.split(key, 8 + num_layers * 8))
    params = {
        "word_emb": nrm(next(keys), (vocab, hidden)),
        "pos_emb": nrm(next(keys), (max_pos, hidden)),
        "type_emb": nrm(next(keys), (2, hidden)),
        "emb_ln_g": jnp.ones((hidden,), jnp.float32),
        "emb_ln_b": jnp.zeros((hidden,), jnp.float32),
        # linear_transform: (hidden*2 -> output_size), bf16 weight for MXU feed
        "lt_w": nrm(next(keys), (2 * hidden, out_size)).astype(jnp.bfloat16),
        "lt_b": jnp.zeros((out_size,), jnp.float32),
        "layers": [],
    }
    for _ in range(num_layers):
        wq = (nrm(next(keys), (hidden, hidden)) * scale).astype(jnp.bfloat16)  # fold 1/sqrt(dh)
        wk = nrm(next(keys), (hidden, hidden)).astype(jnp.bfloat16)
        wv = nrm(next(keys), (hidden, hidden)).astype(jnp.bfloat16)
        lp = {
            "wqkv": jnp.concatenate([wq, wk, wv], axis=1),          # fused [H, 3H]
            "bqkv": jnp.zeros((3 * hidden,), jnp.float32),
            "wo": nrm(next(keys), (hidden, hidden)).astype(jnp.bfloat16),
            "bo": jnp.zeros((hidden,), jnp.float32),
            "ln1_g": jnp.ones((hidden,), jnp.float32),
            "ln1_b": jnp.zeros((hidden,), jnp.float32),
            "wi": nrm(next(keys), (hidden, inter)).astype(jnp.bfloat16),
            "bi": jnp.zeros((inter,), jnp.float32),
            "wo2": nrm(next(keys), (inter, hidden)).astype(jnp.bfloat16),
            "bo2": jnp.zeros((hidden,), jnp.float32),
            "ln2_g": jnp.ones((hidden,), jnp.float32),
            "ln2_b": jnp.zeros((hidden,), jnp.float32),
        }
        params["layers"].append(lp)
    return params


# ------------------------------------ forward pass ------------------------------------

def bert_encoder_forward(params, inputs, *, heads):
    B, S = inputs.shape
    H = params["word_emb"].shape[1]

    # Embeddings (lookup/adds are JAX glue) + LayerNorm (Pallas); activations -> bf16.
    x = (jnp.take(params["word_emb"], inputs, axis=0)
         + params["pos_emb"][None, :S, :]
         + params["type_emb"][0][None, None, :])
    x = x.reshape(B * S, H).astype(jnp.float32)
    x = layernorm(x, params["emb_ln_g"], params["emb_ln_b"])          # bf16 [B*S, H]

    for lp in params["layers"]:
        qkv = linear(x, lp["wqkv"], lp["bqkv"])                       # fused Q|K|V, bf16
        ctx = attention(qkv, batch=B, seq=S, heads=heads, hidden=H)   # per (batch, head-group)
        x = linear_residual_layernorm(ctx, lp["wo"], lp["bo"], x,
                                      lp["ln1_g"], lp["ln1_b"])       # attn-out + res + LN
        h_up = linear(x, lp["wi"], lp["bi"], activation="gelu")       # FFN up + GELU, bf16
        x = linear_residual_layernorm(h_up, lp["wo2"], lp["bo2"], x,
                                      lp["ln2_g"], lp["ln2_b"])       # FFN down + res + LN

    # entity_marker head: gather [E11]/[E21] hidden states, concat, project.
    tok = x.reshape(B, S, H)
    # NOTE: argmax returns 0 if a marker is absent (PyTorch reference would raise).
    e11 = jnp.argmax(inputs == E11_ID, axis=1)
    e21 = jnp.argmax(inputs == E21_ID, axis=1)
    h1 = tok[jnp.arange(B), e11]                                      # [B, H]
    h2 = tok[jnp.arange(B), e21]                                      # [B, H]
    feat = jnp.concatenate([h1, h2], axis=-1)                         # [B, 2H] bf16
    return linear(feat, params["lt_w"], params["lt_b"],
                  out_dtype=jnp.float32)                              # [B, output_size] f32


# ---------------------------------------- main ----------------------------------------

if __name__ == "__main__":
    # Small shapes that still exercise the 128-lane head-group attention path (dh=64).
    B, S = 2, 8
    hidden, heads, layers, inter = 128, 2, 2, 256
    output_size = 64
    vocab = 30528  # base vocab (30522) + marker tokens, per entity_marker resize

    key = jax.random.PRNGKey(0)
    pkey, ikey = jax.random.split(key)
    params = init_params(pkey, vocab, S, hidden, inter, layers, output_size, heads)

    tokens = jax.random.randint(ikey, (B, S), 0, 30522, dtype=jnp.int32)
    # place entity-marker tokens ([E11]=30522, [E21]=30524) in every row
    tokens = tokens.at[0, 2].set(E11_ID).at[0, 5].set(E21_ID)
    tokens = tokens.at[1, 1].set(E11_ID).at[1, 6].set(E21_ID)

    fwd = jax.jit(functools.partial(bert_encoder_forward, heads=heads))
    out = fwd(params, tokens)
    out = jax.block_until_ready(out)
    assert out.shape == (B, output_size)
    assert out.dtype == jnp.float32
    print("KERNEL_OK")
</pallas_src>

<mosaic_0001>
module attributes {stable_mosaic.version = 11 : i64} {
  func.func @_linear_kernel(%arg0: i32, %arg1: i32, %arg2: i32, %arg3: memref<16x128xbf16, #tpu.memory_space<vmem>>, %arg4: memref<128x384xbf16, #tpu.memory_space<vmem>>, %arg5: memref<1x384xf32, #tpu.memory_space<vmem>>, %arg6: memref<16x384xbf16, #tpu.memory_space<vmem>>, %arg7: memref<16x384xf32, #tpu.memory_space<vmem>>) attributes {dimension_semantics = [#tpu.dimension_semantics<parallel>, #tpu.dimension_semantics<parallel>, #tpu.dimension_semantics<arbitrary>], iteration_bounds = array<i64: 1, 1, 1>, scalar_prefetch = 0 : i64, scratch_operands = 1 : i64, tpu.core_type = #tpu.core_type<tc>, window_params = [{transform_indices = @transform_0, window_bounds = array<i64: 16, 128>}, {transform_indices = @transform_1, window_bounds = array<i64: 128, 384>}, {transform_indices = @transform_2, window_bounds = array<i64: 1, 384>}, {transform_indices = @transform_3, window_bounds = array<i64: 16, 384>}]} {
    %c0_i32 = arith.constant 0 : i32
    %0 = arith.cmpi eq, %arg2, %c0_i32 : i32
    %1 = arith.extui %0 : i1 to i32
    %c0_i32_0 = arith.constant 0 : i32
    %2 = arith.cmpi ne, %1, %c0_i32_0 : i32
    scf.if %2 {
      %cst_10 = arith.constant 0.000000e+00 : f32
      %12 = vector.broadcast %cst_10 : f32 to vector<16x384xf32>
      %c0_11 = arith.constant 0 : index
      %c0_12 = arith.constant 0 : index
      %13 = vector.load %arg7[%c0_11, %c0_12] : memref<16x384xf32, #tpu.memory_space<vmem>>, vector<16x384xf32>
      tpu.vector_store %arg7[%c0_11, %c0_12], %12 {strides = array<i32>} : memref<16x384xf32, #tpu.memory_space<vmem>>, vector<16x384xf32>,
    } else {
    }
    %c0 = arith.constant 0 : index
    %c0_1 = arith.constant 0 : index
    %3 = vector.load %arg7[%c0, %c0_1] : memref<16x384xf32, #tpu.memory_space<vmem>>, vector<16x384xf32>
    %c0_2 = arith.constant 0 : index
    %c0_3 = arith.constant 0 : index
    %4 = vector.load %arg3[%c0_2, %c0_3] : memref<16x128xbf16, #tpu.memory_space<vmem>>, vector<16x128xbf16>
    %c0_4 = arith.constant 0 : index
    %c0_5 = arith.constant 0 : index
    %5 = vector.load %arg4[%c0_4, %c0_5] : memref<128x384xbf16, #tpu.memory_space<vmem>>, vector<128x384xbf16>
    %cst = arith.constant dense<0.000000e+00> : vector<16x384xf32>
    %6 = tpu.matmul %4, %5, %cst {dimension_numbers = #tpu.dot_dimension_numbers<[1], [0], [0], [1], [0, 0, 1, 1], [], []>} : vector<16x128xbf16>, vector<128x384xbf16>, vector<16x384xf32> -> vector<16x384xf32>
    %7 = arith.addf %3, %6 : vector<16x384xf32>
    %c0_6 = arith.constant 0 : index
    %c0_7 = arith.constant 0 : index
    %8 = vector.load %arg7[%c0_6, %c0_7] : memref<16x384xf32, #tpu.memory_space<vmem>>, vector<16x384xf32>
    tpu.vector_store %arg7[%c0_6, %c0_7], %7 {strides = array<i32>} : memref<16x384xf32, #tpu.memory_space<vmem>>, vector<16x384xf32>,
    %c0_i32_8 = arith.constant 0 : i32
    %9 = arith.cmpi eq, %arg2, %c0_i32_8 : i32
    %10 = arith.extui %9 : i1 to i32
    %c0_i32_9 = arith.constant 0 : i32
    %11 = arith.cmpi ne, %10, %c0_i32_9 : i32
    scf.if %11 {
      %c0_10 = arith.constant 0 : index
      %c0_11 = arith.constant 0 : index
      %12 = vector.load %arg7[%c0_10, %c0_11] : memref<16x384xf32, #tpu.memory_space<vmem>>, vector<16x384xf32>
      %c0_12 = arith.constant 0 : index
      %c0_13 = arith.constant 0 : index
      %13 = vector.load %arg5[%c0_12, %c0_13] : memref<1x384xf32, #tpu.memory_space<vmem>>, vector<1x384xf32>
      %14 = vector.broadcast %13 : vector<1x384xf32> to vector<16x384xf32>
      %15 = arith.addf %12, %14 : vector<16x384xf32>
      %16 = arith.truncf %15 : vector<16x384xf32> to vector<16x384xbf16>
      %c0_14 = arith.constant 0 : index
      %c0_15 = arith.constant 0 : index
      %17 = vector.load %arg6[%c0_14, %c0_15] : memref<16x384xbf16, #tpu.memory_space<vmem>>, vector<16x384xbf16>
      tpu.vector_store %arg6[%c0_14, %c0_15], %16 {strides = array<i32>} : memref<16x384xbf16, #tpu.memory_space<vmem>>, vector<16x384xbf16>,
    } else {
    }
    return
  }
  func.func @transform_0(%arg0: i32, %arg1: i32, %arg2: i32) -> (i32, i32) {
    %c0_i32 = arith.constant 0 : i32
    return %arg0, %arg2 : i32, i32
  }
  func.func @transform_1(%arg0: i32, %arg1: i32, %arg2: i32) -> (i32, i32) {
    %c0_i32 = arith.constant 0 : i32
    return %arg2, %arg1 : i32, i32
  }
  func.func @transform_2(%arg0: i32, %arg1: i32, %arg2: i32) -> (i32, i32) {
    %c0_i32 = arith.constant 0 : i32
    %c0_i32_0 = arith.constant 0 : i32
    return %c0_i32, %arg1 : i32, i32
  }
  func.func @transform_3(%arg0: i32, %arg1: i32, %arg2: i32) -> (i32, i32) {
    %c0_i32 = arith.constant 0 : i32
    return %arg0, %arg1 : i32, i32
  }
}

module attributes {stable_mosaic.version = 11 : i64} {
  func.func @_layernorm_kernel(%arg0: i32, %arg1: memref<16x128xf32, #tpu.memory_space<vmem>>, %arg2: memref<1x128xf32, #tpu.memory_space<vmem>>, %arg3: memref<1x128xf32, #tpu.memory_space<vmem>>, %arg4: memref<16x128xbf16, #tpu.memory_space<vmem>>) attributes {dimension_semantics = [#tpu.dimension_semantics<parallel>], iteration_bounds = array<i64: 1>, scalar_prefetch = 0 : i64, scratch_operands = 0 : i64, tpu.core_type = #tpu.core_type<tc>, window_params = [{transform_indices = @transform_0, window_bounds = array<i64: 16, 128>}, {pipeline_mode = #tpu.pipeline_mode<synchronous>, transform_indices = @transform_1, window_bounds = array<i64: 1, 128>}, {pipeline_mode = #tpu.pipeline_mode<synchronous>, transform_indices = @transform_2, window_bounds = array<i64: 1, 128>}, {transform_indices = @transform_3, window_bounds = array<i64: 16, 128>}]} {
    %c0 = arith.constant 0 : index
    %c0_0 = arith.constant 0 : index
    %0 = vector.load %arg1[%c0, %c0_0] : memref<16x128xf32, #tpu.memory_space<vmem>>, vector<16x128xf32>
    %cst = arith.constant dense<0.000000e+00> : vector<16xf32>
    %1 = vector.multi_reduction <add>, %0, %cst [1] : vector<16x128xf32> to vector<16xf32>
    %2 = vector.shape_cast %1 : vector<16xf32> to vector<16x1xf32>
    %cst_1 = arith.constant 1.280000e+02 : f32
    %3 = vector.broadcast %cst_1 : f32 to vector<16x1xf32>
    %4 = arith.divf %2, %3 : vector<16x1xf32>
    %5 = vector.broadcast %4 : vector<16x1xf32> to vector<16x128xf32>
    %6 = arith.subf %0, %5 : vector<16x128xf32>
    %7 = arith.mulf %6, %6 : vector<16x128xf32>
    %cst_2 = arith.constant dense<0.000000e+00> : vector<16xf32>
    %8 = vector.multi_reduction <add>, %7, %cst_2 [1] : vector<16x128xf32> to vector<16xf32>
    %9 = vector.shape_cast %8 : vector<16xf32> to vector<16x1xf32>
    %cst_3 = arith.constant 1.280000e+02 : f32
    %10 = vector.broadcast %cst_3 : f32 to vector<16x1xf32>
    %11 = arith.divf %9, %10 : vector<16x1xf32>
    %cst_4 = arith.constant 9.99999996E-13 : f32
    %12 = vector.broadcast %cst_4 : f32 to vector<16x1xf32>
    %13 = arith.addf %11, %12 : vector<16x1xf32>
    %14 = math.rsqrt %13 : vector<16x1xf32>
    %15 = vector.broadcast %14 : vector<16x1xf32> to vector<16x128xf32>
    %16 = arith.mulf %6, %15 : vector<16x128xf32>
    %c0_5 = arith.constant 0 : index
    %c0_6 = arith.constant 0 : index
    %17 = vector.load %arg2[%c0_5, %c0_6] : memref<1x128xf32, #tpu.memory_space<vmem>>, vector<1x128xf32>
    %18 = vector.broadcast %17 : vector<1x128xf32> to vector<16x128xf32>
    %19 = arith.mulf %16, %18 : vector<16x128xf32>
    %c0_7 = arith.constant 0 : index
    %c0_8 = arith.constant 0 : index
    %20 = vector.load %arg3[%c0_7, %c0_8] : memref<1x128xf32, #tpu.memory_space<vmem>>, vector<1x128xf32>
    %21 = vector.broadcast %20 : vector<1x128xf32> to vector<16x128xf32>
    %22 = arith.addf %19, %21 : vector<16x128xf32>
    %23 = arith.truncf %22 : vector<16x128xf32> to vector<16x128xbf16>
    %c0_9 = arith.constant 0 : index
    %c0_10 = arith.constant 0 : index
    %24 = vector.load %arg4[%c0_9, %c0_10] : memref<16x128xbf16, #tpu.memory_space<vmem>>, vector<16x128xbf16>
    tpu.vector_store %arg4[%c0_9, %c0_10], %23 {strides = array<i32>} : memref<16x128xbf16, #tpu.memory_space<vmem>>, vector<16x128xbf16>,
    return
  }
  func.func @transform_0(%arg0: i32) -> (i32, i32) {
    %c0_i32 = arith.constant 0 : i32
    %c0_i32_0 = arith.constant 0 : i32
    return %arg0, %c0_i32 : i32, i32
  }
  func.func @transform_1(%arg0: i32) -> (i32, i32) {
    %c0_i32 = arith.constant 0 : i32
    %c0_i32_0 = arith.constant 0 : i32
    %c0_i32_1 = arith.constant 0 : i32
    return %c0_i32, %c0_i32_0 : i32, i32
  }
  func.func @transform_2(%arg0: i32) -> (i32, i32) {
    %c0_i32 = arith.constant 0 : i32
    %c0_i32_0 = arith.constant 0 : i32
    %c0_i32_1 = arith.constant 0 : i32
    return %c0_i32, %c0_i32_0 : i32, i32
  }
  func.func @transform_3(%arg0: i32) -> (i32, i32) {
    %c0_i32 = arith.constant 0 : i32
    %c0_i32_0 = arith.constant 0 : i32
    return %arg0, %c0_i32 : i32, i32
  }
}

module attributes {stable_mosaic.version = 11 : i64} {
  func.func @_attention_kernel(%arg0: i32, %arg1: i32, %arg2: memref<1x8x128xbf16, #tpu.memory_space<vmem>>, %arg3: memref<1x8x128xbf16, #tpu.memory_space<vmem>>, %arg4: memref<1x8x128xbf16, #tpu.memory_space<vmem>>, %arg5: memref<1x8x128xbf16, #tpu.memory_space<vmem>>) attributes {dimension_semantics = [#tpu.dimension_semantics<parallel>, #tpu.dimension_semantics<parallel>], iteration_bounds = array<i64: 2, 1>, scalar_prefetch = 0 : i64, scratch_operands = 0 : i64, tpu.core_type = #tpu.core_type<tc>, window_params = [{transform_indices = @transform_0, window_bounds = array<i64: 1, 8, 128>}, {transform_indices = @transform_1, window_bounds = array<i64: 1, 8, 128>}, {transform_indices = @transform_2, window_bounds = array<i64: 1, 8, 128>}, {transform_indices = @transform_3, window_bounds = array<i64: 1, 8, 128>}]} {
    %c0 = arith.constant 0 : index
    %c0_0 = arith.constant 0 : index
    %c0_1 = arith.constant 0 : index
    %0 = vector.load %arg2[%c0, %c0_0, %c0_1] : memref<1x8x128xbf16, #tpu.memory_space<vmem>>, vector<1x8x64xbf16>
    %1 = vector.shape_cast %0 : vector<1x8x64xbf16> to vector<8x64xbf16>
    %c0_2 = arith.constant 0 : index
    %c0_3 = arith.constant 0 : index
    %c0_4 = arith.constant 0 : index
    %2 = vector.load %arg3[%c0_2, %c0_3, %c0_4] : memref<1x8x128xbf16, #tpu.memory_space<vmem>>, vector<1x8x64xbf16>
    %3 = vector.shape_cast %2 : vector<1x8x64xbf16> to vector<8x64xbf16>
    %c0_5 = arith.constant 0 : index
    %c0_6 = arith.constant 0 : index
    %c0_7 = arith.constant 0 : index
    %4 = vector.load %arg4[%c0_5, %c0_6, %c0_7] : memref<1x8x128xbf16, #tpu.memory_space<vmem>>, vector<1x8x64xbf16>
    %5 = vector.shape_cast %4 : vector<1x8x64xbf16> to vector<8x64xbf16>
    %cst = arith.constant dense<0.000000e+00> : vector<8x8xf32>
    %6 = tpu.matmul %1, %3, %cst {dimension_numbers = #tpu.dot_dimension_numbers<[1], [1], [0], [0], [0, 0, 1, 0], [], []>} : vector<8x64xbf16>, vector<8x64xbf16>, vector<8x8xf32> -> vector<8x8xf32>
    %cst_8 = arith.constant dense<0xFF800000> : vector<8xf32>
    %7 = vector.multi_reduction <maximumf>, %6, %cst_8 [1] : vector<8x8xf32> to vector<8xf32>
    %8 = vector.shape_cast %7 : vector<8xf32> to vector<8x1xf32>
    %9 = vector.broadcast %8 : vector<8x1xf32> to vector<8x8xf32>
    %10 = arith.subf %6, %9 : vector<8x8xf32>
    %11 = math.exp %10 : vector<8x8xf32>
    %cst_9 = arith.constant dense<0.000000e+00> : vector<8xf32>
    %12 = vector.multi_reduction <add>, %11, %cst_9 [1] : vector<8x8xf32> to vector<8xf32>
    %13 = vector.shape_cast %12 : vector<8xf32> to vector<8x1xf32>
    %14 = tpu.reciprocal %13 {approx = true} : vector<8x1xf32> -> vector<8x1xf32>
    %15 = vector.broadcast %14 : vector<8x1xf32> to vector<8x8xf32>
    %16 = arith.mulf %11, %15 : vector<8x8xf32>
    %17 = arith.truncf %16 : vector<8x8xf32> to vector<8x8xbf16>
    %cst_10 = arith.constant dense<0.000000e+00> : vector<8x64xf32>
    %18 = tpu.matmul %17, %5, %cst_10 {dimension_numbers = #tpu.dot_dimension_numbers<[1], [0], [0], [1], [0, 0, 1, 1], [], []>} : vector<8x8xbf16>, vector<8x64xbf16>, vector<8x64xf32> -> vector<8x64xf32>
    %c0_11 = arith.constant 0 : index
    %c0_12 = arith.constant 0 : index
    %c64 = arith.constant 64 : index
    %19 = vector.load %arg2[%c0_11, %c0_12, %c64] : memref<1x8x128xbf16, #tpu.memory_space<vmem>>, vector<1x8x64xbf16>
    %20 = vector.shape_cast %19 : vector<1x8x64xbf16> to vector<8x64xbf16>
    %c0_13 = arith.constant 0 : index
    %c0_14 = arith.constant 0 : index
    %c64_15 = arith.constant 64 : index
    %21 = vector.load %arg3[%c0_13, %c0_14, %c64_15] : memref<1x8x128xbf16, #tpu.memory_space<vmem>>, vector<1x8x64xbf16>
    %22 = vector.shape_cast %21 : vector<1x8x64xbf16> to vector<8x64xbf16>
    %c0_16 = arith.constant 0 : index
    %c0_17 = arith.constant 0 : index
    %c64_18 = arith.constant 64 : index
    %23 = vector.load %arg4[%c0_16, %c0_17, %c64_18] : memref<1x8x128xbf16, #tpu.memory_space<vmem>>, vector<1x8x64xbf16>
    %24 = vector.shape_cast %23 : vector<1x8x64xbf16> to vector<8x64xbf16>
    %cst_19 = arith.constant dense<0.000000e+00> : vector<8x8xf32>
    %25 = tpu.matmul %20, %22, %cst_19 {dimension_numbers = #tpu.dot_dimension_numbers<[1], [1], [0], [0], [0, 0, 1, 0], [], []>} : vector<8x64xbf16>, vector<8x64xbf16>, vector<8x8xf32> -> vector<8x8xf32>
    %cst_20 = arith.constant dense<0xFF800000> : vector<8xf32>
    %26 = vector.multi_reduction <maximumf>, %25, %cst_20 [1] : vector<8x8xf32> to vector<8xf32>
    %27 = vector.shape_cast %26 : vector<8xf32> to vector<8x1xf32>
    %28 = vector.broadcast %27 : vector<8x1xf32> to vector<8x8xf32>
    %29 = arith.subf %25, %28 : vector<8x8xf32>
    %30 = math.exp %29 : vector<8x8xf32>
    %cst_21 = arith.constant dense<0.000000e+00> : vector<8xf32>
    %31 = vector.multi_reduction <add>, %30, %cst_21 [1] : vector<8x8xf32> to vector<8xf32>
    %32 = vector.shape_cast %31 : vector<8xf32> to vector<8x1xf32>
    %33 = tpu.reciprocal %32 {approx = true} : vector<8x1xf32> -> vector<8x1xf32>
    %34 = vector.broadcast %33 : vector<8x1xf32> to vector<8x8xf32>
    %35 = arith.mulf %30, %34 : vector<8x8xf32>
    %36 = arith.truncf %35 : vector<8x8xf32> to vector<8x8xbf16>
    %cst_22 = arith.constant dense<0.000000e+00> : vector<8x64xf32>
    %37 = tpu.matmul %36, %24, %cst_22 {dimension_numbers = #tpu.dot_dimension_numbers<[1], [0], [0], [1], [0, 0, 1, 1], [], []>} : vector<8x8xbf16>, vector<8x64xbf16>, vector<8x64xf32> -> vector<8x64xf32>
    %38 = tpu.concatenate %18, %37 in 1 : vector<8x64xf32>, vector<8x64xf32> -> vector<8x128xf32>
    %39 = arith.truncf %38 : vector<8x128xf32> to vector<8x128xbf16>
    %c0_23 = arith.constant 0 : index
    %c0_24 = arith.constant 0 : index
    %c0_25 = arith.constant 0 : index
    %40 = vector.load %arg5[%c0_23, %c0_24, %c0_25] : memref<1x8x128xbf16, #tpu.memory_space<vmem>>, vector<1x8x128xbf16>
    %41 = vector.shape_cast %40 : vector<1x8x128xbf16> to vector<8x128xbf16>
    %42 = vector.shape_cast %39 : vector<8x128xbf16> to vector<1x8x128xbf16>
    tpu.vector_store %arg5[%c0_23, %c0_24, %c0_25], %42 {strides = array<i32>} : memref<1x8x128xbf16, #tpu.memory_space<vmem>>, vector<1x8x128xbf16>,
    return
  }
  func.func @transform_0(%arg0: i32, %arg1: i32) -> (i32, i32, i32) {
    %c0_i32 = arith.constant 0 : i32
    %c0_i32_0 = arith.constant 0 : i32
    return %arg0, %c0_i32, %arg1 : i32, i32, i32
  }
  func.func @transform_1(%arg0: i32, %arg1: i32) -> (i32, i32, i32) {
    %c1_i32 = arith.constant 1 : i32
    %0 = arith.addi %c1_i32, %arg1 : i32
    %c0_i32 = arith.constant 0 : i32
    %c0_i32_0 = arith.constant 0 : i32
    return %arg0, %c0_i32, %0 : i32, i32, i32
  }
  func.func @transform_2(%arg0: i32, %arg1: i32) -> (i32, i32, i32) {
    %c2_i32 = arith.constant 2 : i32
    %0 = arith.addi %c2_i32, %arg1 : i32
    %c0_i32 = arith.constant 0 : i32
    %c0_i32_0 = arith.constant 0 : i32
    return %arg0, %c0_i32, %0 : i32, i32, i32
  }
  func.func @transform_3(%arg0: i32, %arg1: i32) -> (i32, i32, i32) {
    %c0_i32 = arith.constant 0 : i32
    %c0_i32_0 = arith.constant 0 : i32
    return %arg0, %c0_i32, %arg1 : i32, i32, i32
  }
}

module attributes {stable_mosaic.version = 11 : i64} {
  func.func @_linear_res_ln_kernel(%arg0: i32, %arg1: i32, %arg2: memref<16x128xbf16, #tpu.memory_space<vmem>>, %arg3: memref<128x128xbf16, #tpu.memory_space<vmem>>, %arg4: memref<1x128xf32, #tpu.memory_space<vmem>>, %arg5: memref<16x128xbf16, #tpu.memory_space<vmem>>, %arg6: memref<1x128xf32, #tpu.memory_space<vmem>>, %arg7: memref<1x128xf32, #tpu.memory_space<vmem>>, %arg8: memref<16x128xbf16, #tpu.memory_space<vmem>>, %arg9: memref<16x128xf32, #tpu.memory_space<vmem>>) attributes {dimension_semantics = [#tpu.dimension_semantics<parallel>, #tpu.dimension_semantics<arbitrary>], iteration_bounds = array<i64: 1, 1>, scalar_prefetch = 0 : i64, scratch_operands = 1 : i64, tpu.core_type = #tpu.core_type<tc>, window_params = [{transform_indices = @transform_0, window_bounds = array<i64: 16, 128>}, {transform_indices = @transform_1, window_bounds = array<i64: 128, 128>}, {pipeline_mode = #tpu.pipeline_mode<synchronous>, transform_indices = @transform_2, window_bounds = array<i64: 1, 128>}, {transform_indices = @transform_3, window_bounds = array<i64: 16, 128>}, {pipeline_mode = #tpu.pipeline_mode<synchronous>, transform_indices = @transform_4, window_bounds = array<i64: 1, 128>}, {pipeline_mode = #tpu.pipeline_mode<synchronous>, transform_indices = @transform_5, window_bounds = array<i64: 1, 128>}, {transform_indices = @transform_6, window_bounds = array<i64: 16, 128>}]} {
    %c0_i32 = arith.constant 0 : i32
    %0 = arith.cmpi eq, %arg1, %c0_i32 : i32
    %1 = arith.extui %0 : i1 to i32
    %c0_i32_0 = arith.constant 0 : i32
    %2 = arith.cmpi ne, %1, %c0_i32_0 : i32
    scf.if %2 {
      %cst_10 = arith.constant 0.000000e+00 : f32
      %12 = vector.broadcast %cst_10 : f32 to vector<16x128xf32>
      %c0_11 = arith.constant 0 : index
      %c0_12 = arith.constant 0 : index
      %13 = vector.load %arg9[%c0_11, %c0_12] : memref<16x128xf32, #tpu.memory_space<vmem>>, vector<16x128xf32>
      tpu.vector_store %arg9[%c0_11, %c0_12], %12 {strides = array<i32>} : memref<16x128xf32, #tpu.memory_space<vmem>>, vector<16x128xf32>,
    } else {
    }
    %c0 = arith.constant 0 : index
    %c0_1 = arith.constant 0 : index
    %3 = vector.load %arg9[%c0, %c0_1] : memref<16x128xf32, #tpu.memory_space<vmem>>, vector<16x128xf32>
    %c0_2 = arith.constant 0 : index
    %c0_3 = arith.constant 0 : index
    %4 = vector.load %arg2[%c0_2, %c0_3] : memref<16x128xbf16, #tpu.memory_space<vmem>>, vector<16x128xbf16>
    %c0_4 = arith.constant 0 : index
    %c0_5 = arith.constant 0 : index
    %5 = vector.load %arg3[%c0_4, %c0_5] : memref<128x128xbf16, #tpu.memory_space<vmem>>, vector<128x128xbf16>
    %cst = arith.constant dense<0.000000e+00> : vector<16x128xf32>
    %6 = tpu.matmul %4, %5, %cst {dimension_numbers = #tpu.dot_dimension_numbers<[1], [0], [0], [1], [0, 0, 1, 1], [], []>} : vector<16x128xbf16>, vector<128x128xbf16>, vector<16x128xf32> -> vector<16x128xf32>
    %7 = arith.addf %3, %6 : vector<16x128xf32>
    %c0_6 = arith.constant 0 : index
    %c0_7 = arith.constant 0 : index
    %8 = vector.load %arg9[%c0_6, %c0_7] : memref<16x128xf32, #tpu.memory_space<vmem>>, vector<16x128xf32>
    tpu.vector_store %arg9[%c0_6, %c0_7], %7 {strides = array<i32>} : memref<16x128xf32, #tpu.memory_space<vmem>>, vector<16x128xf32>,
    %c0_i32_8 = arith.constant 0 : i32
    %9 = arith.cmpi eq, %arg1, %c0_i32_8 : i32
    %10 = arith.extui %9 : i1 to i32
    %c0_i32_9 = arith.constant 0 : i32
    %11 = arith.cmpi ne, %10, %c0_i32_9 : i32
    scf.if %11 {
      %c0_10 = arith.constant 0 : index
      %c0_11 = arith.constant 0 : index
      %12 = vector.load %arg9[%c0_10, %c0_11] : memref<16x128xf32, #tpu.memory_space<vmem>>, vector<16x128xf32>
      %c0_12 = arith.constant 0 : index
      %c0_13 = arith.constant 0 : index
      %13 = vector.load %arg4[%c0_12, %c0_13] : memref<1x128xf32, #tpu.memory_space<vmem>>, vector<1x128xf32>
      %14 = vector.broadcast %13 : vector<1x128xf32> to vector<16x128xf32>
      %15 = arith.addf %12, %14 : vector<16x128xf32>
      %c0_14 = arith.constant 0 : index
      %c0_15 = arith.constant 0 : index
      %16 = vector.load %arg5[%c0_14, %c0_15] : memref<16x128xbf16, #tpu.memory_space<vmem>>, vector<16x128xbf16>
      %17 = arith.extf %16 : vector<16x128xbf16> to vector<16x128xf32>
      %18 = arith.addf %15, %17 : vector<16x128xf32>
      %cst_16 = arith.constant dense<0.000000e+00> : vector<16xf32>
      %19 = vector.multi_reduction <add>, %18, %cst_16 [1] : vector<16x128xf32> to vector<16xf32>
      %20 = vector.shape_cast %19 : vector<16xf32> to vector<16x1xf32>
      %cst_17 = arith.constant 1.280000e+02 : f32
      %21 = vector.broadcast %cst_17 : f32 to vector<16x1xf32>
      %22 = arith.divf %20, %21 : vector<16x1xf32>
      %23 = vector.broadcast %22 : vector<16x1xf32> to vector<16x128xf32>
      %24 = arith.subf %18, %23 : vector<16x128xf32>
      %25 = arith.mulf %24, %24 : vector<16x128xf32>
      %cst_18 = arith.constant dense<0.000000e+00> : vector<16xf32>
      %26 = vector.multi_reduction <add>, %25, %cst_18 [1] : vector<16x128xf32> to vector<16xf32>
      %27 = vector.shape_cast %26 : vector<16xf32> to vector<16x1xf32>
      %cst_19 = arith.constant 1.280000e+02 : f32
      %28 = vector.broadcast %cst_19 : f32 to vector<16x1xf32>
      %29 = arith.divf %27, %28 : vector<16x1xf32>
      %cst_20 = arith.constant 9.99999996E-13 : f32
      %30 = vector.broadcast %cst_20 : f32 to vector<16x1xf32>
      %31 = arith.addf %29, %30 : vector<16x1xf32>
      %32 = math.rsqrt %31 : vector<16x1xf32>
      %33 = vector.broadcast %32 : vector<16x1xf32> to vector<16x128xf32>
      %34 = arith.mulf %24, %33 : vector<16x128xf32>
      %c0_21 = arith.constant 0 : index
      %c0_22 = arith.constant 0 : index
      %35 = vector.load %arg6[%c0_21, %c0_22] : memref<1x128xf32, #tpu.memory_space<vmem>>, vector<1x128xf32>
      %36 = vector.broadcast %35 : vector<1x128xf32> to vector<16x128xf32>
      %37 = arith.mulf %34, %36 : vector<16x128xf32>
      %c0_23 = arith.constant 0 : index
      %c0_24 = arith.constant 0 : index
      %38 = vector.load %arg7[%c0_23, %c0_24] : memref<1x128xf32, #tpu.memory_space<vmem>>, vector<1x128xf32>
      %39 = vector.broadcast %38 : vector<1x128xf32> to vector<16x128xf32>
      %40 = arith.addf %37, %39 : vector<16x128xf32>
      %41 = arith.truncf %40 : vector<16x128xf32> to vector<16x128xbf16>
      %c0_25 = arith.constant 0 : index
      %c0_26 = arith.constant 0 : index
      %42 = vector.load %arg8[%c0_25, %c0_26] : memref<16x128xbf16, #tpu.memory_space<vmem>>, vector<16x128xbf16>
      tpu.vector_store %arg8[%c0_25, %c0_26], %41 {strides = array<i32>} : memref<16x128xbf16, #tpu.memory_space<vmem>>, vector<16x128xbf16>,
    } else {
    }
    return
  }
  func.func @transform_0(%arg0: i32, %arg1: i32) -> (i32, i32) {
    %c0_i32 = arith.constant 0 : i32
    return %arg0, %arg1 : i32, i32
  }
  func.func @transform_1(%arg0: i32, %arg1: i32) -> (i32, i32) {
    %c0_i32 = arith.constant 0 : i32
    %c0_i32_0 = arith.constant 0 : i32
    return %arg1, %c0_i32 : i32, i32
  }
  func.func @transform_2(%arg0: i32, %arg1: i32) -> (i32, i32) {
    %c0_i32 = arith.constant 0 : i32
    %c0_i32_0 = arith.constant 0 : i32
    %c0_i32_1 = arith.constant 0 : i32
    return %c0_i32, %c0_i32_0 : i32, i32
  }
  func.func @transform_3(%arg0: i32, %arg1: i32) -> (i32, i32) {
    %c0_i32 = arith.constant 0 : i32
    %c0_i32_0 = arith.constant 0 : i32
    return %arg0, %c0_i32 : i32, i32
  }
  func.func @transform_4(%arg0: i32, %arg1: i32) -> (i32, i32) {
    %c0_i32 = arith.constant 0 : i32
    %c0_i32_0 = arith.constant 0 : i32
    %c0_i32_1 = arith.constant 0 : i32
    return %c0_i32, %c0_i32_0 : i32, i32
  }
  func.func @transform_5(%arg0: i32, %arg1: i32) -> (i32, i32) {
    %c0_i32 = arith.constant 0 : i32
    %c0_i32_0 = arith.constant 0 : i32
    %c0_i32_1 = arith.constant 0 : i32
    return %c0_i32, %c0_i32_0 : i32, i32
  }
  func.func @transform_6(%arg0: i32, %arg1: i32) -> (i32, i32) {
    %c0_i32 = arith.constant 0 : i32
    %c0_i32_0 = arith.constant 0 : i32
    return %arg0, %c0_i32 : i32, i32
  }
}

module attributes {stable_mosaic.version = 11 : i64} {
  func.func @_linear_res_ln_kernel(%arg0: i32, %arg1: i32, %arg2: memref<16x256xbf16, #tpu.memory_space<vmem>>, %arg3: memref<256x128xbf16, #tpu.memory_space<vmem>>, %arg4: memref<1x128xf32, #tpu.memory_space<vmem>>, %arg5: memref<16x128xbf16, #tpu.memory_space<vmem>>, %arg6: memref<1x128xf32, #tpu.memory_space<vmem>>, %arg7: memref<1x128xf32, #tpu.memory_space<vmem>>, %arg8: memref<16x128xbf16, #tpu.memory_space<vmem>>, %arg9: memref<16x128xf32, #tpu.memory_space<vmem>>) attributes {dimension_semantics = [#tpu.dimension_semantics<parallel>, #tpu.dimension_semantics<arbitrary>], iteration_bounds = array<i64: 1, 1>, scalar_prefetch = 0 : i64, scratch_operands = 1 : i64, tpu.core_type = #tpu.core_type<tc>, window_params = [{transform_indices = @transform_0, window_bounds = array<i64: 16, 256>}, {transform_indices = @transform_1, window_bounds = array<i64: 256, 128>}, {pipeline_mode = #tpu.pipeline_mode<synchronous>, transform_indices = @transform_2, window_bounds = array<i64: 1, 128>}, {transform_indices = @transform_3, window_bounds = array<i64: 16, 128>}, {pipeline_mode = #tpu.pipeline_mode<synchronous>, transform_indices = @transform_4, window_bounds = array<i64: 1, 128>}, {pipeline_mode = #tpu.pipeline_mode<synchronous>, transform_indices = @transform_5, window_bounds = array<i64: 1, 128>}, {transform_indices = @transform_6, window_bounds = array<i64: 16, 128>}]} {
    %c0_i32 = arith.constant 0 : i32
    %0 = arith.cmpi eq, %arg1, %c0_i32 : i32
    %1 = arith.extui %0 : i1 to i32
    %c0_i32_0 = arith.constant 0 : i32
    %2 = arith.cmpi ne, %1, %c0_i32_0 : i32
    scf.if %2 {
      %cst_10 = arith.constant 0.000000e+00 : f32
      %12 = vector.broadcast %cst_10 : f32 to vector<16x128xf32>
      %c0_11 = arith.constant 0 : index
      %c0_12 = arith.constant 0 : index
      %13 = vector.load %arg9[%c0_11, %c0_12] : memref<16x128xf32, #tpu.memory_space<vmem>>, vector<16x128xf32>
      tpu.vector_store %arg9[%c0_11, %c0_12], %12 {strides = array<i32>} : memref<16x128xf32, #tpu.memory_space<vmem>>, vector<16x128xf32>,
    } else {
    }
    %c0 = arith.constant 0 : index
    %c0_1 = arith.constant 0 : index
    %3 = vector.load %arg9[%c0, %c0_1] : memref<16x128xf32, #tpu.memory_space<vmem>>, vector<16x128xf32>
    %c0_2 = arith.constant 0 : index
    %c0_3 = arith.constant 0 : index
    %4 = vector.load %arg2[%c0_2, %c0_3] : memref<16x256xbf16, #tpu.memory_space<vmem>>, vector<16x256xbf16>
    %c0_4 = arith.constant 0 : index
    %c0_5 = arith.constant 0 : index
    %5 = vector.load %arg3[%c0_4, %c0_5] : memref<256x128xbf16, #tpu.memory_space<vmem>>, vector<256x128xbf16>
    %cst = arith.constant dense<0.000000e+00> : vector<16x128xf32>
    %6 = tpu.matmul %4, %5, %cst {dimension_numbers = #tpu.dot_dimension_numbers<[1], [0], [0], [1], [0, 0, 1, 1], [], []>} : vector<16x256xbf16>, vector<256x128xbf16>, vector<16x128xf32> -> vector<16x128xf32>
    %7 = arith.addf %3, %6 : vector<16x128xf32>
    %c0_6 = arith.constant 0 : index
    %c0_7 = arith.constant 0 : index
    %8 = vector.load %arg9[%c0_6, %c0_7] : memref<16x128xf32, #tpu.memory_space<vmem>>, vector<16x128xf32>
    tpu.vector_store %arg9[%c0_6, %c0_7], %7 {strides = array<i32>} : memref<16x128xf32, #tpu.memory_space<vmem>>, vector<16x128xf32>,
    %c0_i32_8 = arith.constant 0 : i32
    %9 = arith.cmpi eq, %arg1, %c0_i32_8 : i32
    %10 = arith.extui %9 : i1 to i32
    %c0_i32_9 = arith.constant 0 : i32
    %11 = arith.cmpi ne, %10, %c0_i32_9 : i32
    scf.if %11 {
      %c0_10 = arith.constant 0 : index
      %c0_11 = arith.constant 0 : index
      %12 = vector.load %arg9[%c0_10, %c0_11] : memref<16x128xf32, #tpu.memory_space<vmem>>, vector<16x128xf32>
      %c0_12 = arith.constant 0 : index
      %c0_13 = arith.constant 0 : index
      %13 = vector.load %arg4[%c0_12, %c0_13] : memref<1x128xf32, #tpu.memory_space<vmem>>, vector<1x128xf32>
      %14 = vector.broadcast %13 : vector<1x128xf32> to vector<16x128xf32>
      %15 = arith.addf %12, %14 : vector<16x128xf32>
      %c0_14 = arith.constant 0 : index
      %c0_15 = arith.constant 0 : index
      %16 = vector.load %arg5[%c0_14, %c0_15] : memref<16x128xbf16, #tpu.memory_space<vmem>>, vector<16x128xbf16>
      %17 = arith.extf %16 : vector<16x128xbf16> to vector<16x128xf32>
      %18 = arith.addf %15, %17 : vector<16x128xf32>
      %cst_16 = arith.constant dense<0.000000e+00> : vector<16xf32>
      %19 = vector.multi_reduction <add>, %18, %cst_16 [1] : vector<16x128xf32> to vector<16xf32>
      %20 = vector.shape_cast %19 : vector<16xf32> to vector<16x1xf32>
      %cst_17 = arith.constant 1.280000e+02 : f32
      %21 = vector.broadcast %cst_17 : f32 to vector<16x1xf32>
      %22 = arith.divf %20, %21 : vector<16x1xf32>
      %23 = vector.broadcast %22 : vector<16x1xf32> to vector<16x128xf32>
      %24 = arith.subf %18, %23 : vector<16x128xf32>
      %25 = arith.mulf %24, %24 : vector<16x128xf32>
      %cst_18 = arith.constant dense<0.000000e+00> : vector<16xf32>
      %26 = vector.multi_reduction <add>, %25, %cst_18 [1] : vector<16x128xf32> to vector<16xf32>
      %27 = vector.shape_cast %26 : vector<16xf32> to vector<16x1xf32>
      %cst_19 = arith.constant 1.280000e+02 : f32
      %28 = vector.broadcast %cst_19 : f32 to vector<16x1xf32>
      %29 = arith.divf %27, %28 : vector<16x1xf32>
      %cst_20 = arith.constant 9.99999996E-13 : f32
      %30 = vector.broadcast %cst_20 : f32 to vector<16x1xf32>
      %31 = arith.addf %29, %30 : vector<16x1xf32>
      %32 = math.rsqrt %31 : vector<16x1xf32>
      %33 = vector.broadcast %32 : vector<16x1xf32> to vector<16x128xf32>
      %34 = arith.mulf %24, %33 : vector<16x128xf32>
      %c0_21 = arith.constant 0 : index
      %c0_22 = arith.constant 0 : index
      %35 = vector.load %arg6[%c0_21, %c0_22] : memref<1x128xf32, #tpu.memory_space<vmem>>, vector<1x128xf32>
      %36 = vector.broadcast %35 : vector<1x128xf32> to vector<16x128xf32>
      %37 = arith.mulf %34, %36 : vector<16x128xf32>
      %c0_23 = arith.constant 0 : index
      %c0_24 = arith.constant 0 : index
      %38 = vector.load %arg7[%c0_23, %c0_24] : memref<1x128xf32, #tpu.memory_space<vmem>>, vector<1x128xf32>
      %39 = vector.broadcast %38 : vector<1x128xf32> to vector<16x128xf32>
      %40 = arith.addf %37, %39 : vector<16x128xf32>
      %41 = arith.truncf %40 : vector<16x128xf32> to vector<16x128xbf16>
      %c0_25 = arith.constant 0 : index
      %c0_26 = arith.constant 0 : index
      %42 = vector.load %arg8[%c0_25, %c0_26] : memref<16x128xbf16, #tpu.memory_space<vmem>>, vector<16x128xbf16>
      tpu.vector_store %arg8[%c0_25, %c0_26], %41 {strides = array<i32>} : memref<16x128xbf16, #tpu.memory_space<vmem>>, vector<16x128xbf16>,
    } else {
    }
    return
  }
  func.func @transform_0(%arg0: i32, %arg1: i32) -> (i32, i32) {
    %c0_i32 = arith.constant 0 : i32
    return %arg0, %arg1 : i32, i32
  }
  func.func @transform_1(%arg0: i32, %arg1: i32) -> (i32, i32) {
    %c0_i32 = arith.constant 0 : i32
    %c0_i32_0 = arith.constant 0 : i32
    return %arg1, %c0_i32 : i32, i32
  }
  func.func @transform_2(%arg0: i32, %arg1: i32) -> (i32, i32) {
    %c0_i32 = arith.constant 0 : i32
    %c0_i32_0 = arith.constant 0 : i32
    %c0_i32_1 = arith.constant 0 : i32
    return %c0_i32, %c0_i32_0 : i32, i32
  }
  func.func @transform_3(%arg0: i32, %arg1: i32) -> (i32, i32) {
    %c0_i32 = arith.constant 0 : i32
    %c0_i32_0 = arith.constant 0 : i32
    return %arg0, %c0_i32 : i32, i32
  }
  func.func @transform_4(%arg0: i32, %arg1: i32) -> (i32, i32) {
    %c0_i32 = arith.constant 0 : i32
    %c0_i32_0 = arith.constant 0 : i32
    %c0_i32_1 = arith.constant 0 : i32
    return %c0_i32, %c0_i32_0 : i32, i32
  }
  func.func @transform_5(%arg0: i32, %arg1: i32) -> (i32, i32) {
    %c0_i32 = arith.constant 0 : i32
    %c0_i32_0 = arith.constant 0 : i32
    %c0_i32_1 = arith.constant 0 : i32
    return %c0_i32, %c0_i32_0 : i32, i32
  }
  func.func @transform_6(%arg0: i32, %arg1: i32) -> (i32, i32) {
    %c0_i32 = arith.constant 0 : i32
    %c0_i32_0 = arith.constant 0 : i32
    return %arg0, %c0_i32 : i32, i32
  }
}

module attributes {stable_mosaic.version = 11 : i64} {
  func.func @_linear_kernel(%arg0: i32, %arg1: i32, %arg2: i32, %arg3: memref<16x128xbf16, #tpu.memory_space<vmem>>, %arg4: memref<128x256xbf16, #tpu.memory_space<vmem>>, %arg5: memref<1x256xf32, #tpu.memory_space<vmem>>, %arg6: memref<16x256xbf16, #tpu.memory_space<vmem>>, %arg7: memref<16x256xf32, #tpu.memory_space<vmem>>) attributes {dimension_semantics = [#tpu.dimension_semantics<parallel>, #tpu.dimension_semantics<parallel>, #tpu.dimension_semantics<arbitrary>], iteration_bounds = array<i64: 1, 1, 1>, scalar_prefetch = 0 : i64, scratch_operands = 1 : i64, tpu.core_type = #tpu.core_type<tc>, window_params = [{transform_indices = @transform_0, window_bounds = array<i64: 16, 128>}, {transform_indices = @transform_1, window_bounds = array<i64: 128, 256>}, {transform_indices = @transform_2, window_bounds = array<i64: 1, 256>}, {transform_indices = @transform_3, window_bounds = array<i64: 16, 256>}]} {
    %c0_i32 = arith.constant 0 : i32
    %0 = arith.cmpi eq, %arg2, %c0_i32 : i32
    %1 = arith.extui %0 : i1 to i32
    %c0_i32_0 = arith.constant 0 : i32
    %2 = arith.cmpi ne, %1, %c0_i32_0 : i32
    scf.if %2 {
      %cst_10 = arith.constant 0.000000e+00 : f32
      %12 = vector.broadcast %cst_10 : f32 to vector<16x256xf32>
      %c0_11 = arith.constant 0 : index
      %c0_12 = arith.constant 0 : index
      %13 = vector.load %arg7[%c0_11, %c0_12] : memref<16x256xf32, #tpu.memory_space<vmem>>, vector<16x256xf32>
      tpu.vector_store %arg7[%c0_11, %c0_12], %12 {strides = array<i32>} : memref<16x256xf32, #tpu.memory_space<vmem>>, vector<16x256xf32>,
    } else {
    }
    %c0 = arith.constant 0 : index
    %c0_1 = arith.constant 0 : index
    %3 = vector.load %arg7[%c0, %c0_1] : memref<16x256xf32, #tpu.memory_space<vmem>>, vector<16x256xf32>
    %c0_2 = arith.constant 0 : index
    %c0_3 = arith.constant 0 : index
    %4 = vector.load %arg3[%c0_2, %c0_3] : memref<16x128xbf16, #tpu.memory_space<vmem>>, vector<16x128xbf16>
    %c0_4 = arith.constant 0 : index
    %c0_5 = arith.constant 0 : index
    %5 = vector.load %arg4[%c0_4, %c0_5] : memref<128x256xbf16, #tpu.memory_space<vmem>>, vector<128x256xbf16>
    %cst = arith.constant dense<0.000000e+00> : vector<16x256xf32>
    %6 = tpu.matmul %4, %5, %cst {dimension_numbers = #tpu.dot_dimension_numbers<[1], [0], [0], [1], [0, 0, 1, 1], [], []>} : vector<16x128xbf16>, vector<128x256xbf16>, vector<16x256xf32> -> vector<16x256xf32>
    %7 = arith.addf %3, %6 : vector<16x256xf32>
    %c0_6 = arith.constant 0 : index
    %c0_7 = arith.constant 0 : index
    %8 = vector.load %arg7[%c0_6, %c0_7] : memref<16x256xf32, #tpu.memory_space<vmem>>, vector<16x256xf32>
    tpu.vector_store %arg7[%c0_6, %c0_7], %7 {strides = array<i32>} : memref<16x256xf32, #tpu.memory_space<vmem>>, vector<16x256xf32>,
    %c0_i32_8 = arith.constant 0 : i32
    %9 = arith.cmpi eq, %arg2, %c0_i32_8 : i32
    %10 = arith.extui %9 : i1 to i32
    %c0_i32_9 = arith.constant 0 : i32
    %11 = arith.cmpi ne, %10, %c0_i32_9 : i32
    scf.if %11 {
      %c0_10 = arith.constant 0 : index
      %c0_11 = arith.constant 0 : index
      %12 = vector.load %arg7[%c0_10, %c0_11] : memref<16x256xf32, #tpu.memory_space<vmem>>, vector<16x256xf32>
      %c0_12 = arith.constant 0 : index
      %c0_13 = arith.constant 0 : index
      %13 = vector.load %arg5[%c0_12, %c0_13] : memref<1x256xf32, #tpu.memory_space<vmem>>, vector<1x256xf32>
      %14 = vector.broadcast %13 : vector<1x256xf32> to vector<16x256xf32>
      %15 = arith.addf %12, %14 : vector<16x256xf32>
      %cst_14 = arith.constant 5.000000e-01 : f32
      %16 = vector.broadcast %cst_14 : f32 to vector<16x256xf32>
      %17 = arith.mulf %16, %15 : vector<16x256xf32>
      %cst_15 = arith.constant 4.471500e-02 : f32
      %18 = vector.broadcast %cst_15 : f32 to vector<16x256xf32>
      %19 = arith.mulf %18, %15 : vector<16x256xf32>
      %20 = arith.mulf %19, %15 : vector<16x256xf32>
      %21 = arith.mulf %20, %15 : vector<16x256xf32>
      %22 = arith.addf %15, %21 : vector<16x256xf32>
      %cst_16 = arith.constant 0.797884583 : f32
      %23 = vector.broadcast %cst_16 : f32 to vector<16x256xf32>
      %24 = arith.mulf %23, %22 : vector<16x256xf32>
      %25 = math.tanh %24 : vector<16x256xf32>
      %cst_17 = arith.constant 1.000000e+00 : f32
      %26 = vector.broadcast %cst_17 : f32 to vector<16x256xf32>
      %27 = arith.addf %26, %25 : vector<16x256xf32>
      %28 = arith.mulf %17, %27 : vector<16x256xf32>
      %29 = arith.truncf %28 : vector<16x256xf32> to vector<16x256xbf16>
      %c0_18 = arith.constant 0 : index
      %c0_19 = arith.constant 0 : index
      %30 = vector.load %arg6[%c0_18, %c0_19] : memref<16x256xbf16, #tpu.memory_space<vmem>>, vector<16x256xbf16>
      tpu.vector_store %arg6[%c0_18, %c0_19], %29 {strides = array<i32>} : memref<16x256xbf16, #tpu.memory_space<vmem>>, vector<16x256xbf16>,
    } else {
    }
    return
  }
  func.func @transform_0(%arg0: i32, %arg1: i32, %arg2: i32) -> (i32, i32) {
    %c0_i32 = arith.constant 0 : i32
    return %arg0, %arg2 : i32, i32
  }
  func.func @transform_1(%arg0: i32, %arg1: i32, %arg2: i32) -> (i32, i32) {
    %c0_i32 = arith.constant 0 : i32
    return %arg2, %arg1 : i32, i32
  }
  func.func @transform_2(%arg0: i32, %arg1: i32, %arg2: i32) -> (i32, i32) {
    %c0_i32 = arith.constant 0 : i32
    %c0_i32_0 = arith.constant 0 : i32
    return %c0_i32, %arg1 : i32, i32
  }
  func.func @transform_3(%arg0: i32, %arg1: i32, %arg2: i32) -> (i32, i32) {
    %c0_i32 = arith.constant 0 : i32
    return %arg0, %arg1 : i32, i32
  }
}

module attributes {stable_mosaic.version = 11 : i64} {
  func.func @_linear_kernel(%arg0: i32, %arg1: i32, %arg2: i32, %arg3: memref<2x256xbf16, #tpu.memory_space<vmem>>, %arg4: memref<256x64xbf16, #tpu.memory_space<vmem>>, %arg5: memref<1x64xf32, #tpu.memory_space<vmem>>, %arg6: memref<2x64xf32, #tpu.memory_space<vmem>>, %arg7: memref<2x64xf32, #tpu.memory_space<vmem>>) attributes {dimension_semantics = [#tpu.dimension_semantics<parallel>, #tpu.dimension_semantics<parallel>, #tpu.dimension_semantics<arbitrary>], iteration_bounds = array<i64: 1, 1, 1>, scalar_prefetch = 0 : i64, scratch_operands = 1 : i64, tpu.core_type = #tpu.core_type<tc>, window_params = [{transform_indices = @transform_0, window_bounds = array<i64: 2, 256>}, {transform_indices = @transform_1, window_bounds = array<i64: 256, 64>}, {transform_indices = @transform_2, window_bounds = array<i64: 1, 64>}, {transform_indices = @transform_3, window_bounds = array<i64: 2, 64>}]} {
    %c0_i32 = arith.constant 0 : i32
    %0 = arith.cmpi eq, %arg2, %c0_i32 : i32
    %1 = arith.extui %0 : i1 to i32
    %c0_i32_0 = arith.constant 0 : i32
    %2 = arith.cmpi ne, %1, %c0_i32_0 : i32
    scf.if %2 {
      %cst_10 = arith.constant 0.000000e+00 : f32
      %12 = vector.broadcast %cst_10 : f32 to vector<2x64xf32>
      %c0_11 = arith.constant 0 : index
      %c0_12 = arith.constant 0 : index
      %13 = vector.load %arg7[%c0_11, %c0_12] : memref<2x64xf32, #tpu.memory_space<vmem>>, vector<2x64xf32>
      tpu.vector_store %arg7[%c0_11, %c0_12], %12 {strides = array<i32>} : memref<2x64xf32, #tpu.memory_space<vmem>>, vector<2x64xf32>,
    } else {
    }
    %c0 = arith.constant 0 : index
    %c0_1 = arith.constant 0 : index
    %3 = vector.load %arg7[%c0, %c0_1] : memref<2x64xf32, #tpu.memory_space<vmem>>, vector<2x64xf32>
    %c0_2 = arith.constant 0 : index
    %c0_3 = arith.constant 0 : index
    %4 = vector.load %arg3[%c0_2, %c0_3] : memref<2x256xbf16, #tpu.memory_space<vmem>>, vector<2x256xbf16>
    %c0_4 = arith.constant 0 : index
    %c0_5 = arith.constant 0 : index
    %5 = vector.load %arg4[%c0_4, %c0_5] : memref<256x64xbf16, #tpu.memory_space<vmem>>, vector<256x64xbf16>
    %cst = arith.constant dense<0.000000e+00> : vector<2x64xf32>
    %6 = tpu.matmul %4, %5, %cst {dimension_numbers = #tpu.dot_dimension_numbers<[1], [0], [0], [1], [0, 0, 1, 1], [], []>} : vector<2x256xbf16>, vector<256x64xbf16>, vector<2x64xf32> -> vector<2x64xf32>
    %7 = arith.addf %3, %6 : vector<2x64xf32>
    %c0_6 = arith.constant 0 : index
    %c0_7 = arith.constant 0 : index
    %8 = vector.load %arg7[%c0_6, %c0_7] : memref<2x64xf32, #tpu.memory_space<vmem>>, vector<2x64xf32>
    tpu.vector_store %arg7[%c0_6, %c0_7], %7 {strides = array<i32>} : memref<2x64xf32, #tpu.memory_space<vmem>>, vector<2x64xf32>,
    %c0_i32_8 = arith.constant 0 : i32
    %9 = arith.cmpi eq, %arg2, %c0_i32_8 : i32
    %10 = arith.extui %9 : i1 to i32
    %c0_i32_9 = arith.constant 0 : i32
    %11 = arith.cmpi ne, %10, %c0_i32_9 : i32
    scf.if %11 {
      %c0_10 = arith.constant 0 : index
      %c0_11 = arith.constant 0 : index
      %12 = vector.load %arg7[%c0_10, %c0_11] : memref<2x64xf32, #tpu.memory_space<vmem>>, vector<2x64xf32>
      %c0_12 = arith.constant 0 : index
      %c0_13 = arith.constant 0 : index
      %13 = vector.load %arg5[%c0_12, %c0_13] : memref<1x64xf32, #tpu.memory_space<vmem>>, vector<1x64xf32>
      %14 = vector.broadcast %13 : vector<1x64xf32> to vector<2x64xf32>
      %15 = arith.addf %12, %14 : vector<2x64xf32>
      %c0_14 = arith.constant 0 : index
      %c0_15 = arith.constant 0 : index
      %16 = vector.load %arg6[%c0_14, %c0_15] : memref<2x64xf32, #tpu.memory_space<vmem>>, vector<2x64xf32>
      tpu.vector_store %arg6[%c0_14, %c0_15], %15 {strides = array<i32>} : memref<2x64xf32, #tpu.memory_space<vmem>>, vector<2x64xf32>,
    } else {
    }
    return
  }
  func.func @transform_0(%arg0: i32, %arg1: i32, %arg2: i32) -> (i32, i32) {
    %c0_i32 = arith.constant 0 : i32
    return %arg0, %arg2 : i32, i32
  }
  func.func @transform_1(%arg0: i32, %arg1: i32, %arg2: i32) -> (i32, i32) {
    %c0_i32 = arith.constant 0 : i32
    return %arg2, %arg1 : i32, i32
  }
  func.func @transform_2(%arg0: i32, %arg1: i32, %arg2: i32) -> (i32, i32) {
    %c0_i32 = arith.constant 0 : i32
    %c0_i32_0 = arith.constant 0 : i32
    return %c0_i32, %arg1 : i32, i32
  }
  func.func @transform_3(%arg0: i32, %arg1: i32, %arg2: i32) -> (i32, i32) {
    %c0_i32 = arith.constant 0 : i32
    return %arg0, %arg1 : i32, i32
  }
}

</mosaic_0001>

<llo_original>
// kernel: bert_encoder_forward.12
$region0: #{bert_encoder_forward.12}
  #allocation0 [shape = 'u32[]', space=smem, size = 0x4, offset = 0x4, fixed_abs, tag = 'smem constant byte address 0x4 - core index']
  #allocation1 [shape = 'u32[144,128]{1,0:T(1,128)}', space=vmem, size = 0x12000, scoped, tag = 'internal scratch']
  %s0 = inlined_call_operand.vmem [shape: f32[16,128], index: 0, kind: input, shape index: {}]
  %s1 = inlined_call_operand.hbm [shape: f32[1,128], index: 1, kind: input, shape index: {}]
  %s2 = inlined_call_operand.hbm [shape: f32[1,128], index: 2, kind: input, shape index: {}]
  %s3 = inlined_call_operand.vmem [shape: bf16[16,128], index: 3, kind: output, shape index: {}]
  %s4 = sld [smem:[#allocation0]]
  $region30: #{bert_encoder_forward.12} parent=0
    _
  %s6 = ssub.s32 1, %s4
  %s7 = scalar_select 0, %s6, %s4
  $region1: #{bert_encoder_forward.12} parent=0
    #allocation2 [shape = 'u8[512]{0}', space=vmem, size = 0x400, scoped, tag = 'input window, operand 1, single buffered']
    #allocation3 [shape = 's32[1]{0}', space=sflag, size = 0x4, scoped, tag = 'scoped memory for bert_encoder_forward.12']
    #allocation4 [shape = 'u8[512]{0}', space=vmem, size = 0x400, scoped, tag = 'input window, operand 2, single buffered']
    #allocation5 [shape = 's32[1]{0}', space=sflag, size = 0x4, scoped, tag = 'scoped memory for bert_encoder_forward.12']
    %8 = vsyncpa [#allocation3], 0
    %9 = vsyncpa [#allocation5], 0
    // Predicated region
    $region2: #{bert_encoder_forward.12} parent=1 // pred_check
      _
    $region3: #{bert_encoder_forward.12} parent=1 // pred_check_branch
      %11 = sbr.rel (0) target = $region5
    $region4: #{bert_encoder_forward.12} parent=1 // pred_region
      _
    $region5: #{bert_encoder_forward.12} parent=1 // pred_fallthru
      _
    // Predicated region
    $region6: #{bert_encoder_forward.12} parent=1 // pred_check
      _
    $region7: #{bert_encoder_forward.12} parent=1 // pred_check_branch
      %13 = sbr.rel (0) target = $region9
    $region8: #{bert_encoder_forward.12} parent=1 // pred_region
      %s15 = ssub.s32 16, 16
      %16 = vsyncadd [#allocation3], %s15
      %s18 = sshll.u32 [#allocation2], 4
      %s19 = int_to_ptr.vmem [resolvable:$true] %s18
      %21 = dma.hbm_to_vmem [thread:$0]  %s1, 16, %s19, [#allocation3]
    $region9: #{bert_encoder_forward.12} parent=1 // pred_fallthru
      _
    // Predicated region
    $region10: #{bert_encoder_forward.12} parent=1 // pred_check
      _
    $region11: #{bert_encoder_forward.12} parent=1 // pred_check_branch
      %23 = sbr.rel (0) target = $region13
    $region12: #{bert_encoder_forward.12} parent=1 // pred_region
      %s25 = ssub.s32 16, 16
      %26 = vsyncadd [#allocation5], %s25
      %s28 = sshll.u32 [#allocation4], 4
      %s29 = int_to_ptr.vmem [resolvable:$true] %s28
      %31 = dma.hbm_to_vmem [thread:$0]  %s2, 16, %s29, [#allocation5]
    $region13: #{bert_encoder_forward.12} parent=1 // pred_fallthru
      _
    // Predicated region
    $region14: #{bert_encoder_forward.12} parent=1 // pred_check
      _
    $region15: #{bert_encoder_forward.12} parent=1 // pred_check_branch
      %33 = sbr.rel (0) target = $region17
    $region16: #{bert_encoder_forward.12} parent=1 // pred_region
      %34 = dma.done [#allocation3], 16
    $region17: #{bert_encoder_forward.12} parent=1 // pred_fallthru
      _
    // Predicated region
    $region18: #{bert_encoder_forward.12} parent=1 // pred_check
      _
    $region19: #{bert_encoder_forward.12} parent=1 // pred_check_branch
      %36 = sbr.rel (0) target = $region21
    $region20: #{bert_encoder_forward.12} parent=1 // pred_region
      %37 = dma.done [#allocation5], 16
    $region21: #{bert_encoder_forward.12} parent=1 // pred_fallthru
      _
    %v38 = vld [vmem:[%s0] sm:$0xff]
    %v39 = vld [vmem:[%s0 + $0x8] sm:$0xff]
    %40 = vadd.xlane.f32.xlu0 %v38
    %v41 = vpop.xlane.xlu0 %40
    %42 = vadd.xlane.f32.xlu0 %v39
    %v43 = vpop.xlane.xlu0 %42
    %v44 = vrcp.pop 128.0
    %v45 = vmul.f32 %v41, %v44
    %v46 = vmul.f32 %v43, %v44
    %v47 = vsub.f32 %v38, %v45
    %v48 = vsub.f32 %v39, %v46
    %v49 = vmul.f32 %v47, %v47
    %v50 = vmul.f32 %v48, %v48
    %51 = vadd.xlane.f32.xlu0 %v49
    %v52 = vpop.xlane.xlu0 %51
    %53 = vadd.xlane.f32.xlu0 %v50
    %v54 = vpop.xlane.xlu0 %53
    %v55 = vmul.f32 %v52, %v44
    %v56 = vmul.f32 %v54, %v44
    %v57 = vadd.f32 %v55, 1e-12
    %v58 = vadd.f32 %v56, 1e-12
    %v59 = vrsqrt.pop %v57
    %v60 = vrsqrt.pop %v58
    %v61 = vmul.f32 %v47, %v59
    %v62 = vmul.f32 %v48, %v60
    %v63 = vld [vmem:[#allocation2] sm:$0x1]
    %v65 = vlaneseq
    %v66 = vshrl.u32 %v65, 7
    %v67 = vsub.s32 0, %v66
    %v68 = vrot.slane %v63, %v67
    %v70 = vmul.f32 %v61, %v68
    %v71 = vmul.f32 %v62, %v68
    %v72 = vld [vmem:[#allocation4] sm:$0x1]
    %v74 = vlaneseq
    %v75 = vshrl.u32 %v74, 7
    %v76 = vsub.s32 0, %v75
    %v77 = vrot.slane %v72, %v76
    %v79 = vadd.f32 %v70, %v77
    %v80 = vadd.f32 %v71, %v77
    %v81 = vpack.c.bf16 %v80, %v79
    %v83 = vunpack.c.l.b16 %v81
    %v84 = vunpack.c.h.b16 %v81
    %v85 = vpack.c.b16 %v83, %v83
    %v86 = vpack.c.b16 %v84, %v84
    %89 = vst [vmem:[%s3] sm:$0xf] %v85
    %90 = vst [vmem:[%s3 + $0x4] sm:$0xf] %v86
    // Predicated region
    $region22: #{bert_encoder_forward.12} parent=1 // pred_check
      _
    $region23: #{bert_encoder_forward.12} parent=1 // pred_check_branch
      %92 = sbr.rel (0) target = $region25
    $region24: #{bert_encoder_forward.12} parent=1 // pred_region
      _
    $region25: #{bert_encoder_forward.12} parent=1 // pred_fallthru
      _
    // Predicated region
    $region26: #{bert_encoder_forward.12} parent=1 // pred_check
      _
    $region27: #{bert_encoder_forward.12} parent=1 // pred_check_branch
      %94 = sbr.rel (0) target = $region29
    $region28: #{bert_encoder_forward.12} parent=1 // pred_region
      _
    $region29: #{bert_encoder_forward.12} parent=1 // pred_fallthru
      _
    %95 = vsyncpa [#allocation3], 1
    %96 = vsyncpa [#allocation5], 1

// kernel: bert_encoder_forward.13
$region0: #{bert_encoder_forward.13}
  #allocation0 [shape = 'u32[]', space=smem, size = 0x4, offset = 0x4, fixed_abs, tag = 'smem constant byte address 0x4 - core index']
  #allocation1 [shape = 'u32[144,128]{1,0:T(1,128)}', space=vmem, size = 0x12000, scoped, tag = 'internal scratch']
  #allocation2 [shape = 'f32[16,384]{1,0:T(8,128)}', space=vmem, size = 0x6000, scoped, tag = 'scratch operand']
  %s0 = inlined_call_operand.vmem [shape: bf16[16,128], index: 0, kind: input, shape index: {}]
  %s1 = inlined_call_operand.hbm [shape: bf16[128,384], index: 1, kind: input, shape index: {}]
  %s2 = inlined_call_operand.vmem [shape: f32[1,384], index: 2, kind: input, shape index: {}]
  %s3 = inlined_call_operand.vmem [shape: bf16[16,384], index: 3, kind: output, shape index: {}]
  %s4 = sld [smem:[#allocation0]]
  $region34: #{bert_encoder_forward.13} parent=0
    _
  %s6 = ssub.s32 1, %s4
  %s7 = scalar_select 0, %s6, %s4
  $region1: #{bert_encoder_forward.13} parent=0
    #allocation3 [shape = 'u8[98304]{0}', space=vmem, size = 0x18000, scoped, tag = 'input window, operand 1, single buffered']
    #allocation4 [shape = 's32[1]{0}', space=sflag, size = 0x4, scoped, tag = 'scoped memory for bert_encoder_forward.13']
    %8 = vsyncpa [#allocation4], 0
    // Predicated region
    $region2: #{bert_encoder_forward.13} parent=1 // pred_check
      _
    $region3: #{bert_encoder_forward.13} parent=1 // pred_check_branch
      %10 = sbr.rel (0) target = $region5
    $region4: #{bert_encoder_forward.13} parent=1 // pred_region
      _
    $region5: #{bert_encoder_forward.13} parent=1 // pred_fallthru
      _
    // Predicated region
    $region6: #{bert_encoder_forward.13} parent=1 // pred_check
      _
    $region7: #{bert_encoder_forward.13} parent=1 // pred_check_branch
      %12 = sbr.rel (0) target = $region9
    $region8: #{bert_encoder_forward.13} parent=1 // pred_region
      %s14 = ssub.s32 3072, 3072
      %15 = vsyncadd [#allocation4], %s14
      %s16 = sshll.u32 [#allocation3], 4
      %s17 = int_to_ptr.vmem [resolvable:$true] %s16
      %22 = dma.hbm_to_vmem [thread:$0]  %s1, 3072, %s17, [#allocation4], 192, 192, 12
    $region9: #{bert_encoder_forward.13} parent=1 // pred_fallthru
      _
    // Predicated region
    $region10: #{bert_encoder_forward.13} parent=1 // pred_check
      _
    $region11: #{bert_encoder_forward.13} parent=1 // pred_check_branch
      %24 = sbr.rel (0) target = $region13
    $region12: #{bert_encoder_forward.13} parent=1 // pred_region
      _
    $region13: #{bert_encoder_forward.13} parent=1 // pred_fallthru
      _
    // Predicated region
    $region14: #{bert_encoder_forward.13} parent=1 // pred_check
      _
    $region15: #{bert_encoder_forward.13} parent=1 // pred_check_branch
      %26 = sbr.rel (0) target = $region17
    $region16: #{bert_encoder_forward.13} parent=1 // pred_region
      %27 = dma.done [#allocation4], 3072
    $region17: #{bert_encoder_forward.13} parent=1 // pred_fallthru
      _
    %p29 = scmp.eq.s32.totalorder 0, 0
    // Predicated region
    $region18: #{bert_encoder_forward.13} parent=1 // pred_check
      %p30 = pneg %p29
    $region19: #{bert_encoder_forward.13} parent=1 // pred_check_branch
      %32 = sbr.rel (%p30) target = $region21
    $region20: #{bert_encoder_forward.13} parent=1 // pred_region
      %33 = vst [vmem:[#allocation2] sm:$0xff] 0.0
      %34 = vst [vmem:[#allocation2 + $0x8] sm:$0xff] 0.0
      %35 = vst [vmem:[#allocation2 + $0x10] sm:$0xff] 0.0
      %36 = vst [vmem:[#allocation2 + $0x18] sm:$0xff] 0.0
      %37 = vst [vmem:[#allocation2 + $0x20] sm:$0xff] 0.0
      %38 = vst [vmem:[#allocation2 + $0x28] sm:$0xff] 0.0
    $region21: #{bert_encoder_forward.13} parent=1 // pred_fallthru
      _
    %v39 = vld [vmem:[#allocation2] sm:$0xff]
    %v40 = vld [vmem:[#allocation2 + $0x8] sm:$0xff]
    %v41 = vld [vmem:[#allocation2 + $0x10] sm:$0xff]
    %v42 = vld [vmem:[#allocation2 + $0x18] sm:$0xff]
    %v43 = vld [vmem:[#allocation2 + $0x20] sm:$0xff]
    %v44 = vld [vmem:[#allocation2 + $0x28] sm:$0xff]
    %v45 = vld [vmem:[%s0] sm:$0xf]
    %v46 = vld [vmem:[%s0 + $0x4] sm:$0xf]
    %v47 = vld [vmem:[#allocation3] sm:$0xff]
    %v48 = vld [vmem:[#allocation3 + $0x8] sm:$0xf]
    %v49 = vld [vmem:[#allocation3 + $0xc] sm:$0xff]
    %v50 = vld [vmem:[#allocation3 + $0x14] sm:$0xf]
    %v51 = vld [vmem:[#allocation3 + $0x18] sm:$0xff]
    %v52 = vld [vmem:[#allocation3 + $0x20] sm:$0xf]
    %v53 = vld [vmem:[#allocation3 + $0x24] sm:$0xff]
    %v54 = vld [vmem:[#allocation3 + $0x2c] sm:$0xf]
    %v55 = vld [vmem:[#allocation3 + $0x30] sm:$0xff]
    %v56 = vld [vmem:[#allocation3 + $0x38] sm:$0xf]
    %v57 = vld [vmem:[#allocation3 + $0x3c] sm:$0xff]
    %v58 = vld [vmem:[#allocation3 + $0x44] sm:$0xf]
    %v59 = vld [vmem:[#allocation3 + $0x48] sm:$0xff]
    %v60 = vld [vmem:[#allocation3 + $0x50] sm:$0xf]
    %v61 = vld [vmem:[#allocation3 + $0x54] sm:$0xff]
    %v62 = vld [vmem:[#allocation3 + $0x5c] sm:$0xf]
    %v63 = vld [vmem:[#allocation3 + $0x60] sm:$0xff]
    %v64 = vld [vmem:[#allocation3 + $0x68] sm:$0xf]
    %v65 = vld [vmem:[#allocation3 + $0x6c] sm:$0xff]
    %v66 = vld [vmem:[#allocation3 + $0x74] sm:$0xf]
    %v67 = vld [vmem:[#allocation3 + $0x78] sm:$0xff]
    %v68 = vld [vmem:[#allocation3 + $0x80] sm:$0xf]
    %v69 = vld [vmem:[#allocation3 + $0x84] sm:$0xff]
    %v70 = vld [vmem:[#allocation3 + $0x8c] sm:$0xf]
    %v71 = vld [vmem:[#allocation3 + $0x90] sm:$0xff]
    %v72 = vld [vmem:[#allocation3 + $0x98] sm:$0xf]
    %v73 = vld [vmem:[#allocation3 + $0x9c] sm:$0xff]
    %v74 = vld [vmem:[#allocation3 + $0xa4] sm:$0xf]
    %v75 = vld [vmem:[#allocation3 + $0xa8] sm:$0xff]
    %v76 = vld [vmem:[#allocation3 + $0xb0] sm:$0xf]
    %v77 = vld [vmem:[#allocation3 + $0xb4] sm:$0xff]
    %v78 = vld [vmem:[#allocation3 + $0xbc] sm:$0xf]
    %v81 = vunpack.c.l.b16 %v45
    %v82 = vunpack.c.l.b16 %v46
    %v83 = vpack.c.b16 %v82, %v81
    %v117 = vunpack.c.l.b16 %v47
    %v118 = vunpack.c.h.b16 %v47
    %v119 = vunpack.c.l.b16 %v48
    %v120 = vunpack.c.l.b16 %v49
    %v121 = vunpack.c.h.b16 %v49
    %v122 = vunpack.c.l.b16 %v50
    %v123 = vunpack.c.l.b16 %v51
    %v124 = vunpack.c.h.b16 %v51
    %v125 = vunpack.c.l.b16 %v52
    %v126 = vunpack.c.l.b16 %v53
    %v127 = vunpack.c.h.b16 %v53
    %v128 = vunpack.c.l.b16 %v54
    %v129 = vunpack.c.l.b16 %v55
    %v130 = vunpack.c.h.b16 %v55
    %v131 = vunpack.c.l.b16 %v56
    %v132 = vunpack.c.l.b16 %v57
    %v133 = vunpack.c.h.b16 %v57
    %v134 = vunpack.c.l.b16 %v58
    %v135 = vunpack.c.l.b16 %v59
    %v136 = vunpack.c.h.b16 %v59
    %v137 = vunpack.c.l.b16 %v60
    %v138 = vunpack.c.l.b16 %v61
    %v139 = vunpack.c.h.b16 %v61
    %v140 = vunpack.c.l.b16 %v62
    %v141 = vunpack.c.l.b16 %v63
    %v142 = vunpack.c.h.b16 %v63
    %v143 = vunpack.c.l.b16 %v64
    %v144 = vunpack.c.l.b16 %v65
    %v145 = vunpack.c.h.b16 %v65
    %v146 = vunpack.c.l.b16 %v66
    %v147 = vunpack.c.l.b16 %v67
    %v148 = vunpack.c.h.b16 %v67
    %v149 = vunpack.c.l.b16 %v68
    %v150 = vunpack.c.l.b16 %v69
    %v151 = vunpack.c.h.b16 %v69
    %v152 = vunpack.c.l.b16 %v70
    %v153 = vunpack.c.l.b16 %v71
    %v154 = vunpack.c.h.b16 %v71
    %v155 = vunpack.c.l.b16 %v72
    %v156 = vunpack.c.l.b16 %v73
    %v157 = vunpack.c.h.b16 %v73
    %v158 = vunpack.c.l.b16 %v74
    %v159 = vunpack.c.l.b16 %v75
    %v160 = vunpack.c.h.b16 %v75
    %v161 = vunpack.c.l.b16 %v76
    %v162 = vunpack.c.l.b16 %v77
    %v163 = vunpack.c.h.b16 %v77
    %v164 = vunpack.c.l.b16 %v78
    %v165 = vpack.c.b16 %v120, %v117
    %v166 = vpack.c.b16 %v121, %v118
    %v167 = vpack.c.b16 %v122, %v119
    %v168 = vpack.c.b16 %v126, %v123
    %v169 = vpack.c.b16 %v127, %v124
    %v170 = vpack.c.b16 %v128, %v125
    %v171 = vpack.c.b16 %v132, %v129
    %v172 = vpack.c.b16 %v133, %v130
    %v173 = vpack.c.b16 %v134, %v131
    %v174 = vpack.c.b16 %v138, %v135
    %v175 = vpack.c.b16 %v139, %v136
    %v176 = vpack.c.b16 %v140, %v137
    %v177 = vpack.c.b16 %v144, %v141
    %v178 = vpack.c.b16 %v145, %v142
    %v179 = vpack.c.b16 %v146, %v143
    %v180 = vpack.c.b16 %v150, %v147
    %v181 = vpack.c.b16 %v151, %v148
    %v182 = vpack.c.b16 %v152, %v149
    %v183 = vpack.c.b16 %v156, %v153
    %v184 = vpack.c.b16 %v157, %v154
    %v185 = vpack.c.b16 %v158, %v155
    %v186 = vpack.c.b16 %v162, %v159
    %v187 = vpack.c.b16 %v163, %v160
    %v188 = vpack.c.b16 %v164, %v161
    %213 = vmatprep.subr.bf16.mxu0 %v166
    %214 = vmatpush1.bf16.msra.mxu0 %v165
    %215 = vmatprep.subr.bf16.mxu0 %v169
    %216 = vmatpush1.bf16.msra.mxu0 %v168
    %217 = vmatprep.subr.bf16.mxu0 %v172
    %218 = vmatpush1.bf16.msra.mxu0 %v171
    %219 = vmatprep.subr.bf16.mxu0 %v175
    %220 = vmatpush1.bf16.msra.mxu0 %v174
    %221 = vmatprep.subr.bf16.mxu0 %v178
    %222 = vmatpush1.bf16.msra.mxu0 %v177
    %223 = vmatprep.subr.bf16.mxu0 %v181
    %224 = vmatpush1.bf16.msra.mxu0 %v180
    %225 = vmatprep.subr.bf16.mxu0 %v184
    %226 = vmatpush1.bf16.msra.mxu0 %v183
    %227 = vmatprep.subr.bf16.mxu0 %v187
    %228 = vmatpush1.bf16.msra.mxu0 %v186
    %229 = vmatprep.subr.bf16.mxu0 0
    %230 = vmatpush1.bf16.msra.mxu0 0
    %231 = vmatprep.subr.bf16.mxu0 0
    %232 = vmatpush1.bf16.msra.mxu0 0
    %233 = vmatprep.subr.bf16.mxu0 0
    %234 = vmatpush1.bf16.msra.mxu0 0
    %235 = vmatprep.subr.bf16.mxu0 0
    %236 = vmatpush1.bf16.msra.mxu0 0
    %237 = vmatprep.subr.bf16.mxu0 0
    %238 = vmatpush1.bf16.msra.mxu0 0
    %239 = vmatprep.subr.bf16.mxu0 0
    %240 = vmatpush1.bf16.msra.mxu0 0
    %241 = vmatprep.subr.bf16.mxu0 0
    %242 = vmatpush1.bf16.msra.mxu0 0
    %243 = vmatprep.subr.bf16.mxu0 0
    %244 = vmatpush1.bf16.msra.mxu0 0
    %245 = vmatprep.mubr.bf16.mxu0 0
    %246 = vmatmul.mubr.bf16.gmra.mrb[0].mxu0 %v83
    %v247 = vpop.f32.mrb[0].mxu0
    %v248 = vadd.f32 0.0, %v247
    %v249 = vpop.f32.mrb[0].mxu0
    %v250 = vadd.f32 0.0, %v249
    %v251 = vpop.f32.mrb[0].mxu0
    %v252 = vadd.f32 0.0, %v251
    %v253 = vpop.f32.mrb[0].mxu0
    %v254 = vadd.f32 0.0, %v253
    %255 = vdwg.mxu0
    %256 = vmatprep.subr.bf16.mxu0 0
    %257 = vmatpush1.bf16.msra.mxu0 %v167
    %258 = vmatprep.subr.bf16.mxu0 0
    %259 = vmatpush1.bf16.msra.mxu0 %v170
    %260 = vmatprep.subr.bf16.mxu0 0
    %261 = vmatpush1.bf16.msra.mxu0 %v173
    %262 = vmatprep.subr.bf16.mxu0 0
    %263 = vmatpush1.bf16.msra.mxu0 %v176
    %264 = vmatprep.subr.bf16.mxu0 0
    %265 = vmatpush1.bf16.msra.mxu0 %v179
    %266 = vmatprep.subr.bf16.mxu0 0
    %267 = vmatpush1.bf16.msra.mxu0 %v182
    %268 = vmatprep.subr.bf16.mxu0 0
    %269 = vmatpush1.bf16.msra.mxu0 %v185
    %270 = vmatprep.subr.bf16.mxu0 0
    %271 = vmatpush1.bf16.msra.mxu0 %v188
    %272 = vmatprep.subr.bf16.mxu0 0
    %273 = vmatpush1.bf16.msra.mxu0 0
    %274 = vmatprep.subr.bf16.mxu0 0
    %275 = vmatpush1.bf16.msra.mxu0 0
    %276 = vmatprep.subr.bf16.mxu0 0
    %277 = vmatpush1.bf16.msra.mxu0 0
    %278 = vmatprep.subr.bf16.mxu0 0
    %279 = vmatpush1.bf16.msra.mxu0 0
    %280 = vmatprep.subr.bf16.mxu0 0
    %281 = vmatpush1.bf16.msra.mxu0 0
    %282 = vmatprep.subr.bf16.mxu0 0
    %283 = vmatpush1.bf16.msra.mxu0 0
    %284 = vmatprep.subr.bf16.mxu0 0
    %285 = vmatpush1.bf16.msra.mxu0 0
    %286 = vmatprep.subr.bf16.mxu0 0
    %287 = vmatpush1.bf16.msra.mxu0 0
    %288 = vmatprep.mubr.bf16.mxu0 0
    %289 = vmatmul.mubr.bf16.gmra.mrb[0].mxu0 %v83
    %v290 = vpop.f32.mrb[0].mxu0
    %v291 = vadd.f32 0.0, %v290
    %v292 = vpop.f32.mrb[0].mxu0
    %v293 = vpop.f32.mrb[0].mxu0
    %v294 = vadd.f32 0.0, %v293
    %v295 = vpop.f32.mrb[0].mxu0
    %296 = vdwg.mxu0
    %v297 = vadd.f32 %v39, %v248
    %v298 = vadd.f32 %v40, %v250
    %v299 = vadd.f32 %v41, %v291
    %v300 = vadd.f32 %v42, %v252
    %v301 = vadd.f32 %v43, %v254
    %v302 = vadd.f32 %v44, %v294
    %303 = vst [vmem:[#allocation2] sm:$0xff] %v297
    %304 = vst [vmem:[#allocation2 + $0x8] sm:$0xff] %v298
    %305 = vst [vmem:[#allocation2 + $0x10] sm:$0xff] %v299
    %306 = vst [vmem:[#allocation2 + $0x18] sm:$0xff] %v300
    %307 = vst [vmem:[#allocation2 + $0x20] sm:$0xff] %v301
    %308 = vst [vmem:[#allocation2 + $0x28] sm:$0xff] %v302
    // Predicated region
    $region22: #{bert_encoder_forward.13} parent=1 // pred_check
      %p309 = pneg %p29
    $region23: #{bert_encoder_forward.13} parent=1 // pred_check_branch
      %311 = sbr.rel (%p309) target = $region25
    $region24: #{bert_encoder_forward.13} parent=1 // pred_region
      %v312 = vld [vmem:[#allocation2] sm:$0xff]
      %v313 = vld [vmem:[#allocation2 + $0x8] sm:$0xff]
      %v314 = vld [vmem:[#allocation2 + $0x10] sm:$0xff]
      %v315 = vld [vmem:[#allocation2 + $0x18] sm:$0xff]
      %v316 = vld [vmem:[#allocation2 + $0x20] sm:$0xff]
      %v317 = vld [vmem:[#allocation2 + $0x28] sm:$0xff]
      %v318 = vld [vmem:[%s2] sm:$0x7]
      %v320 = vlaneseq
      %v321 = vshrl.u32 %v320, 7
      %v322 = vsub.s32 0, %v321
      %v323 = vrot.slane %v318, %v322
      %v324 = vlaneseq
      %v325 = vshrl.u32 %v324, 7
      %v326 = vsub.s32 1, %v325
      %v327 = vrot.slane %v318, %v326
      %v328 = vlaneseq
      %v329 = vshrl.u32 %v328, 7
      %v330 = vsub.s32 2, %v329
      %v331 = vrot.slane %v318, %v330
      %v335 = vadd.f32 %v312, %v323
      %v336 = vadd.f32 %v313, %v327
      %v337 = vadd.f32 %v314, %v331
      %v338 = vadd.f32 %v315, %v323
      %v339 = vadd.f32 %v316, %v327
      %v340 = vadd.f32 %v317, %v331
      %v341 = vpack.c.bf16 %v338, %v335
      %v342 = vpack.c.bf16 %v339, %v336
      %v343 = vpack.c.bf16 %v340, %v337
      %v347 = vunpack.c.l.b16 %v341
      %v348 = vunpack.c.l.b16 %v342
      %v349 = vunpack.c.l.b16 %v343
      %v350 = vunpack.c.h.b16 %v341
      %v351 = vunpack.c.h.b16 %v342
      %v352 = vunpack.c.h.b16 %v343
      %v353 = vpack.c.b16 %v348, %v347
      %v354 = vpack.c.b16 %v349, %v349
      %v355 = vpack.c.b16 %v351, %v350
      %v356 = vpack.c.b16 %v352, %v352
      %361 = vst [vmem:[%s3] sm:$0xff] %v353
      %362 = vst [vmem:[%s3 + $0x8] sm:$0xf] %v354
      %363 = vst [vmem:[%s3 + $0xc] sm:$0xff] %v355
      %364 = vst [vmem:[%s3 + $0x14] sm:$0xf] %v356
    $region25: #{bert_encoder_forward.13} parent=1 // pred_fallthru
      _
    // Predicated region
    $region26: #{bert_encoder_forward.13} parent=1 // pred_check
      _
    $region27: #{bert_encoder_forward.13} parent=1 // pred_check_branch
      %366 = sbr.rel (0) target = $region29
    $region28: #{bert_encoder_forward.13} parent=1 // pred_region
      _
    $region29: #{bert_encoder_forward.13} parent=1 // pred_fallthru
      _
    // Predicated region
    $region30: #{bert_encoder_forward.13} parent=1 // pred_check
      _
    $region31: #{bert_encoder_forward.13} parent=1 // pred_check_branch
      %368 = sbr.rel (0) target = $region33
    $region32: #{bert_encoder_forward.13} parent=1 // pred_region
      _
    $region33: #{bert_encoder_forward.13} parent=1 // pred_fallthru
      _
    %369 = vsyncpa [#allocation4], 1

// kernel: bert_encoder_forward.14
$region0: #{bert_encoder_forward.14}
  #allocation0 [shape = 'u32[]', space=smem, size = 0x4, offset = 0x4, fixed_abs, tag = 'smem constant byte address 0x4 - core index']
  #allocation1 [shape = 'u32[144,128]{1,0:T(1,128)}', space=vmem, size = 0x12000, scoped, tag = 'internal scratch']
  %s0 = inlined_call_operand.vmem [shape: bf16[2,8,384], index: 0, kind: input, shape index: {}, may-alias: {0,1,2}]
  %s1 = inlined_call_operand.vmem [shape: bf16[2,8,384], index: 1, kind: input, shape index: {}, may-alias: {0,1,2}]
  %s2 = inlined_call_operand.vmem [shape: bf16[2,8,384], index: 2, kind: input, shape index: {}, may-alias: {0,1,2}]
  %s3 = inlined_call_operand.vmem [shape: bf16[2,8,128], index: 3, kind: output, shape index: {}]
  %s4 = sld [smem:[#allocation0]]
  $region45: #{bert_encoder_forward.14} parent=0
    _
  %s6 = ssub.s32 1, %s4
  %s7 = scalar_select 0, %s6, %s4
  loop: start=0, step=1, limit=4
  $region2: #{bert_encoder_forward.14} parent=0 // loop_pre_header
    _
  $region3: #{bert_encoder_forward.14} parent=0 // loop_header
    %s9 = sphi 0, %s13
    %p10 = scmp.ge.s32.totalorder %s9, 4
    %s16 = sphi 0, %s28
    %s17 = sphi 0, %s24
    %s18 = sphi 0, %s16
    %s19 = sphi 0, %s17
    %s20 = sphi 0, %s18
    %s21 = sphi 0, %s19
    %s33 = sphi 0, %s35
    %s36 = sphi 0, %s33
    %s37 = sphi 0, %s36
    %s53 = sphi 0, %s37
    %s63 = sphi 0, %s65
    %s66 = sphi 0, %s63
    %s67 = sphi 0, %s66
    %s83 = sphi 0, %s67
    %s93 = sphi 0, %s95
    %s96 = sphi 0, %s93
    %s97 = sphi 0, %s96
    %s113 = sphi 0, %s97
    %s121 = sphi 0, %s123
    %s124 = sphi 0, %s121
    %s125 = sphi 0, %s124
    %s141 = sphi 0, %s125
  $region4: #{bert_encoder_forward.14} parent=0 // loop_header_branch
    %12 = sbr.rel (%p10) target = $region8
  $region5: #{bert_encoder_forward.14} parent=0 // loop_body
    %s14 = ssub.s32 %s9, 1
    %s15 = ssub.s32 %s9, 2
    %s22 = sadd.s32 1, %s17
    %p23 = scmp.ge.s32.totalorder %s22, 1
    %s24 = scalar_select %p23, 0, %s22
    %s25 = sadd.s32 1, %s16
    %s26 = scalar_select %p23, %s25, %s16
    %p27 = scmp.ge.s32.totalorder %s26, 2
    %s28 = scalar_select %p27, 0, %s26
    %s29 = ssub.s32 %s16, %s28
    %s30 = ssub.s32 %s17, %s24
    %s31 = sor.u32 %s29, %s30
    %p32 = scmp.eq.s32.totalorder %s31, 0
    %s34 = sadd.s32 %s33, 1
    %s35 = scalar_select %p32, %s33, %s34
    %p38 = pneg %p32
    %p39 = scmp.eq.s32.totalorder %s9, 1
    %p40 = por %p38, %p39
    %p41 = scmp.ne.s32.totalorder %s33, %s36
    %p42 = scmp.eq.s32.totalorder %s9, 0
    %p43 = por %p41, %p42
    %p44 = scmp.ne.s32.totalorder %s33, %s36
    %p45 = scmp.eq.s32.totalorder %s14, 1
    %p46 = por %p44, %p45
    %p47 = scmp.ne.s32.totalorder %s36, %s37
    %p48 = scmp.eq.s32.totalorder %s14, 0
    %p49 = por %p47, %p48
    %p50 = scmp.ne.s32.totalorder %s36, %s37
    %p51 = scmp.eq.s32.totalorder %s15, 1
    %p52 = por %p50, %p51
    %p54 = scmp.ne.s32.totalorder %s37, %s53
    %p55 = scmp.eq.s32.totalorder %s15, 0
    %p56 = por %p54, %p55
    %s57 = sadd.s32 %s17, 1
    %s58 = sadd.s32 %s24, 1
    %s59 = ssub.s32 %s16, %s28
    %s60 = ssub.s32 %s57, %s58
    %s61 = sor.u32 %s59, %s60
    %p62 = scmp.eq.s32.totalorder %s61, 0
    %s64 = sadd.s32 %s63, 1
    %s65 = scalar_select %p62, %s63, %s64
    %p68 = pneg %p62
    %p69 = scmp.eq.s32.totalorder %s9, 1
    %p70 = por %p68, %p69
    %p71 = scmp.ne.s32.totalorder %s63, %s66
    %p72 = scmp.eq.s32.totalorder %s9, 0
    %p73 = por %p71, %p72
    %p74 = scmp.ne.s32.totalorder %s63, %s66
    %p75 = scmp.eq.s32.totalorder %s14, 1
    %p76 = por %p74, %p75
    %p77 = scmp.ne.s32.totalorder %s66, %s67
    %p78 = scmp.eq.s32.totalorder %s14, 0
    %p79 = por %p77, %p78
    %p80 = scmp.ne.s32.totalorder %s66, %s67
    %p81 = scmp.eq.s32.totalorder %s15, 1
    %p82 = por %p80, %p81
    %p84 = scmp.ne.s32.totalorder %s67, %s83
    %p85 = scmp.eq.s32.totalorder %s15, 0
    %p86 = por %p84, %p85
    %s87 = sadd.s32 %s17, 2
    %s88 = sadd.s32 %s24, 2
    %s89 = ssub.s32 %s16, %s28
    %s90 = ssub.s32 %s87, %s88
    %s91 = sor.u32 %s89, %s90
    %p92 = scmp.eq.s32.totalorder %s91, 0
    %s94 = sadd.s32 %s93, 1
    %s95 = scalar_select %p92, %s93, %s94
    %p98 = pneg %p92
    %p99 = scmp.eq.s32.totalorder %s9, 1
    %p100 = por %p98, %p99
    %p101 = scmp.ne.s32.totalorder %s93, %s96
    %p102 = scmp.eq.s32.totalorder %s9, 0
    %p103 = por %p101, %p102
    %p104 = scmp.ne.s32.totalorder %s93, %s96
    %p105 = scmp.eq.s32.totalorder %s14, 1
    %p106 = por %p104, %p105
    %p107 = scmp.ne.s32.totalorder %s96, %s97
    %p108 = scmp.eq.s32.totalorder %s14, 0
    %p109 = por %p107, %p108
    %p110 = scmp.ne.s32.totalorder %s96, %s97
    %p111 = scmp.eq.s32.totalorder %s15, 1
    %p112 = por %p110, %p111
    %p114 = scmp.ne.s32.totalorder %s97, %s113
    %p115 = scmp.eq.s32.totalorder %s15, 0
    %p116 = por %p114, %p115
    %s117 = ssub.s32 %s16, %s28
    %s118 = ssub.s32 %s17, %s24
    %s119 = sor.u32 %s117, %s118
    %p120 = scmp.eq.s32.totalorder %s119, 0
    %s122 = sadd.s32 %s121, 1
    %s123 = scalar_select %p120, %s121, %s122
    %p126 = pneg %p120
    %p127 = scmp.eq.s32.totalorder %s9, 1
    %p128 = por %p126, %p127
    %p129 = scmp.ne.s32.totalorder %s121, %s124
    %p130 = scmp.eq.s32.totalorder %s9, 0
    %p131 = por %p129, %p130
    %p132 = scmp.ne.s32.totalorder %s121, %s124
    %p133 = scmp.eq.s32.totalorder %s14, 1
    %p134 = por %p132, %p133
    %p135 = scmp.ne.s32.totalorder %s124, %s125
    %p136 = scmp.eq.s32.totalorder %s14, 0
    %p137 = por %p135, %p136
    %p138 = scmp.ne.s32.totalorder %s124, %s125
    %p139 = scmp.eq.s32.totalorder %s15, 1
    %p140 = por %p138, %p139
    %p142 = scmp.ne.s32.totalorder %s125, %s141
    %p143 = scmp.eq.s32.totalorder %s15, 0
    %p144 = por %p142, %p143
    %p145 = scmp.le.s32.totalorder 1, %s9
    %p146 = scmp.lt.s32.totalorder %s9, 3
    %p147 = pnand %p145, %p146
    %p148 = pneg %p147
    // Predicated region
    $region9: #{bert_encoder_forward.14} parent=5 // pred_check
      _
    $region10: #{bert_encoder_forward.14} parent=5 // pred_check_branch
      %150 = sbr.rel (%p147) target = $region12
    $region11: #{bert_encoder_forward.14} parent=5 // pred_region
      %s151 = ssub.s32 %s9, 1
    $region12: #{bert_encoder_forward.14} parent=5 // pred_fallthru
      _
    %p152 = scmp.lt.s32.totalorder %s9, 2
    // Predicated region
    $region13: #{bert_encoder_forward.14} parent=5 // pred_check
      %p153 = pneg %p152
    $region14: #{bert_encoder_forward.14} parent=5 // pred_check_branch
      %155 = sbr.rel (%p153) target = $region16
    $region15: #{bert_encoder_forward.14} parent=5 // pred_region
      // Predicated region
      $region17: #{bert_encoder_forward.14} parent=15 // pred_check
        %p156 = pneg %p43
      $region18: #{bert_encoder_forward.14} parent=15 // pred_check_branch
        %158 = sbr.rel (%p156) target = $region20
      $region19: #{bert_encoder_forward.14} parent=15 // pred_region
        %p159 = scmp.lt.s32.totalorder %s16, 1
        %s160 = scalar_select %p159, %s16, 1
        %p161 = scmp.lt.s32.totalorder %s17, 2
        %s162 = scalar_select %p161, %s17, 2
        %s163 = smul.addr %s160, 3
        %s164 = sadd.s32 %s162, %s163
        %s165 = smul.addr %s164, 4
        %s166 = scalar_lea.vmem %s0, %s165
      $region20: #{bert_encoder_forward.14} parent=15 // pred_fallthru
        _
      // Predicated region
      $region21: #{bert_encoder_forward.14} parent=15 // pred_check
        %p167 = pneg %p73
      $region22: #{bert_encoder_forward.14} parent=15 // pred_check_branch
        %169 = sbr.rel (%p167) target = $region24
      $region23: #{bert_encoder_forward.14} parent=15 // pred_region
        %s170 = sadd.s32 %s17, 1
        %p171 = scmp.lt.s32.totalorder %s16, 1
        %s172 = scalar_select %p171, %s16, 1
        %p173 = scmp.lt.s32.totalorder %s170, 2
        %s174 = scalar_select %p173, %s170, 2
        %s175 = smul.addr %s172, 3
        %s176 = sadd.s32 %s174, %s175
        %s177 = smul.addr %s176, 4
        %s178 = scalar_lea.vmem %s1, %s177
        %s179 = sadd.s32 %s17, 1
      $region24: #{bert_encoder_forward.14} parent=15 // pred_fallthru
        _
      // Predicated region
      $region25: #{bert_encoder_forward.14} parent=15 // pred_check
        %p180 = pneg %p103
      $region26: #{bert_encoder_forward.14} parent=15 // pred_check_branch
        %182 = sbr.rel (%p180) target = $region28
      $region27: #{bert_encoder_forward.14} parent=15 // pred_region
        %s183 = sadd.s32 %s17, 2
        %p184 = scmp.lt.s32.totalorder %s16, 1
        %s185 = scalar_select %p184, %s16, 1
        %p186 = scmp.lt.s32.totalorder %s183, 2
        %s187 = scalar_select %p186, %s183, 2
        %s188 = smul.addr %s185, 3
        %s189 = sadd.s32 %s187, %s188
        %s190 = smul.addr %s189, 4
        %s191 = scalar_lea.vmem %s2, %s190
        %s192 = sadd.s32 %s17, 2
      $region28: #{bert_encoder_forward.14} parent=15 // pred_fallthru
        _
    $region16: #{bert_encoder_forward.14} parent=5 // pred_fallthru
      _
    %p193 = scmp.le.s32.totalorder 1, %s9
    %p194 = scmp.lt.s32.totalorder %s9, 3
    %p195 = pnand %p193, %p194
    %p196 = pneg %p195
    // Predicated region
    $region29: #{bert_encoder_forward.14} parent=5 // pred_check
      _
    $region30: #{bert_encoder_forward.14} parent=5 // pred_check_branch
      %198 = sbr.rel (%p195) target = $region32
    $region31: #{bert_encoder_forward.14} parent=5 // pred_region
      %s199 = ssub.s32 %s9, 1
      %p200 = scmp.lt.s32.totalorder %s18, 1
      %s201 = scalar_select %p200, %s18, 1
      %p202 = scmp.lt.s32.totalorder %s19, 2
      %s203 = scalar_select %p202, %s19, 2
      %s204 = smul.addr %s201, 3
      %s205 = sadd.s32 %s203, %s204
      %s206 = smul.addr %s205, 4
      %s207 = scalar_lea.vmem %s0, %s206
      %p208 = pneg %p49
      %p209 = pneg %p46
      %s210 = sadd.s32 %s19, 1
      %p211 = scmp.lt.s32.totalorder %s18, 1
      %s212 = scalar_select %p211, %s18, 1
      %p213 = scmp.lt.s32.totalorder %s210, 2
      %s214 = scalar_select %p213, %s210, 2
      %s215 = smul.addr %s212, 3
      %s216 = sadd.s32 %s214, %s215
      %s217 = smul.addr %s216, 4
      %s218 = scalar_lea.vmem %s1, %s217
      %p219 = pneg %p79
      %p220 = pneg %p76
      %s221 = sadd.s32 %s19, 2
      %p222 = scmp.lt.s32.totalorder %s18, 1
      %s223 = scalar_select %p222, %s18, 1
      %p224 = scmp.lt.s32.totalorder %s221, 2
      %s225 = scalar_select %p224, %s221, 2
      %s226 = smul.addr %s223, 3
      %s227 = sadd.s32 %s225, %s226
      %s228 = smul.addr %s227, 4
      %s229 = scalar_lea.vmem %s2, %s228
      %p230 = pneg %p109
      %p231 = pneg %p106
      %p232 = pneg %p137
      %p233 = pneg %p134
      %p234 = scmp.lt.s32.totalorder %s18, 1
      %s235 = scalar_select %p234, %s18, 1
      %p236 = scmp.lt.s32.totalorder %s19, 0
      %s237 = scalar_select %p236, %s19, 0
      %s238 = sadd.s32 %s237, %s235
      %s239 = smul.addr %s238, 4
      %s240 = scalar_lea.vmem %s3, %s239
      %p241 = scmp.lt.s32.totalorder %s18, 1
      %s242 = scalar_select %p241, %s18, 1
      %p243 = scmp.lt.s32.totalorder %s19, 2
      %s244 = scalar_select %p243, %s19, 2
      %s245 = smul.addr %s242, 3
      %s246 = sadd.s32 %s244, %s245
      %s247 = smul.addr %s246, 4
      %s248 = scalar_lea.vmem %s0, %s247
      %s249 = sadd.s32 %s19, 1
      %p250 = scmp.lt.s32.totalorder %s18, 1
      %s251 = scalar_select %p250, %s18, 1
      %p252 = scmp.lt.s32.totalorder %s249, 2
      %s253 = scalar_select %p252, %s249, 2
      %s254 = smul.addr %s251, 3
      %s255 = sadd.s32 %s253, %s254
      %s256 = smul.addr %s255, 4
      %s257 = scalar_lea.vmem %s1, %s256
      %s258 = sadd.s32 %s19, 1
      %s259 = sadd.s32 %s19, 2
      %p260 = scmp.lt.s32.totalorder %s18, 1
      %s261 = scalar_select %p260, %s18, 1
      %p262 = scmp.lt.s32.totalorder %s259, 2
      %s263 = scalar_select %p262, %s259, 2
      %s264 = smul.addr %s261, 3
      %s265 = sadd.s32 %s263, %s264
      %s266 = smul.addr %s265, 4
      %s267 = scalar_lea.vmem %s2, %s266
      %s268 = sadd.s32 %s19, 2
      %p269 = scmp.lt.s32.totalorder %s18, 1
      %s270 = scalar_select %p269, %s18, 1
      %p271 = scmp.lt.s32.totalorder %s19, 0
      %s272 = scalar_select %p271, %s19, 0
      %s273 = sadd.s32 %s272, %s270
      %s274 = smul.addr %s273, 4
      %s275 = scalar_lea.vmem %s3, %s274
      %v277 = vld [vmem:[%s248] sm:$0xf]
      %v278 = vld [vmem:[%s257] sm:$0xf]
      %v279 = vld [vmem:[%s267] sm:$0xf]
      %vm280 = vcmask 523264
      %v282 = vsel %vm280, %v277, 0
      %v285 = vsel %vm280, %v278, 0
      %287 = vmatprep.subr.bf16.mxu0 0
      %288 = vmatpush1.bf16.xpose.msra.mxu0 %v285
      %289 = vmatprep.subr.bf16.mxu0 0
      %290 = vmatpush1.bf16.xpose.msra.mxu0 0
      %291 = vmatprep.subr.bf16.mxu0 0
      %292 = vmatpush1.bf16.xpose.msra.mxu0 0
      %293 = vmatprep.subr.bf16.mxu0 0
      %294 = vmatpush1.bf16.xpose.msra.mxu0 0
      %295 = vmatprep.subr.bf16.mxu0 0
      %296 = vmatpush1.bf16.xpose.msra.mxu0 0
      %297 = vmatprep.subr.bf16.mxu0 0
      %298 = vmatpush1.bf16.xpose.msra.mxu0 0
      %299 = vmatprep.subr.bf16.mxu0 0
      %300 = vmatpush1.bf16.xpose.msra.mxu0 0
      %301 = vmatprep.subr.bf16.mxu0 0
      %302 = vmatpush1.bf16.xpose.msra.mxu0 0
      %303 = vmatprep.subr.bf16.mxu0 0
      %304 = vmatpush1.bf16.xpose.msra.mxu0 0
      %305 = vmatprep.subr.bf16.mxu0 0
      %306 = vmatpush1.bf16.xpose.msra.mxu0 0
      %307 = vmatprep.subr.bf16.mxu0 0
      %308 = vmatpush1.bf16.xpose.msra.mxu0 0
      %309 = vmatprep.subr.bf16.mxu0 0
      %310 = vmatpush1.bf16.xpose.msra.mxu0 0
      %311 = vmatprep.subr.bf16.mxu0 0
      %312 = vmatpush1.bf16.xpose.msra.mxu0 0
      %313 = vmatprep.subr.bf16.mxu0 0
      %314 = vmatpush1.bf16.xpose.msra.mxu0 0
      %315 = vmatprep.subr.bf16.mxu0 0
      %316 = vmatpush1.bf16.xpose.msra.mxu0 0
      %317 = vmatprep.subr.bf16.mxu0 0
      %318 = vmatpush1.bf16.xpose.msra.mxu0 0
      %319 = vmatprep.mubr.bf16.mxu0 0
      %320 = vmatmul.mubr.bf16.gmra.mrb[0].mxu0 %v282
      %v321 = vpop.f32.mrb[0].mxu0
      %v322 = vadd.f32 0.0, %v321
      %v323 = vpop.f32.mrb[0].mxu0
      %v324 = vpop.f32.mrb[0].mxu0
      %v325 = vpop.f32.mrb[0].mxu0
      %326 = vdwg.mxu0
      %vm327 = vcmask 64512
      %v328 = vsel %vm327, %v322, -inf
      %329 = vmax.xlane.f32.xlu0 %v328
      %v330 = vpop.xlane.xlu0 %329
      %v331 = vsub.f32 %v322, %v330
      %v332 = vmul.f32 %v331, 1.442695
      %v333 = vpow.pop %v332
      %v334 = vsel %vm327, %v333, 0.0
      %335 = vadd.xlane.f32.xlu0 %v334
      %v336 = vpop.xlane.xlu0 %335
      %v337 = vrcp.pop %v336
      %v338 = vmul.f32 %v333, %v337
      %v339 = vpack.c.bf16 %v338, %v338
      %v341 = vsel %vm327, %v339, 0
      %vm343 = vcmask 1043456
      %v345 = vsel %vm343, %v279, 0
      %347 = vmatprep.subr.bf16.mxu0 0
      %348 = vmatpush1.bf16.msra.mxu0 %v345
      %349 = vmatprep.subr.bf16.mxu0 0
      %350 = vmatpush1.bf16.msra.mxu0 0
      %351 = vmatprep.subr.bf16.mxu0 0
      %352 = vmatpush1.bf16.msra.mxu0 0
      %353 = vmatprep.subr.bf16.mxu0 0
      %354 = vmatpush1.bf16.msra.mxu0 0
      %355 = vmatprep.subr.bf16.mxu0 0
      %356 = vmatpush1.bf16.msra.mxu0 0
      %357 = vmatprep.subr.bf16.mxu0 0
      %358 = vmatpush1.bf16.msra.mxu0 0
      %359 = vmatprep.subr.bf16.mxu0 0
      %360 = vmatpush1.bf16.msra.mxu0 0
      %361 = vmatprep.subr.bf16.mxu0 0
      %362 = vmatpush1.bf16.msra.mxu0 0
      %363 = vmatprep.subr.bf16.mxu0 0
      %364 = vmatpush1.bf16.msra.mxu0 0
      %365 = vmatprep.subr.bf16.mxu0 0
      %366 = vmatpush1.bf16.msra.mxu0 0
      %367 = vmatprep.subr.bf16.mxu0 0
      %368 = vmatpush1.bf16.msra.mxu0 0
      %369 = vmatprep.subr.bf16.mxu0 0
      %370 = vmatpush1.bf16.msra.mxu0 0
      %371 = vmatprep.subr.bf16.mxu0 0
      %372 = vmatpush1.bf16.msra.mxu0 0
      %373 = vmatprep.subr.bf16.mxu0 0
      %374 = vmatpush1.bf16.msra.mxu0 0
      %375 = vmatprep.subr.bf16.mxu0 0
      %376 = vmatpush1.bf16.msra.mxu0 0
      %377 = vmatprep.subr.bf16.mxu0 0
      %378 = vmatpush1.bf16.msra.mxu0 0
      %379 = vmatprep.mubr.bf16.mxu0 0
      %380 = vmatmul.mubr.bf16.gmra.mrb[0].mxu0 %v341
      %v381 = vpop.f32.mrb[0].mxu0
      %v382 = vadd.f32 0.0, %v381
      %v383 = vpop.f32.mrb[0].mxu0
      %v384 = vpop.f32.mrb[0].mxu0
      %v385 = vpop.f32.mrb[0].mxu0
      %386 = vdwg.mxu0
      %v388 = vunpack.c.l.b16 %v277
      %v389 = vpack.c.b16 %v388, %v388
      %390 = vrot.lane.b32.xlu0 %v389, 64
      %v391 = vpop.permute.xlu0 %390
      %v393 = vunpack.c.l.b16 %v278
      %v394 = vpack.c.b16 %v393, %v393
      %395 = vrot.lane.b32.xlu0 %v394, 64
      %v396 = vpop.permute.xlu0 %395
      %v398 = vsel %vm280, %v391, 0
      %v401 = vsel %vm280, %v396, 0
      %403 = vmatprep.subr.bf16.mxu0 0
      %404 = vmatpush1.bf16.xpose.msra.mxu0 %v401
      %405 = vmatprep.subr.bf16.mxu0 0
      %406 = vmatpush1.bf16.xpose.msra.mxu0 0
      %407 = vmatprep.subr.bf16.mxu0 0
      %408 = vmatpush1.bf16.xpose.msra.mxu0 0
      %409 = vmatprep.subr.bf16.mxu0 0
      %410 = vmatpush1.bf16.xpose.msra.mxu0 0
      %411 = vmatprep.subr.bf16.mxu0 0
      %412 = vmatpush1.bf16.xpose.msra.mxu0 0
      %413 = vmatprep.subr.bf16.mxu0 0
      %414 = vmatpush1.bf16.xpose.msra.mxu0 0
      %415 = vmatprep.subr.bf16.mxu0 0
      %416 = vmatpush1.bf16.xpose.msra.mxu0 0
      %417 = vmatprep.subr.bf16.mxu0 0
      %418 = vmatpush1.bf16.xpose.msra.mxu0 0
      %419 = vmatprep.subr.bf16.mxu0 0
      %420 = vmatpush1.bf16.xpose.msra.mxu0 0
      %421 = vmatprep.subr.bf16.mxu0 0
      %422 = vmatpush1.bf16.xpose.msra.mxu0 0
      %423 = vmatprep.subr.bf16.mxu0 0
      %424 = vmatpush1.bf16.xpose.msra.mxu0 0
      %425 = vmatprep.subr.bf16.mxu0 0
      %426 = vmatpush1.bf16.xpose.msra.mxu0 0
      %427 = vmatprep.subr.bf16.mxu0 0
      %428 = vmatpush1.bf16.xpose.msra.mxu0 0
      %429 = vmatprep.subr.bf16.mxu0 0
      %430 = vmatpush1.bf16.xpose.msra.mxu0 0
      %431 = vmatprep.subr.bf16.mxu0 0
      %432 = vmatpush1.bf16.xpose.msra.mxu0 0
      %433 = vmatprep.subr.bf16.mxu0 0
      %434 = vmatpush1.bf16.xpose.msra.mxu0 0
      %435 = vmatprep.mubr.bf16.mxu0 0
      %436 = vmatmul.mubr.bf16.gmra.mrb[0].mxu0 %v398
      %v437 = vpop.f32.mrb[0].mxu0
      %v438 = vadd.f32 0.0, %v437
      %v439 = vpop.f32.mrb[0].mxu0
      %v440 = vpop.f32.mrb[0].mxu0
      %v441 = vpop.f32.mrb[0].mxu0
      %442 = vdwg.mxu0
      %v443 = vsel %vm327, %v438, -inf
      %444 = vmax.xlane.f32.xlu0 %v443
      %v445 = vpop.xlane.xlu0 %444
      %v446 = vsub.f32 %v438, %v445
      %v447 = vmul.f32 %v446, 1.442695
      %v448 = vpow.pop %v447
      %v449 = vsel %vm327, %v448, 0.0
      %450 = vadd.xlane.f32.xlu0 %v449
      %v451 = vpop.xlane.xlu0 %450
      %v452 = vrcp.pop %v451
      %v453 = vmul.f32 %v448, %v452
      %v454 = vpack.c.bf16 %v453, %v453
      %v456 = vunpack.c.l.b16 %v279
      %v457 = vpack.c.b16 %v456, %v456
      %458 = vrot.lane.b32.xlu0 %v457, 64
      %v459 = vpop.permute.xlu0 %458
      %v461 = vsel %vm327, %v454, 0
      %v464 = vsel %vm343, %v459, 0
      %466 = vmatprep.subr.bf16.mxu0 0
      %467 = vmatpush1.bf16.msra.mxu0 %v464
      %468 = vmatprep.subr.bf16.mxu0 0
      %469 = vmatpush1.bf16.msra.mxu0 0
      %470 = vmatprep.subr.bf16.mxu0 0
      %471 = vmatpush1.bf16.msra.mxu0 0
      %472 = vmatprep.subr.bf16.mxu0 0
      %473 = vmatpush1.bf16.msra.mxu0 0
      %474 = vmatprep.subr.bf16.mxu0 0
      %475 = vmatpush1.bf16.msra.mxu0 0
      %476 = vmatprep.subr.bf16.mxu0 0
      %477 = vmatpush1.bf16.msra.mxu0 0
      %478 = vmatprep.subr.bf16.mxu0 0
      %479 = vmatpush1.bf16.msra.mxu0 0
      %480 = vmatprep.subr.bf16.mxu0 0
      %481 = vmatpush1.bf16.msra.mxu0 0
      %482 = vmatprep.subr.bf16.mxu0 0
      %483 = vmatpush1.bf16.msra.mxu0 0
      %484 = vmatprep.subr.bf16.mxu0 0
      %485 = vmatpush1.bf16.msra.mxu0 0
      %486 = vmatprep.subr.bf16.mxu0 0
      %487 = vmatpush1.bf16.msra.mxu0 0
      %488 = vmatprep.subr.bf16.mxu0 0
      %489 = vmatpush1.bf16.msra.mxu0 0
      %490 = vmatprep.subr.bf16.mxu0 0
      %491 = vmatpush1.bf16.msra.mxu0 0
      %492 = vmatprep.subr.bf16.mxu0 0
      %493 = vmatpush1.bf16.msra.mxu0 0
      %494 = vmatprep.subr.bf16.mxu0 0
      %495 = vmatpush1.bf16.msra.mxu0 0
      %496 = vmatprep.subr.bf16.mxu0 0
      %497 = vmatpush1.bf16.msra.mxu0 0
      %498 = vmatprep.mubr.bf16.mxu0 0
      %499 = vmatmul.mubr.bf16.gmra.mrb[0].mxu0 %v461
      %v500 = vpop.f32.mrb[0].mxu0
      %v501 = vadd.f32 0.0, %v500
      %v502 = vpop.f32.mrb[0].mxu0
      %v503 = vpop.f32.mrb[0].mxu0
      %v504 = vpop.f32.mrb[0].mxu0
      %505 = vdwg.mxu0
      %507 = vrot.lane.b32.xlu0 %v501, 64
      %v508 = vpop.permute.xlu0 %507
      %v510 = vsel %vm280, %v382, %v508
      %v511 = vpack.c.bf16 %v510, %v510
      %512 = vst [vmem:[%s275] sm:$0xf] %v511
      %p513 = scmp.lt.s32.totalorder %s18, 1
      %s514 = scalar_select %p513, %s18, 1
      %p515 = scmp.lt.s32.totalorder %s19, 0
      %s516 = scalar_select %p515, %s19, 0
      %s517 = sadd.s32 %s516, %s514
      %s518 = smul.addr %s517, 4
      %s519 = scalar_lea.vmem %s3, %s518
      // Predicated region
      $region33: #{bert_encoder_forward.14} parent=31 // pred_check
        %p520 = pneg %p134
      $region34: #{bert_encoder_forward.14} parent=31 // pred_check_branch
        %522 = sbr.rel (%p520) target = $region36
      $region35: #{bert_encoder_forward.14} parent=31 // pred_region
        _
      $region36: #{bert_encoder_forward.14} parent=31 // pred_fallthru
        _
    $region32: #{bert_encoder_forward.14} parent=5 // pred_fallthru
      _
    %p523 = scmp.le.s32.totalorder 2, %s9
    // Predicated region
    $region37: #{bert_encoder_forward.14} parent=5 // pred_check
      %p524 = pneg %p523
    $region38: #{bert_encoder_forward.14} parent=5 // pred_check_branch
      %526 = sbr.rel (%p524) target = $region40
    $region39: #{bert_encoder_forward.14} parent=5 // pred_region
      %s527 = ssub.s32 %s9, 2
      // Predicated region
      $region41: #{bert_encoder_forward.14} parent=39 // pred_check
        %p528 = pneg %p140
      $region42: #{bert_encoder_forward.14} parent=39 // pred_check_branch
        %530 = sbr.rel (%p528) target = $region44
      $region43: #{bert_encoder_forward.14} parent=39 // pred_region
        %p531 = scmp.lt.s32.totalorder %s20, 1
        %s532 = scalar_select %p531, %s20, 1
        %p533 = scmp.lt.s32.totalorder %s21, 0
        %s534 = scalar_select %p533, %s21, 0
        %s535 = sadd.s32 %s534, %s532
        %s536 = smul.addr %s535, 4
        %s537 = scalar_lea.vmem %s3, %s536
      $region44: #{bert_encoder_forward.14} parent=39 // pred_fallthru
        _
    $region40: #{bert_encoder_forward.14} parent=5 // pred_fallthru
      _
  $region6: #{bert_encoder_forward.14} parent=0 // loop_footer
    %s13 = sadd.s32 1, %s9
  $region7: #{bert_encoder_forward.14} parent=0 // loop_footer_branch
    %8 = sbr.rel target = $region3
  $region8: #{bert_encoder_forward.14} parent=0 // loop_exit
    _

// kernel: bert_encoder_forward.15
$region0: #{bert_encoder_forward.15}
  #allocation0 [shape = 'u32[]', space=smem, size = 0x4, offset = 0x4, fixed_abs, tag = 'smem constant byte address 0x4 - core index']
  #allocation1 [shape = 'u32[144,128]{1,0:T(1,128)}', space=vmem, size = 0x12000, scoped, tag = 'internal scratch']
  #allocation2 [shape = 'f32[16,128]{1,0:T(8,128)}', space=vmem, size = 0x2000, scoped, tag = 'scratch operand']
  %s0 = inlined_call_operand.vmem [shape: bf16[16,128], index: 0, kind: input, shape index: {}]
  %s1 = inlined_call_operand.hbm [shape: bf16[128,128], index: 1, kind: input, shape index: {}]
  %s2 = inlined_call_operand.hbm [shape: f32[1,128], index: 2, kind: input, shape index: {}]
  %s3 = inlined_call_operand.vmem [shape: bf16[16,128], index: 3, kind: input, shape index: {}]
  %s4 = inlined_call_operand.hbm [shape: f32[1,128], index: 4, kind: input, shape index: {}]
  %s5 = inlined_call_operand.hbm [shape: f32[1,128], index: 5, kind: input, shape index: {}]
  %s6 = inlined_call_operand.vmem [shape: bf16[16,128], index: 6, kind: output, shape index: {}]
  %s7 = sld [smem:[#allocation0]]
  $region58: #{bert_encoder_forward.15} parent=0
    _
  %s9 = ssub.s32 1, %s7
  %s10 = scalar_select 0, %s9, %s7
  $region1: #{bert_encoder_forward.15} parent=0
    #allocation3 [shape = 'u8[32768]{0}', space=vmem, size = 0x8000, scoped, tag = 'input window, operand 1, single buffered']
    #allocation4 [shape = 's32[1]{0}', space=sflag, size = 0x4, scoped, tag = 'scoped memory for bert_encoder_forward.15']
    #allocation5 [shape = 'u8[512]{0}', space=vmem, size = 0x400, scoped, tag = 'input window, operand 2, single buffered']
    #allocation6 [shape = 's32[1]{0}', space=sflag, size = 0x4, scoped, tag = 'scoped memory for bert_encoder_forward.15']
    #allocation7 [shape = 'u8[512]{0}', space=vmem, size = 0x400, scoped, tag = 'input window, operand 4, single buffered']
    #allocation8 [shape = 'u8[512]{0}', space=vmem, size = 0x400, scoped, tag = 'input window, operand 5, single buffered']
    #allocation9 [shape = 's32[1]{0}', space=sflag, size = 0x4, scoped, tag = 'scoped memory for bert_encoder_forward.15']
    %11 = vsyncpa [#allocation4], 0
    %12 = vsyncpa [#allocation6], 0
    %13 = vsyncpa [#allocation9], 0
    // Predicated region
    $region2: #{bert_encoder_forward.15} parent=1 // pred_check
      _
    $region3: #{bert_encoder_forward.15} parent=1 // pred_check_branch
      %15 = sbr.rel (0) target = $region5
    $region4: #{bert_encoder_forward.15} parent=1 // pred_region
      _
    $region5: #{bert_encoder_forward.15} parent=1 // pred_fallthru
      _
    // Predicated region
    $region6: #{bert_encoder_forward.15} parent=1 // pred_check
      _
    $region7: #{bert_encoder_forward.15} parent=1 // pred_check_branch
      %17 = sbr.rel (0) target = $region9
    $region8: #{bert_encoder_forward.15} parent=1 // pred_region
      %s19 = ssub.s32 1024, 1024
      %20 = vsyncadd [#allocation4], %s19
      %s21 = sshll.u32 [#allocation3], 4
      %s22 = int_to_ptr.vmem [resolvable:$true] %s21
      %27 = dma.hbm_to_vmem [thread:$0]  %s1, 1024, %s22, [#allocation4], 64, 64, 4
    $region9: #{bert_encoder_forward.15} parent=1 // pred_fallthru
      _
    // Predicated region
    $region10: #{bert_encoder_forward.15} parent=1 // pred_check
      _
    $region11: #{bert_encoder_forward.15} parent=1 // pred_check_branch
      %29 = sbr.rel (0) target = $region13
    $region12: #{bert_encoder_forward.15} parent=1 // pred_region
      %s31 = ssub.s32 16, 16
      %32 = vsyncadd [#allocation6], %s31
      %s34 = sshll.u32 [#allocation5], 4
      %s35 = int_to_ptr.vmem [resolvable:$true] %s34
      %37 = dma.hbm_to_vmem [thread:$0]  %s2, 16, %s35, [#allocation6]
    $region13: #{bert_encoder_forward.15} parent=1 // pred_fallthru
      _
    // Predicated region
    $region14: #{bert_encoder_forward.15} parent=1 // pred_check
      _
    $region15: #{bert_encoder_forward.15} parent=1 // pred_check_branch
      %39 = sbr.rel (0) target = $region17
    $region16: #{bert_encoder_forward.15} parent=1 // pred_region
      _
    $region17: #{bert_encoder_forward.15} parent=1 // pred_fallthru
      _
    // Predicated region
    $region18: #{bert_encoder_forward.15} parent=1 // pred_check
      _
    $region19: #{bert_encoder_forward.15} parent=1 // pred_check_branch
      %41 = sbr.rel (0) target = $region21
    $region20: #{bert_encoder_forward.15} parent=1 // pred_region
      %s43 = ssub.s32 16, 16
      %44 = vsyncadd [#allocation6], %s43
      %s46 = sshll.u32 [#allocation7], 4
      %s47 = int_to_ptr.vmem [resolvable:$true] %s46
      %49 = dma.hbm_to_vmem [thread:$0]  %s4, 16, %s47, [#allocation6]
    $region21: #{bert_encoder_forward.15} parent=1 // pred_fallthru
      _
    // Predicated region
    $region22: #{bert_encoder_forward.15} parent=1 // pred_check
      _
    $region23: #{bert_encoder_forward.15} parent=1 // pred_check_branch
      %51 = sbr.rel (0) target = $region25
    $region24: #{bert_encoder_forward.15} parent=1 // pred_region
      %s53 = ssub.s32 16, 16
      %54 = vsyncadd [#allocation9], %s53
      %s56 = sshll.u32 [#allocation8], 4
      %s57 = int_to_ptr.vmem [resolvable:$true] %s56
      %59 = dma.hbm_to_vmem [thread:$0]  %s5, 16, %s57, [#allocation9]
    $region25: #{bert_encoder_forward.15} parent=1 // pred_fallthru
      _
    // Predicated region
    $region26: #{bert_encoder_forward.15} parent=1 // pred_check
      _
    $region27: #{bert_encoder_forward.15} parent=1 // pred_check_branch
      %61 = sbr.rel (0) target = $region29
    $region28: #{bert_encoder_forward.15} parent=1 // pred_region
      %62 = dma.done [#allocation4], 1024
    $region29: #{bert_encoder_forward.15} parent=1 // pred_fallthru
      _
    // Predicated region
    $region30: #{bert_encoder_forward.15} parent=1 // pred_check
      _
    $region31: #{bert_encoder_forward.15} parent=1 // pred_check_branch
      %64 = sbr.rel (0) target = $region33
    $region32: #{bert_encoder_forward.15} parent=1 // pred_region
      %65 = dma.done [#allocation6], 16
    $region33: #{bert_encoder_forward.15} parent=1 // pred_fallthru
      _
    // Predicated region
    $region34: #{bert_encoder_forward.15} parent=1 // pred_check
      _
    $region35: #{bert_encoder_forward.15} parent=1 // pred_check_branch
      %67 = sbr.rel (0) target = $region37
    $region36: #{bert_encoder_forward.15} parent=1 // pred_region
      %68 = dma.done [#allocation6], 16
    $region37: #{bert_encoder_forward.15} parent=1 // pred_fallthru
      _
    // Predicated region
    $region38: #{bert_encoder_forward.15} parent=1 // pred_check
      _
    $region39: #{bert_encoder_forward.15} parent=1 // pred_check_branch
      %70 = sbr.rel (0) target = $region41
    $region40: #{bert_encoder_forward.15} parent=1 // pred_region
      %71 = dma.done [#allocation9], 16
    $region41: #{bert_encoder_forward.15} parent=1 // pred_fallthru
      _
    %p73 = scmp.eq.s32.totalorder 0, 0
    // Predicated region
    $region42: #{bert_encoder_forward.15} parent=1 // pred_check
      %p74 = pneg %p73
    $region43: #{bert_encoder_forward.15} parent=1 // pred_check_branch
      %76 = sbr.rel (%p74) target = $region45
    $region44: #{bert_encoder_forward.15} parent=1 // pred_region
      %77 = vst [vmem:[#allocation2] sm:$0xff] 0.0
      %78 = vst [vmem:[#allocation2 + $0x8] sm:$0xff] 0.0
    $region45: #{bert_encoder_forward.15} parent=1 // pred_fallthru
      _
    %v79 = vld [vmem:[#allocation2] sm:$0xff]
    %v80 = vld [vmem:[#allocation2 + $0x8] sm:$0xff]
    %v81 = vld [vmem:[%s0] sm:$0xf]
    %v82 = vld [vmem:[%s0 + $0x4] sm:$0xf]
    %v83 = vld [vmem:[#allocation3] sm:$0xf]
    %v84 = vld [vmem:[#allocation3 + $0x4] sm:$0xf]
    %v85 = vld [vmem:[#allocation3 + $0x8] sm:$0xf]
    %v86 = vld [vmem:[#allocation3 + $0xc] sm:$0xf]
    %v87 = vld [vmem:[#allocation3 + $0x10] sm:$0xf]
    %v88 = vld [vmem:[#allocation3 + $0x14] sm:$0xf]
    %v89 = vld [vmem:[#allocation3 + $0x18] sm:$0xf]
    %v90 = vld [vmem:[#allocation3 + $0x1c] sm:$0xf]
    %v91 = vld [vmem:[#allocation3 + $0x20] sm:$0xf]
    %v92 = vld [vmem:[#allocation3 + $0x24] sm:$0xf]
    %v93 = vld [vmem:[#allocation3 + $0x28] sm:$0xf]
    %v94 = vld [vmem:[#allocation3 + $0x2c] sm:$0xf]
    %v95 = vld [vmem:[#allocation3 + $0x30] sm:$0xf]
    %v96 = vld [vmem:[#allocation3 + $0x34] sm:$0xf]
    %v97 = vld [vmem:[#allocation3 + $0x38] sm:$0xf]
    %v98 = vld [vmem:[#allocation3 + $0x3c] sm:$0xf]
    %v101 = vunpack.c.l.b16 %v81
    %v102 = vunpack.c.l.b16 %v82
    %v103 = vpack.c.b16 %v102, %v101
    %v121 = vunpack.c.l.b16 %v83
    %v122 = vunpack.c.l.b16 %v84
    %v123 = vunpack.c.l.b16 %v85
    %v124 = vunpack.c.l.b16 %v86
    %v125 = vunpack.c.l.b16 %v87
    %v126 = vunpack.c.l.b16 %v88
    %v127 = vunpack.c.l.b16 %v89
    %v128 = vunpack.c.l.b16 %v90
    %v129 = vunpack.c.l.b16 %v91
    %v130 = vunpack.c.l.b16 %v92
    %v131 = vunpack.c.l.b16 %v93
    %v132 = vunpack.c.l.b16 %v94
    %v133 = vunpack.c.l.b16 %v95
    %v134 = vunpack.c.l.b16 %v96
    %v135 = vunpack.c.l.b16 %v97
    %v136 = vunpack.c.l.b16 %v98
    %v137 = vpack.c.b16 %v122, %v121
    %v138 = vpack.c.b16 %v124, %v123
    %v139 = vpack.c.b16 %v126, %v125
    %v140 = vpack.c.b16 %v128, %v127
    %v141 = vpack.c.b16 %v130, %v129
    %v142 = vpack.c.b16 %v132, %v131
    %v143 = vpack.c.b16 %v134, %v133
    %v144 = vpack.c.b16 %v136, %v135
    %153 = vmatprep.subr.bf16.mxu0 0
    %154 = vmatpush1.bf16.msra.mxu0 %v137
    %155 = vmatprep.subr.bf16.mxu0 0
    %156 = vmatpush1.bf16.msra.mxu0 %v138
    %157 = vmatprep.subr.bf16.mxu0 0
    %158 = vmatpush1.bf16.msra.mxu0 %v139
    %159 = vmatprep.subr.bf16.mxu0 0
    %160 = vmatpush1.bf16.msra.mxu0 %v140
    %161 = vmatprep.subr.bf16.mxu0 0
    %162 = vmatpush1.bf16.msra.mxu0 %v141
    %163 = vmatprep.subr.bf16.mxu0 0
    %164 = vmatpush1.bf16.msra.mxu0 %v142
    %165 = vmatprep.subr.bf16.mxu0 0
    %166 = vmatpush1.bf16.msra.mxu0 %v143
    %167 = vmatprep.subr.bf16.mxu0 0
    %168 = vmatpush1.bf16.msra.mxu0 %v144
    %169 = vmatprep.subr.bf16.mxu0 0
    %170 = vmatpush1.bf16.msra.mxu0 0
    %171 = vmatprep.subr.bf16.mxu0 0
    %172 = vmatpush1.bf16.msra.mxu0 0
    %173 = vmatprep.subr.bf16.mxu0 0
    %174 = vmatpush1.bf16.msra.mxu0 0
    %175 = vmatprep.subr.bf16.mxu0 0
    %176 = vmatpush1.bf16.msra.mxu0 0
    %177 = vmatprep.subr.bf16.mxu0 0
    %178 = vmatpush1.bf16.msra.mxu0 0
    %179 = vmatprep.subr.bf16.mxu0 0
    %180 = vmatpush1.bf16.msra.mxu0 0
    %181 = vmatprep.subr.bf16.mxu0 0
    %182 = vmatpush1.bf16.msra.mxu0 0
    %183 = vmatprep.subr.bf16.mxu0 0
    %184 = vmatpush1.bf16.msra.mxu0 0
    %185 = vmatprep.mubr.bf16.mxu0 0
    %186 = vmatmul.mubr.bf16.gmra.mrb[0].mxu0 %v103
    %v187 = vpop.f32.mrb[0].mxu0
    %v188 = vadd.f32 0.0, %v187
    %v189 = vpop.f32.mrb[0].mxu0
    %v190 = vpop.f32.mrb[0].mxu0
    %v191 = vadd.f32 0.0, %v190
    %v192 = vpop.f32.mrb[0].mxu0
    %193 = vdwg.mxu0
    %v194 = vadd.f32 %v79, %v188
    %v195 = vadd.f32 %v80, %v191
    %196 = vst [vmem:[#allocation2] sm:$0xff] %v194
    %197 = vst [vmem:[#allocation2 + $0x8] sm:$0xff] %v195
    // Predicated region
    $region46: #{bert_encoder_forward.15} parent=1 // pred_check
      %p198 = pneg %p73
    $region47: #{bert_encoder_forward.15} parent=1 // pred_check_branch
      %200 = sbr.rel (%p198) target = $region49
    $region48: #{bert_encoder_forward.15} parent=1 // pred_region
      %v201 = vld [vmem:[#allocation2] sm:$0xff]
      %v202 = vld [vmem:[#allocation2 + $0x8] sm:$0xff]
      %v203 = vld [vmem:[#allocation5] sm:$0x1]
      %v205 = vlaneseq
      %v206 = vshrl.u32 %v205, 7
      %v207 = vsub.s32 0, %v206
      %v208 = vrot.slane %v203, %v207
      %v210 = vadd.f32 %v201, %v208
      %v211 = vadd.f32 %v202, %v208
      %v212 = vld [vmem:[%s3] sm:$0xf]
      %v213 = vld [vmem:[%s3 + $0x4] sm:$0xf]
      %v214 = vunpack.c.l.bf16 %v212
      %v215 = vunpack.c.l.bf16 %v213
      %v216 = vadd.f32 %v210, %v214
      %v217 = vadd.f32 %v211, %v215
      %218 = vadd.xlane.f32.xlu0 %v216
      %v219 = vpop.xlane.xlu0 %218
      %220 = vadd.xlane.f32.xlu0 %v217
      %v221 = vpop.xlane.xlu0 %220
      %v222 = vrcp.pop 128.0
      %v223 = vmul.f32 %v219, %v222
      %v224 = vmul.f32 %v221, %v222
      %v225 = vsub.f32 %v216, %v223
      %v226 = vsub.f32 %v217, %v224
      %v227 = vmul.f32 %v225, %v225
      %v228 = vmul.f32 %v226, %v226
      %229 = vadd.xlane.f32.xlu0 %v227
      %v230 = vpop.xlane.xlu0 %229
      %231 = vadd.xlane.f32.xlu0 %v228
      %v232 = vpop.xlane.xlu0 %231
      %v233 = vmul.f32 %v230, %v222
      %v234 = vmul.f32 %v232, %v222
      %v235 = vadd.f32 %v233, 1e-12
      %v236 = vadd.f32 %v234, 1e-12
      %v237 = vrsqrt.pop %v235
      %v238 = vrsqrt.pop %v236
      %v239 = vmul.f32 %v225, %v237
      %v240 = vmul.f32 %v226, %v238
      %v241 = vld [vmem:[#allocation7] sm:$0x1]
      %v243 = vlaneseq
      %v244 = vshrl.u32 %v243, 7
      %v245 = vsub.s32 0, %v244
      %v246 = vrot.slane %v241, %v245
      %v248 = vmul.f32 %v239, %v246
      %v249 = vmul.f32 %v240, %v246
      %v250 = vld [vmem:[#allocation8] sm:$0x1]
      %v252 = vlaneseq
      %v253 = vshrl.u32 %v252, 7
      %v254 = vsub.s32 0, %v253
      %v255 = vrot.slane %v250, %v254
      %v257 = vadd.f32 %v248, %v255
      %v258 = vadd.f32 %v249, %v255
      %v259 = vpack.c.bf16 %v258, %v257
      %v261 = vunpack.c.l.b16 %v259
      %v262 = vunpack.c.h.b16 %v259
      %v263 = vpack.c.b16 %v261, %v261
      %v264 = vpack.c.b16 %v262, %v262
      %267 = vst [vmem:[%s6] sm:$0xf] %v263
      %268 = vst [vmem:[%s6 + $0x4] sm:$0xf] %v264
    $region49: #{bert_encoder_forward.15} parent=1 // pred_fallthru
      _
    // Predicated region
    $region50: #{bert_encoder_forward.15} parent=1 // pred_check
      _
    $region51: #{bert_encoder_forward.15} parent=1 // pred_check_branch
      %270 = sbr.rel (0) target = $region53
    $region52: #{bert_encoder_forward.15} parent=1 // pred_region
      _
    $region53: #{bert_encoder_forward.15} parent=1 // pred_fallthru
      _
    // Predicated region
    $region54: #{bert_encoder_forward.15} parent=1 // pred_check
      _
    $region55: #{bert_encoder_forward.15} parent=1 // pred_check_branch
      %272 = sbr.rel (0) target = $region57
    $region56: #{bert_encoder_forward.15} parent=1 // pred_region
      _
    $region57: #{bert_encoder_forward.15} parent=1 // pred_fallthru
      _
    %273 = vsyncpa [#allocation4], 1
    %274 = vsyncpa [#allocation6], 1
    %275 = vsyncpa [#allocation9], 1

// kernel: bert_encoder_forward.17
$region0: #{bert_encoder_forward.17}
  #allocation0 [shape = 'u32[]', space=smem, size = 0x4, offset = 0x4, fixed_abs, tag = 'smem constant byte address 0x4 - core index']
  #allocation1 [shape = 'u32[144,128]{1,0:T(1,128)}', space=vmem, size = 0x12000, scoped, tag = 'internal scratch']
  #allocation2 [shape = 'f32[16,128]{1,0:T(8,128)}', space=vmem, size = 0x2000, scoped, tag = 'scratch operand']
  %s0 = inlined_call_operand.vmem [shape: bf16[16,256], index: 0, kind: input, shape index: {}]
  %s1 = inlined_call_operand.hbm [shape: bf16[256,128], index: 1, kind: input, shape index: {}]
  %s2 = inlined_call_operand.hbm [shape: f32[1,128], index: 2, kind: input, shape index: {}]
  %s3 = inlined_call_operand.vmem [shape: bf16[16,128], index: 3, kind: input, shape index: {}]
  %s4 = inlined_call_operand.hbm [shape: f32[1,128], index: 4, kind: input, shape index: {}]
  %s5 = inlined_call_operand.hbm [shape: f32[1,128], index: 5, kind: input, shape index: {}]
  %s6 = inlined_call_operand.vmem [shape: bf16[16,128], index: 6, kind: output, shape index: {}]
  %s7 = sld [smem:[#allocation0]]
  $region58: #{bert_encoder_forward.17} parent=0
    _
  %s9 = ssub.s32 1, %s7
  %s10 = scalar_select 0, %s9, %s7
  $region1: #{bert_encoder_forward.17} parent=0
    #allocation3 [shape = 'u8[65536]{0}', space=vmem, size = 0x10000, scoped, tag = 'input window, operand 1, single buffered']
    #allocation4 [shape = 's32[1]{0}', space=sflag, size = 0x4, scoped, tag = 'scoped memory for bert_encoder_forward.17']
    #allocation5 [shape = 'u8[512]{0}', space=vmem, size = 0x400, scoped, tag = 'input window, operand 2, single buffered']
    #allocation6 [shape = 's32[1]{0}', space=sflag, size = 0x4, scoped, tag = 'scoped memory for bert_encoder_forward.17']
    #allocation7 [shape = 'u8[512]{0}', space=vmem, size = 0x400, scoped, tag = 'input window, operand 4, single buffered']
    #allocation8 [shape = 'u8[512]{0}', space=vmem, size = 0x400, scoped, tag = 'input window, operand 5, single buffered']
    #allocation9 [shape = 's32[1]{0}', space=sflag, size = 0x4, scoped, tag = 'scoped memory for bert_encoder_forward.17']
    %11 = vsyncpa [#allocation4], 0
    %12 = vsyncpa [#allocation6], 0
    %13 = vsyncpa [#allocation9], 0
    // Predicated region
    $region2: #{bert_encoder_forward.17} parent=1 // pred_check
      _
    $region3: #{bert_encoder_forward.17} parent=1 // pred_check_branch
      %15 = sbr.rel (0) target = $region5
    $region4: #{bert_encoder_forward.17} parent=1 // pred_region
      _
    $region5: #{bert_encoder_forward.17} parent=1 // pred_fallthru
      _
    // Predicated region
    $region6: #{bert_encoder_forward.17} parent=1 // pred_check
      _
    $region7: #{bert_encoder_forward.17} parent=1 // pred_check_branch
      %17 = sbr.rel (0) target = $region9
    $region8: #{bert_encoder_forward.17} parent=1 // pred_region
      %s19 = ssub.s32 2048, 2048
      %20 = vsyncadd [#allocation4], %s19
      %s21 = sshll.u32 [#allocation3], 4
      %s22 = int_to_ptr.vmem [resolvable:$true] %s21
      %27 = dma.hbm_to_vmem [thread:$0]  %s1, 2048, %s22, [#allocation4], 64, 64, 4
    $region9: #{bert_encoder_forward.17} parent=1 // pred_fallthru
      _
    // Predicated region
    $region10: #{bert_encoder_forward.17} parent=1 // pred_check
      _
    $region11: #{bert_encoder_forward.17} parent=1 // pred_check_branch
      %29 = sbr.rel (0) target = $region13
    $region12: #{bert_encoder_forward.17} parent=1 // pred_region
      %s31 = ssub.s32 16, 16
      %32 = vsyncadd [#allocation6], %s31
      %s34 = sshll.u32 [#allocation5], 4
      %s35 = int_to_ptr.vmem [resolvable:$true] %s34
      %37 = dma.hbm_to_vmem [thread:$0]  %s2, 16, %s35, [#allocation6]
    $region13: #{bert_encoder_forward.17} parent=1 // pred_fallthru
      _
    // Predicated region
    $region14: #{bert_encoder_forward.17} parent=1 // pred_check
      _
    $region15: #{bert_encoder_forward.17} parent=1 // pred_check_branch
      %39 = sbr.rel (0) target = $region17
    $region16: #{bert_encoder_forward.17} parent=1 // pred_region
      _
    $region17: #{bert_encoder_forward.17} parent=1 // pred_fallthru
      _
    // Predicated region
    $region18: #{bert_encoder_forward.17} parent=1 // pred_check
      _
    $region19: #{bert_encoder_forward.17} parent=1 // pred_check_branch
      %41 = sbr.rel (0) target = $region21
    $region20: #{bert_encoder_forward.17} parent=1 // pred_region
      %s43 = ssub.s32 16, 16
      %44 = vsyncadd [#allocation6], %s43
      %s46 = sshll.u32 [#allocation7], 4
      %s47 = int_to_ptr.vmem [resolvable:$true] %s46
      %49 = dma.hbm_to_vmem [thread:$0]  %s4, 16, %s47, [#allocation6]
    $region21: #{bert_encoder_forward.17} parent=1 // pred_fallthru
      _
    // Predicated region
    $region22: #{bert_encoder_forward.17} parent=1 // pred_check
      _
    $region23: #{bert_encoder_forward.17} parent=1 // pred_check_branch
      %51 = sbr.rel (0) target = $region25
    $region24: #{bert_encoder_forward.17} parent=1 // pred_region
      %s53 = ssub.s32 16, 16
      %54 = vsyncadd [#allocation9], %s53
      %s56 = sshll.u32 [#allocation8], 4
      %s57 = int_to_ptr.vmem [resolvable:$true] %s56
      %59 = dma.hbm_to_vmem [thread:$0]  %s5, 16, %s57, [#allocation9]
    $region25: #{bert_encoder_forward.17} parent=1 // pred_fallthru
      _
    // Predicated region
    $region26: #{bert_encoder_forward.17} parent=1 // pred_check
      _
    $region27: #{bert_encoder_forward.17} parent=1 // pred_check_branch
      %61 = sbr.rel (0) target = $region29
    $region28: #{bert_encoder_forward.17} parent=1 // pred_region
      %62 = dma.done [#allocation4], 2048
    $region29: #{bert_encoder_forward.17} parent=1 // pred_fallthru
      _
    // Predicated region
    $region30: #{bert_encoder_forward.17} parent=1 // pred_check
      _
    $region31: #{bert_encoder_forward.17} parent=1 // pred_check_branch
      %64 = sbr.rel (0) target = $region33
    $region32: #{bert_encoder_forward.17} parent=1 // pred_region
      %65 = dma.done [#allocation6], 16
    $region33: #{bert_encoder_forward.17} parent=1 // pred_fallthru
      _
    // Predicated region
    $region34: #{bert_encoder_forward.17} parent=1 // pred_check
      _
    $region35: #{bert_encoder_forward.17} parent=1 // pred_check_branch
      %67 = sbr.rel (0) target = $region37
    $region36: #{bert_encoder_forward.17} parent=1 // pred_region
      %68 = dma.done [#allocation6], 16
    $region37: #{bert_encoder_forward.17} parent=1 // pred_fallthru
      _
    // Predicated region
    $region38: #{bert_encoder_forward.17} parent=1 // pred_check
      _
    $region39: #{bert_encoder_forward.17} parent=1 // pred_check_branch
      %70 = sbr.rel (0) target = $region41
    $region40: #{bert_encoder_forward.17} parent=1 // pred_region
      %71 = dma.done [#allocation9], 16
    $region41: #{bert_encoder_forward.17} parent=1 // pred_fallthru
      _
    %p73 = scmp.eq.s32.totalorder 0, 0
    // Predicated region
    $region42: #{bert_encoder_forward.17} parent=1 // pred_check
      %p74 = pneg %p73
    $region43: #{bert_encoder_forward.17} parent=1 // pred_check_branch
      %76 = sbr.rel (%p74) target = $region45
    $region44: #{bert_encoder_forward.17} parent=1 // pred_region
      %77 = vst [vmem:[#allocation2] sm:$0xff] 0.0
      %78 = vst [vmem:[#allocation2 + $0x8] sm:$0xff] 0.0
    $region45: #{bert_encoder_forward.17} parent=1 // pred_fallthru
      _
    %v79 = vld [vmem:[#allocation2] sm:$0xff]
    %v80 = vld [vmem:[#allocation2 + $0x8] sm:$0xff]
    %v81 = vld [vmem:[%s0] sm:$0xff]
    %v82 = vld [vmem:[%s0 + $0x8] sm:$0xff]
    %v83 = vld [vmem:[#allocation3] sm:$0xf]
    %v84 = vld [vmem:[#allocation3 + $0x4] sm:$0xf]
    %v85 = vld [vmem:[#allocation3 + $0x8] sm:$0xf]
    %v86 = vld [vmem:[#allocation3 + $0xc] sm:$0xf]
    %v87 = vld [vmem:[#allocation3 + $0x10] sm:$0xf]
    %v88 = vld [vmem:[#allocation3 + $0x14] sm:$0xf]
    %v89 = vld [vmem:[#allocation3 + $0x18] sm:$0xf]
    %v90 = vld [vmem:[#allocation3 + $0x1c] sm:$0xf]
    %v91 = vld [vmem:[#allocation3 + $0x20] sm:$0xf]
    %v92 = vld [vmem:[#allocation3 + $0x24] sm:$0xf]
    %v93 = vld [vmem:[#allocation3 + $0x28] sm:$0xf]
    %v94 = vld [vmem:[#allocation3 + $0x2c] sm:$0xf]
    %v95 = vld [vmem:[#allocation3 + $0x30] sm:$0xf]
    %v96 = vld [vmem:[#allocation3 + $0x34] sm:$0xf]
    %v97 = vld [vmem:[#allocation3 + $0x38] sm:$0xf]
    %v98 = vld [vmem:[#allocation3 + $0x3c] sm:$0xf]
    %v99 = vld [vmem:[#allocation3 + $0x40] sm:$0xf]
    %v100 = vld [vmem:[#allocation3 + $0x44] sm:$0xf]
    %v101 = vld [vmem:[#allocation3 + $0x48] sm:$0xf]
    %v102 = vld [vmem:[#allocation3 + $0x4c] sm:$0xf]
    %v103 = vld [vmem:[#allocation3 + $0x50] sm:$0xf]
    %v104 = vld [vmem:[#allocation3 + $0x54] sm:$0xf]
    %v105 = vld [vmem:[#allocation3 + $0x58] sm:$0xf]
    %v106 = vld [vmem:[#allocation3 + $0x5c] sm:$0xf]
    %v107 = vld [vmem:[#allocation3 + $0x60] sm:$0xf]
    %v108 = vld [vmem:[#allocation3 + $0x64] sm:$0xf]
    %v109 = vld [vmem:[#allocation3 + $0x68] sm:$0xf]
    %v110 = vld [vmem:[#allocation3 + $0x6c] sm:$0xf]
    %v111 = vld [vmem:[#allocation3 + $0x70] sm:$0xf]
    %v112 = vld [vmem:[#allocation3 + $0x74] sm:$0xf]
    %v113 = vld [vmem:[#allocation3 + $0x78] sm:$0xf]
    %v114 = vld [vmem:[#allocation3 + $0x7c] sm:$0xf]
    %v117 = vunpack.c.l.b16 %v81
    %v118 = vunpack.c.h.b16 %v81
    %v119 = vunpack.c.l.b16 %v82
    %v120 = vunpack.c.h.b16 %v82
    %v121 = vpack.c.b16 %v119, %v117
    %v122 = vpack.c.b16 %v120, %v118
    %v157 = vunpack.c.l.b16 %v83
    %v158 = vunpack.c.l.b16 %v84
    %v159 = vunpack.c.l.b16 %v85
    %v160 = vunpack.c.l.b16 %v86
    %v161 = vunpack.c.l.b16 %v87
    %v162 = vunpack.c.l.b16 %v88
    %v163 = vunpack.c.l.b16 %v89
    %v164 = vunpack.c.l.b16 %v90
    %v165 = vunpack.c.l.b16 %v91
    %v166 = vunpack.c.l.b16 %v92
    %v167 = vunpack.c.l.b16 %v93
    %v168 = vunpack.c.l.b16 %v94
    %v169 = vunpack.c.l.b16 %v95
    %v170 = vunpack.c.l.b16 %v96
    %v171 = vunpack.c.l.b16 %v97
    %v172 = vunpack.c.l.b16 %v98
    %v173 = vunpack.c.l.b16 %v99
    %v174 = vunpack.c.l.b16 %v100
    %v175 = vunpack.c.l.b16 %v101
    %v176 = vunpack.c.l.b16 %v102
    %v177 = vunpack.c.l.b16 %v103
    %v178 = vunpack.c.l.b16 %v104
    %v179 = vunpack.c.l.b16 %v105
    %v180 = vunpack.c.l.b16 %v106
    %v181 = vunpack.c.l.b16 %v107
    %v182 = vunpack.c.l.b16 %v108
    %v183 = vunpack.c.l.b16 %v109
    %v184 = vunpack.c.l.b16 %v110
    %v185 = vunpack.c.l.b16 %v111
    %v186 = vunpack.c.l.b16 %v112
    %v187 = vunpack.c.l.b16 %v113
    %v188 = vunpack.c.l.b16 %v114
    %v189 = vpack.c.b16 %v158, %v157
    %v190 = vpack.c.b16 %v160, %v159
    %v191 = vpack.c.b16 %v162, %v161
    %v192 = vpack.c.b16 %v164, %v163
    %v193 = vpack.c.b16 %v166, %v165
    %v194 = vpack.c.b16 %v168, %v167
    %v195 = vpack.c.b16 %v170, %v169
    %v196 = vpack.c.b16 %v172, %v171
    %v197 = vpack.c.b16 %v174, %v173
    %v198 = vpack.c.b16 %v176, %v175
    %v199 = vpack.c.b16 %v178, %v177
    %v200 = vpack.c.b16 %v180, %v179
    %v201 = vpack.c.b16 %v182, %v181
    %v202 = vpack.c.b16 %v184, %v183
    %v203 = vpack.c.b16 %v186, %v185
    %v204 = vpack.c.b16 %v188, %v187
    %221 = vmatprep.subr.bf16.mxu0 0
    %222 = vmatpush1.bf16.msra.mxu0 %v189
    %223 = vmatprep.subr.bf16.mxu0 0
    %224 = vmatpush1.bf16.msra.mxu0 %v190
    %225 = vmatprep.subr.bf16.mxu0 0
    %226 = vmatpush1.bf16.msra.mxu0 %v191
    %227 = vmatprep.subr.bf16.mxu0 0
    %228 = vmatpush1.bf16.msra.mxu0 %v192
    %229 = vmatprep.subr.bf16.mxu0 0
    %230 = vmatpush1.bf16.msra.mxu0 %v193
    %231 = vmatprep.subr.bf16.mxu0 0
    %232 = vmatpush1.bf16.msra.mxu0 %v194
    %233 = vmatprep.subr.bf16.mxu0 0
    %234 = vmatpush1.bf16.msra.mxu0 %v195
    %235 = vmatprep.subr.bf16.mxu0 0
    %236 = vmatpush1.bf16.msra.mxu0 %v196
    %237 = vmatprep.subr.bf16.mxu0 0
    %238 = vmatpush1.bf16.msra.mxu0 %v197
    %239 = vmatprep.subr.bf16.mxu0 0
    %240 = vmatpush1.bf16.msra.mxu0 %v198
    %241 = vmatprep.subr.bf16.mxu0 0
    %242 = vmatpush1.bf16.msra.mxu0 %v199
    %243 = vmatprep.subr.bf16.mxu0 0
    %244 = vmatpush1.bf16.msra.mxu0 %v200
    %245 = vmatprep.subr.bf16.mxu0 0
    %246 = vmatpush1.bf16.msra.mxu0 %v201
    %247 = vmatprep.subr.bf16.mxu0 0
    %248 = vmatpush1.bf16.msra.mxu0 %v202
    %249 = vmatprep.subr.bf16.mxu0 0
    %250 = vmatpush1.bf16.msra.mxu0 %v203
    %251 = vmatprep.subr.bf16.mxu0 0
    %252 = vmatpush1.bf16.msra.mxu0 %v204
    %253 = vmatprep.mubr.bf16.mxu0 %v122
    %254 = vmatmul.mubr.bf16.gmra.mrb[0].mxu0 %v121
    %v255 = vpop.f32.mrb[0].mxu0
    %v256 = vadd.f32 0.0, %v255
    %v257 = vpop.f32.mrb[0].mxu0
    %v258 = vpop.f32.mrb[0].mxu0
    %v259 = vadd.f32 0.0, %v258
    %v260 = vpop.f32.mrb[0].mxu0
    %261 = vdwg.mxu0
    %v262 = vadd.f32 %v79, %v256
    %v263 = vadd.f32 %v80, %v259
    %264 = vst [vmem:[#allocation2] sm:$0xff] %v262
    %265 = vst [vmem:[#allocation2 + $0x8] sm:$0xff] %v263
    // Predicated region
    $region46: #{bert_encoder_forward.17} parent=1 // pred_check
      %p266 = pneg %p73
    $region47: #{bert_encoder_forward.17} parent=1 // pred_check_branch
      %268 = sbr.rel (%p266) target = $region49
    $region48: #{bert_encoder_forward.17} parent=1 // pred_region
      %v269 = vld [vmem:[#allocation2] sm:$0xff]
      %v270 = vld [vmem:[#allocation2 + $0x8] sm:$0xff]
      %v271 = vld [vmem:[#allocation5] sm:$0x1]
      %v273 = vlaneseq
      %v274 = vshrl.u32 %v273, 7
      %v275 = vsub.s32 0, %v274
      %v276 = vrot.slane %v271, %v275
      %v278 = vadd.f32 %v269, %v276
      %v279 = vadd.f32 %v270, %v276
      %v280 = vld [vmem:[%s3] sm:$0xf]
      %v281 = vld [vmem:[%s3 + $0x4] sm:$0xf]
      %v282 = vunpack.c.l.bf16 %v280
      %v283 = vunpack.c.l.bf16 %v281
      %v284 = vadd.f32 %v278, %v282
      %v285 = vadd.f32 %v279, %v283
      %286 = vadd.xlane.f32.xlu0 %v284
      %v287 = vpop.xlane.xlu0 %286
      %288 = vadd.xlane.f32.xlu0 %v285
      %v289 = vpop.xlane.xlu0 %288
      %v290 = vrcp.pop 128.0
      %v291 = vmul.f32 %v287, %v290
      %v292 = vmul.f32 %v289, %v290
      %v293 = vsub.f32 %v284, %v291
      %v294 = vsub.f32 %v285, %v292
      %v295 = vmul.f32 %v293, %v293
      %v296 = vmul.f32 %v294, %v294
      %297 = vadd.xlane.f32.xlu0 %v295
      %v298 = vpop.xlane.xlu0 %297
      %299 = vadd.xlane.f32.xlu0 %v296
      %v300 = vpop.xlane.xlu0 %299
      %v301 = vmul.f32 %v298, %v290
      %v302 = vmul.f32 %v300, %v290
      %v303 = vadd.f32 %v301, 1e-12
      %v304 = vadd.f32 %v302, 1e-12
      %v305 = vrsqrt.pop %v303
      %v306 = vrsqrt.pop %v304
      %v307 = vmul.f32 %v293, %v305
      %v308 = vmul.f32 %v294, %v306
      %v309 = vld [vmem:[#allocation7] sm:$0x1]
      %v311 = vlaneseq
      %v312 = vshrl.u32 %v311, 7
      %v313 = vsub.s32 0, %v312
      %v314 = vrot.slane %v309, %v313
      %v316 = vmul.f32 %v307, %v314
      %v317 = vmul.f32 %v308, %v314
      %v318 = vld [vmem:[#allocation8] sm:$0x1]
      %v320 = vlaneseq
      %v321 = vshrl.u32 %v320, 7
      %v322 = vsub.s32 0, %v321
      %v323 = vrot.slane %v318, %v322
      %v325 = vadd.f32 %v316, %v323
      %v326 = vadd.f32 %v317, %v323
      %v327 = vpack.c.bf16 %v326, %v325
      %v329 = vunpack.c.l.b16 %v327
      %v330 = vunpack.c.h.b16 %v327
      %v331 = vpack.c.b16 %v329, %v329
      %v332 = vpack.c.b16 %v330, %v330
      %335 = vst [vmem:[%s6] sm:$0xf] %v331
      %336 = vst [vmem:[%s6 + $0x4] sm:$0xf] %v332
    $region49: #{bert_encoder_forward.17} parent=1 // pred_fallthru
      _
    // Predicated region
    $region50: #{bert_encoder_forward.17} parent=1 // pred_check
      _
    $region51: #{bert_encoder_forward.17} parent=1 // pred_check_branch
      %338 = sbr.rel (0) target = $region53
    $region52: #{bert_encoder_forward.17} parent=1 // pred_region
      _
    $region53: #{bert_encoder_forward.17} parent=1 // pred_fallthru
      _
    // Predicated region
    $region54: #{bert_encoder_forward.17} parent=1 // pred_check
      _
    $region55: #{bert_encoder_forward.17} parent=1 // pred_check_branch
      %340 = sbr.rel (0) target = $region57
    $region56: #{bert_encoder_forward.17} parent=1 // pred_region
      _
    $region57: #{bert_encoder_forward.17} parent=1 // pred_fallthru
      _
    %341 = vsyncpa [#allocation4], 1
    %342 = vsyncpa [#allocation6], 1
    %343 = vsyncpa [#allocation9], 1

// kernel: bert_encoder_forward.16
$region0: #{bert_encoder_forward.16}
  #allocation0 [shape = 'u32[]', space=smem, size = 0x4, offset = 0x4, fixed_abs, tag = 'smem constant byte address 0x4 - core index']
  #allocation1 [shape = 'u32[144,128]{1,0:T(1,128)}', space=vmem, size = 0x12000, scoped, tag = 'internal scratch']
  #allocation2 [shape = 'f32[16,256]{1,0:T(8,128)}', space=vmem, size = 0x4000, scoped, tag = 'scratch operand']
  %s0 = inlined_call_operand.vmem [shape: bf16[16,128], index: 0, kind: input, shape index: {}]
  %s1 = inlined_call_operand.hbm [shape: bf16[128,256], index: 1, kind: input, shape index: {}]
  %s2 = inlined_call_operand.hbm [shape: f32[1,256], index: 2, kind: input, shape index: {}]
  %s3 = inlined_call_operand.vmem [shape: bf16[16,256], index: 3, kind: output, shape index: {}]
  %s4 = sld [smem:[#allocation0]]
  $region38: #{bert_encoder_forward.16} parent=0
    _
  %s6 = ssub.s32 1, %s4
  %s7 = scalar_select 0, %s6, %s4
  $region1: #{bert_encoder_forward.16} parent=0
    #allocation3 [shape = 'u8[65536]{0}', space=vmem, size = 0x10000, scoped, tag = 'input window, operand 1, single buffered']
    #allocation4 [shape = 's32[1]{0}', space=sflag, size = 0x4, scoped, tag = 'scoped memory for bert_encoder_forward.16']
    #allocation5 [shape = 'u8[1024]{0}', space=vmem, size = 0x400, scoped, tag = 'input window, operand 2, single buffered']
    #allocation6 [shape = 's32[1]{0}', space=sflag, size = 0x4, scoped, tag = 'scoped memory for bert_encoder_forward.16']
    %8 = vsyncpa [#allocation4], 0
    %9 = vsyncpa [#allocation6], 0
    // Predicated region
    $region2: #{bert_encoder_forward.16} parent=1 // pred_check
      _
    $region3: #{bert_encoder_forward.16} parent=1 // pred_check_branch
      %11 = sbr.rel (0) target = $region5
    $region4: #{bert_encoder_forward.16} parent=1 // pred_region
      _
    $region5: #{bert_encoder_forward.16} parent=1 // pred_fallthru
      _
    // Predicated region
    $region6: #{bert_encoder_forward.16} parent=1 // pred_check
      _
    $region7: #{bert_encoder_forward.16} parent=1 // pred_check_branch
      %13 = sbr.rel (0) target = $region9
    $region8: #{bert_encoder_forward.16} parent=1 // pred_region
      %s15 = ssub.s32 2048, 2048
      %16 = vsyncadd [#allocation4], %s15
      %s17 = sshll.u32 [#allocation3], 4
      %s18 = int_to_ptr.vmem [resolvable:$true] %s17
      %23 = dma.hbm_to_vmem [thread:$0]  %s1, 2048, %s18, [#allocation4], 128, 128, 8
    $region9: #{bert_encoder_forward.16} parent=1 // pred_fallthru
      _
    // Predicated region
    $region10: #{bert_encoder_forward.16} parent=1 // pred_check
      _
    $region11: #{bert_encoder_forward.16} parent=1 // pred_check_branch
      %25 = sbr.rel (0) target = $region13
    $region12: #{bert_encoder_forward.16} parent=1 // pred_region
      %s27 = ssub.s32 32, 32
      %28 = vsyncadd [#allocation6], %s27
      %s30 = sshll.u32 [#allocation5], 4
      %s31 = int_to_ptr.vmem [resolvable:$true] %s30
      %33 = dma.hbm_to_vmem [thread:$0]  %s2, 32, %s31, [#allocation6]
    $region13: #{bert_encoder_forward.16} parent=1 // pred_fallthru
      _
    // Predicated region
    $region14: #{bert_encoder_forward.16} parent=1 // pred_check
      _
    $region15: #{bert_encoder_forward.16} parent=1 // pred_check_branch
      %35 = sbr.rel (0) target = $region17
    $region16: #{bert_encoder_forward.16} parent=1 // pred_region
      %36 = dma.done [#allocation4], 2048
    $region17: #{bert_encoder_forward.16} parent=1 // pred_fallthru
      _
    // Predicated region
    $region18: #{bert_encoder_forward.16} parent=1 // pred_check
      _
    $region19: #{bert_encoder_forward.16} parent=1 // pred_check_branch
      %38 = sbr.rel (0) target = $region21
    $region20: #{bert_encoder_forward.16} parent=1 // pred_region
      %39 = dma.done [#allocation6], 32
    $region21: #{bert_encoder_forward.16} parent=1 // pred_fallthru
      _
    %p41 = scmp.eq.s32.totalorder 0, 0
    // Predicated region
    $region22: #{bert_encoder_forward.16} parent=1 // pred_check
      %p42 = pneg %p41
    $region23: #{bert_encoder_forward.16} parent=1 // pred_check_branch
      %44 = sbr.rel (%p42) target = $region25
    $region24: #{bert_encoder_forward.16} parent=1 // pred_region
      %45 = vst [vmem:[#allocation2] sm:$0xff] 0.0
      %46 = vst [vmem:[#allocation2 + $0x8] sm:$0xff] 0.0
      %47 = vst [vmem:[#allocation2 + $0x10] sm:$0xff] 0.0
      %48 = vst [vmem:[#allocation2 + $0x18] sm:$0xff] 0.0
    $region25: #{bert_encoder_forward.16} parent=1 // pred_fallthru
      _
    %v49 = vld [vmem:[#allocation2] sm:$0xff]
    %v50 = vld [vmem:[#allocation2 + $0x8] sm:$0xff]
    %v51 = vld [vmem:[#allocation2 + $0x10] sm:$0xff]
    %v52 = vld [vmem:[#allocation2 + $0x18] sm:$0xff]
    %v53 = vld [vmem:[%s0] sm:$0xf]
    %v54 = vld [vmem:[%s0 + $0x4] sm:$0xf]
    %v55 = vld [vmem:[#allocation3] sm:$0xff]
    %v56 = vld [vmem:[#allocation3 + $0x8] sm:$0xff]
    %v57 = vld [vmem:[#allocation3 + $0x10] sm:$0xff]
    %v58 = vld [vmem:[#allocation3 + $0x18] sm:$0xff]
    %v59 = vld [vmem:[#allocation3 + $0x20] sm:$0xff]
    %v60 = vld [vmem:[#allocation3 + $0x28] sm:$0xff]
    %v61 = vld [vmem:[#allocation3 + $0x30] sm:$0xff]
    %v62 = vld [vmem:[#allocation3 + $0x38] sm:$0xff]
    %v63 = vld [vmem:[#allocation3 + $0x40] sm:$0xff]
    %v64 = vld [vmem:[#allocation3 + $0x48] sm:$0xff]
    %v65 = vld [vmem:[#allocation3 + $0x50] sm:$0xff]
    %v66 = vld [vmem:[#allocation3 + $0x58] sm:$0xff]
    %v67 = vld [vmem:[#allocation3 + $0x60] sm:$0xff]
    %v68 = vld [vmem:[#allocation3 + $0x68] sm:$0xff]
    %v69 = vld [vmem:[#allocation3 + $0x70] sm:$0xff]
    %v70 = vld [vmem:[#allocation3 + $0x78] sm:$0xff]
    %v73 = vunpack.c.l.b16 %v53
    %v74 = vunpack.c.l.b16 %v54
    %v75 = vpack.c.b16 %v74, %v73
    %v93 = vunpack.c.l.b16 %v55
    %v94 = vunpack.c.h.b16 %v55
    %v95 = vunpack.c.l.b16 %v56
    %v96 = vunpack.c.h.b16 %v56
    %v97 = vunpack.c.l.b16 %v57
    %v98 = vunpack.c.h.b16 %v57
    %v99 = vunpack.c.l.b16 %v58
    %v100 = vunpack.c.h.b16 %v58
    %v101 = vunpack.c.l.b16 %v59
    %v102 = vunpack.c.h.b16 %v59
    %v103 = vunpack.c.l.b16 %v60
    %v104 = vunpack.c.h.b16 %v60
    %v105 = vunpack.c.l.b16 %v61
    %v106 = vunpack.c.h.b16 %v61
    %v107 = vunpack.c.l.b16 %v62
    %v108 = vunpack.c.h.b16 %v62
    %v109 = vunpack.c.l.b16 %v63
    %v110 = vunpack.c.h.b16 %v63
    %v111 = vunpack.c.l.b16 %v64
    %v112 = vunpack.c.h.b16 %v64
    %v113 = vunpack.c.l.b16 %v65
    %v114 = vunpack.c.h.b16 %v65
    %v115 = vunpack.c.l.b16 %v66
    %v116 = vunpack.c.h.b16 %v66
    %v117 = vunpack.c.l.b16 %v67
    %v118 = vunpack.c.h.b16 %v67
    %v119 = vunpack.c.l.b16 %v68
    %v120 = vunpack.c.h.b16 %v68
    %v121 = vunpack.c.l.b16 %v69
    %v122 = vunpack.c.h.b16 %v69
    %v123 = vunpack.c.l.b16 %v70
    %v124 = vunpack.c.h.b16 %v70
    %v125 = vpack.c.b16 %v95, %v93
    %v126 = vpack.c.b16 %v96, %v94
    %v127 = vpack.c.b16 %v99, %v97
    %v128 = vpack.c.b16 %v100, %v98
    %v129 = vpack.c.b16 %v103, %v101
    %v130 = vpack.c.b16 %v104, %v102
    %v131 = vpack.c.b16 %v107, %v105
    %v132 = vpack.c.b16 %v108, %v106
    %v133 = vpack.c.b16 %v111, %v109
    %v134 = vpack.c.b16 %v112, %v110
    %v135 = vpack.c.b16 %v115, %v113
    %v136 = vpack.c.b16 %v116, %v114
    %v137 = vpack.c.b16 %v119, %v117
    %v138 = vpack.c.b16 %v120, %v118
    %v139 = vpack.c.b16 %v123, %v121
    %v140 = vpack.c.b16 %v124, %v122
    %157 = vmatprep.subr.bf16.mxu0 %v126
    %158 = vmatpush1.bf16.msra.mxu0 %v125
    %159 = vmatprep.subr.bf16.mxu0 %v128
    %160 = vmatpush1.bf16.msra.mxu0 %v127
    %161 = vmatprep.subr.bf16.mxu0 %v130
    %162 = vmatpush1.bf16.msra.mxu0 %v129
    %163 = vmatprep.subr.bf16.mxu0 %v132
    %164 = vmatpush1.bf16.msra.mxu0 %v131
    %165 = vmatprep.subr.bf16.mxu0 %v134
    %166 = vmatpush1.bf16.msra.mxu0 %v133
    %167 = vmatprep.subr.bf16.mxu0 %v136
    %168 = vmatpush1.bf16.msra.mxu0 %v135
    %169 = vmatprep.subr.bf16.mxu0 %v138
    %170 = vmatpush1.bf16.msra.mxu0 %v137
    %171 = vmatprep.subr.bf16.mxu0 %v140
    %172 = vmatpush1.bf16.msra.mxu0 %v139
    %173 = vmatprep.subr.bf16.mxu0 0
    %174 = vmatpush1.bf16.msra.mxu0 0
    %175 = vmatprep.subr.bf16.mxu0 0
    %176 = vmatpush1.bf16.msra.mxu0 0
    %177 = vmatprep.subr.bf16.mxu0 0
    %178 = vmatpush1.bf16.msra.mxu0 0
    %179 = vmatprep.subr.bf16.mxu0 0
    %180 = vmatpush1.bf16.msra.mxu0 0
    %181 = vmatprep.subr.bf16.mxu0 0
    %182 = vmatpush1.bf16.msra.mxu0 0
    %183 = vmatprep.subr.bf16.mxu0 0
    %184 = vmatpush1.bf16.msra.mxu0 0
    %185 = vmatprep.subr.bf16.mxu0 0
    %186 = vmatpush1.bf16.msra.mxu0 0
    %187 = vmatprep.subr.bf16.mxu0 0
    %188 = vmatpush1.bf16.msra.mxu0 0
    %189 = vmatprep.mubr.bf16.mxu0 0
    %190 = vmatmul.mubr.bf16.gmra.mrb[0].mxu0 %v75
    %v191 = vpop.f32.mrb[0].mxu0
    %v192 = vadd.f32 0.0, %v191
    %v193 = vpop.f32.mrb[0].mxu0
    %v194 = vadd.f32 0.0, %v193
    %v195 = vpop.f32.mrb[0].mxu0
    %v196 = vadd.f32 0.0, %v195
    %v197 = vpop.f32.mrb[0].mxu0
    %v198 = vadd.f32 0.0, %v197
    %199 = vdwg.mxu0
    %v200 = vadd.f32 %v49, %v192
    %v201 = vadd.f32 %v50, %v194
    %v202 = vadd.f32 %v51, %v196
    %v203 = vadd.f32 %v52, %v198
    %204 = vst [vmem:[#allocation2] sm:$0xff] %v200
    %205 = vst [vmem:[#allocation2 + $0x8] sm:$0xff] %v201
    %206 = vst [vmem:[#allocation2 + $0x10] sm:$0xff] %v202
    %207 = vst [vmem:[#allocation2 + $0x18] sm:$0xff] %v203
    // Predicated region
    $region26: #{bert_encoder_forward.16} parent=1 // pred_check
      %p208 = pneg %p41
    $region27: #{bert_encoder_forward.16} parent=1 // pred_check_branch
      %210 = sbr.rel (%p208) target = $region29
    $region28: #{bert_encoder_forward.16} parent=1 // pred_region
      %v211 = vld [vmem:[#allocation2] sm:$0xff]
      %v212 = vld [vmem:[#allocation2 + $0x8] sm:$0xff]
      %v213 = vld [vmem:[#allocation2 + $0x10] sm:$0xff]
      %v214 = vld [vmem:[#allocation2 + $0x18] sm:$0xff]
      %v215 = vld [vmem:[#allocation5] sm:$0x3]
      %v217 = vlaneseq
      %v218 = vshrl.u32 %v217, 7
      %v219 = vsub.s32 0, %v218
      %v220 = vrot.slane %v215, %v219
      %v221 = vlaneseq
      %v222 = vshrl.u32 %v221, 7
      %v223 = vsub.s32 1, %v222
      %v224 = vrot.slane %v215, %v223
      %v227 = vadd.f32 %v211, %v220
      %v228 = vadd.f32 %v212, %v224
      %v229 = vadd.f32 %v213, %v220
      %v230 = vadd.f32 %v214, %v224
      %v231 = vmul.f32 %v227, 0.5
      %v232 = vmul.f32 %v228, 0.5
      %v233 = vmul.f32 %v229, 0.5
      %v234 = vmul.f32 %v230, 0.5
      %v235 = vmul.f32 %v227, 0.044715
      %v236 = vmul.f32 %v228, 0.044715
      %v237 = vmul.f32 %v229, 0.044715
      %v238 = vmul.f32 %v230, 0.044715
      %v239 = vmul.f32 %v235, %v227
      %v240 = vmul.f32 %v236, %v228
      %v241 = vmul.f32 %v237, %v229
      %v242 = vmul.f32 %v238, %v230
      %v243 = vmul.f32 %v239, %v227
      %v244 = vmul.f32 %v240, %v228
      %v245 = vmul.f32 %v241, %v229
      %v246 = vmul.f32 %v242, %v230
      %v247 = vadd.f32 %v227, %v243
      %v248 = vadd.f32 %v228, %v244
      %v249 = vadd.f32 %v229, %v245
      %v250 = vadd.f32 %v230, %v246
      %v251 = vmul.f32 %v247, 0.7978846
      %v252 = vmul.f32 %v248, 0.7978846
      %v253 = vmul.f32 %v249, 0.7978846
      %v254 = vmul.f32 %v250, 0.7978846
      %v255 = vtanh.pop %v251
      %v256 = vtanh.pop %v252
      %v257 = vtanh.pop %v253
      %v258 = vtanh.pop %v254
      %v259 = vadd.f32 %v255, 1.0
      %v260 = vadd.f32 %v256, 1.0
      %v261 = vadd.f32 %v257, 1.0
      %v262 = vadd.f32 %v258, 1.0
      %v263 = vmul.f32 %v231, %v259
      %v264 = vmul.f32 %v232, %v260
      %v265 = vmul.f32 %v233, %v261
      %v266 = vmul.f32 %v234, %v262
      %v267 = vpack.c.bf16 %v265, %v263
      %v268 = vpack.c.bf16 %v266, %v264
      %v271 = vunpack.c.l.b16 %v267
      %v272 = vunpack.c.l.b16 %v268
      %v273 = vunpack.c.h.b16 %v267
      %v274 = vunpack.c.h.b16 %v268
      %v275 = vpack.c.b16 %v272, %v271
      %v276 = vpack.c.b16 %v274, %v273
      %279 = vst [vmem:[%s3] sm:$0xff] %v275
      %280 = vst [vmem:[%s3 + $0x8] sm:$0xff] %v276
    $region29: #{bert_encoder_forward.16} parent=1 // pred_fallthru
      _
    // Predicated region
    $region30: #{bert_encoder_forward.16} parent=1 // pred_check
      _
    $region31: #{bert_encoder_forward.16} parent=1 // pred_check_branch
      %282 = sbr.rel (0) target = $region33
    $region32: #{bert_encoder_forward.16} parent=1 // pred_region
      _
    $region33: #{bert_encoder_forward.16} parent=1 // pred_fallthru
      _
    // Predicated region
    $region34: #{bert_encoder_forward.16} parent=1 // pred_check
      _
    $region35: #{bert_encoder_forward.16} parent=1 // pred_check_branch
      %284 = sbr.rel (0) target = $region37
    $region36: #{bert_encoder_forward.16} parent=1 // pred_region
      _
    $region37: #{bert_encoder_forward.16} parent=1 // pred_fallthru
      _
    %285 = vsyncpa [#allocation4], 1
    %286 = vsyncpa [#allocation6], 1

// kernel: bert_encoder_forward.23
$region0: #{bert_encoder_forward.23}
  #allocation0 [shape = 'u32[]', space=smem, size = 0x4, offset = 0x4, fixed_abs, tag = 'smem constant byte address 0x4 - core index']
  #allocation1 [shape = 'u32[144,128]{1,0:T(1,128)}', space=vmem, size = 0x12000, scoped, tag = 'internal scratch']
  #allocation2 [shape = 'f32[2,64]{1,0:T(2,128)}', space=vmem, size = 0x400, scoped, tag = 'scratch operand']
  %s0 = inlined_call_operand.vmem [shape: bf16[2,256], index: 0, kind: input, shape index: {}]
  %s1 = inlined_call_operand.vmem [shape: bf16[256,64], index: 1, kind: input, shape index: {}]
  %s2 = inlined_call_operand.hbm [shape: f32[1,64], index: 2, kind: input, shape index: {}]
  %s3 = inlined_call_operand.hbm [shape: f32[2,64], index: 3, kind: output, shape index: {}]
  %s4 = sld [smem:[#allocation0]]
  $region34: #{bert_encoder_forward.23} parent=0
    _
  %s6 = ssub.s32 1, %s4
  %s7 = scalar_select 0, %s6, %s4
  $region1: #{bert_encoder_forward.23} parent=0
    #allocation3 [shape = 'u8[512]{0}', space=vmem, size = 0x400, scoped, tag = 'input window, operand 2, single buffered']
    #allocation4 [shape = 's32[1]{0}', space=sflag, size = 0x4, scoped, tag = 'scoped memory for bert_encoder_forward.23']
    #allocation5 [shape = 's32[1]{0}', space=sflag, size = 0x4, scoped, tag = 'scoped memory for bert_encoder_forward.23']
    #allocation6 [shape = 'u8[1024]{0}', space=vmem, size = 0x400, scoped, tag = 'output window, operand 0, single buffered']
    %8 = vsyncpa [#allocation4], 0
    %9 = vsyncpa [#allocation5], 0
    // Predicated region
    $region2: #{bert_encoder_forward.23} parent=1 // pred_check
      _
    $region3: #{bert_encoder_forward.23} parent=1 // pred_check_branch
      %11 = sbr.rel (0) target = $region5
    $region4: #{bert_encoder_forward.23} parent=1 // pred_region
      _
    $region5: #{bert_encoder_forward.23} parent=1 // pred_fallthru
      _
    // Predicated region
    $region6: #{bert_encoder_forward.23} parent=1 // pred_check
      _
    $region7: #{bert_encoder_forward.23} parent=1 // pred_check_branch
      %13 = sbr.rel (0) target = $region9
    $region8: #{bert_encoder_forward.23} parent=1 // pred_region
      _
    $region9: #{bert_encoder_forward.23} parent=1 // pred_fallthru
      _
    // Predicated region
    $region10: #{bert_encoder_forward.23} parent=1 // pred_check
      _
    $region11: #{bert_encoder_forward.23} parent=1 // pred_check_branch
      %15 = sbr.rel (0) target = $region13
    $region12: #{bert_encoder_forward.23} parent=1 // pred_region
      %s17 = ssub.s32 16, 16
      %18 = vsyncadd [#allocation4], %s17
      %s20 = sshll.u32 [#allocation3], 4
      %s21 = int_to_ptr.vmem [resolvable:$true] %s20
      %23 = dma.hbm_to_vmem [thread:$0]  %s2, 16, %s21, [#allocation4]
    $region13: #{bert_encoder_forward.23} parent=1 // pred_fallthru
      _
    // Predicated region
    $region14: #{bert_encoder_forward.23} parent=1 // pred_check
      _
    $region15: #{bert_encoder_forward.23} parent=1 // pred_check_branch
      %25 = sbr.rel (0) target = $region17
    $region16: #{bert_encoder_forward.23} parent=1 // pred_region
      %26 = dma.done [#allocation4], 16
    $region17: #{bert_encoder_forward.23} parent=1 // pred_fallthru
      _
    %p28 = scmp.eq.s32.totalorder 0, 0
    // Predicated region
    $region18: #{bert_encoder_forward.23} parent=1 // pred_check
      %p29 = pneg %p28
    $region19: #{bert_encoder_forward.23} parent=1 // pred_check_branch
      %31 = sbr.rel (%p29) target = $region21
    $region20: #{bert_encoder_forward.23} parent=1 // pred_region
      %vm32 = vcmask 517120
      %33 = vst.msk [vmem:[#allocation2] sm:$0x3] %vm32, 0.0
    $region21: #{bert_encoder_forward.23} parent=1 // pred_fallthru
      _
    %v34 = vld [vmem:[#allocation2] sm:$0x3]
    %v35 = vld [vmem:[%s0] sm:$0x3]
    %v36 = vld [vmem:[%s1] sm:$0xf]
    %v37 = vld [vmem:[%s1 + $0x4] sm:$0xf]
    %v38 = vld [vmem:[%s1 + $0x8] sm:$0xf]
    %v39 = vld [vmem:[%s1 + $0xc] sm:$0xf]
    %v40 = vld [vmem:[%s1 + $0x10] sm:$0xf]
    %v41 = vld [vmem:[%s1 + $0x14] sm:$0xf]
    %v42 = vld [vmem:[%s1 + $0x18] sm:$0xf]
    %v43 = vld [vmem:[%s1 + $0x1c] sm:$0xf]
    %v44 = vld [vmem:[%s1 + $0x20] sm:$0xf]
    %v45 = vld [vmem:[%s1 + $0x24] sm:$0xf]
    %v46 = vld [vmem:[%s1 + $0x28] sm:$0xf]
    %v47 = vld [vmem:[%s1 + $0x2c] sm:$0xf]
    %v48 = vld [vmem:[%s1 + $0x30] sm:$0xf]
    %v49 = vld [vmem:[%s1 + $0x34] sm:$0xf]
    %v50 = vld [vmem:[%s1 + $0x38] sm:$0xf]
    %v51 = vld [vmem:[%s1 + $0x3c] sm:$0xf]
    %v52 = vld [vmem:[%s1 + $0x40] sm:$0xf]
    %v53 = vld [vmem:[%s1 + $0x44] sm:$0xf]
    %v54 = vld [vmem:[%s1 + $0x48] sm:$0xf]
    %v55 = vld [vmem:[%s1 + $0x4c] sm:$0xf]
    %v56 = vld [vmem:[%s1 + $0x50] sm:$0xf]
    %v57 = vld [vmem:[%s1 + $0x54] sm:$0xf]
    %v58 = vld [vmem:[%s1 + $0x58] sm:$0xf]
    %v59 = vld [vmem:[%s1 + $0x5c] sm:$0xf]
    %v60 = vld [vmem:[%s1 + $0x60] sm:$0xf]
    %v61 = vld [vmem:[%s1 + $0x64] sm:$0xf]
    %v62 = vld [vmem:[%s1 + $0x68] sm:$0xf]
    %v63 = vld [vmem:[%s1 + $0x6c] sm:$0xf]
    %v64 = vld [vmem:[%s1 + $0x70] sm:$0xf]
    %v65 = vld [vmem:[%s1 + $0x74] sm:$0xf]
    %v66 = vld [vmem:[%s1 + $0x78] sm:$0xf]
    %v67 = vld [vmem:[%s1 + $0x7c] sm:$0xf]
    %v70 = vunpack.c.l.s4 1966171168
    %v71 = vunpack.c.0.s8 %v70
    %v72 = vlaneseq
    %v73 = vshrl.u32 %v72, 7
    %v74 = vsub.s32 %v71, %v73
    %v75 = vrot.slane %v35, %v74
    %v76 = vcombine.high %v75, %v75
    %v78 = vunpack.c.l.s4 1966171168
    %v79 = vunpack.c.0.s8 %v78
    %v80 = vlaneseq
    %v81 = vshrl.u32 %v80, 7
    %v82 = vsub.s32 %v79, %v81
    %v83 = vrot.slane %v75, %v82
    %v85 = vunpack.c.l.s4 1966171168
    %v86 = vunpack.c.0.s8 %v85
    %v87 = vlaneseq
    %v88 = vshrl.u32 %v87, 7
    %v89 = vsub.s32 %v86, %v88
    %v90 = vrot.slane %v76, %v89
    %v125 = vunpack.c.l.b16 %v36
    %v126 = vunpack.c.l.b16 %v37
    %v127 = vunpack.c.l.b16 %v38
    %v128 = vunpack.c.l.b16 %v39
    %v129 = vunpack.c.l.b16 %v40
    %v130 = vunpack.c.l.b16 %v41
    %v131 = vunpack.c.l.b16 %v42
    %v132 = vunpack.c.l.b16 %v43
    %v133 = vunpack.c.l.b16 %v44
    %v134 = vunpack.c.l.b16 %v45
    %v135 = vunpack.c.l.b16 %v46
    %v136 = vunpack.c.l.b16 %v47
    %v137 = vunpack.c.l.b16 %v48
    %v138 = vunpack.c.l.b16 %v49
    %v139 = vunpack.c.l.b16 %v50
    %v140 = vunpack.c.l.b16 %v51
    %v141 = vunpack.c.l.b16 %v52
    %v142 = vunpack.c.l.b16 %v53
    %v143 = vunpack.c.l.b16 %v54
    %v144 = vunpack.c.l.b16 %v55
    %v145 = vunpack.c.l.b16 %v56
    %v146 = vunpack.c.l.b16 %v57
    %v147 = vunpack.c.l.b16 %v58
    %v148 = vunpack.c.l.b16 %v59
    %v149 = vunpack.c.l.b16 %v60
    %v150 = vunpack.c.l.b16 %v61
    %v151 = vunpack.c.l.b16 %v62
    %v152 = vunpack.c.l.b16 %v63
    %v153 = vunpack.c.l.b16 %v64
    %v154 = vunpack.c.l.b16 %v65
    %v155 = vunpack.c.l.b16 %v66
    %v156 = vunpack.c.l.b16 %v67
    %v157 = vpack.c.b16 %v126, %v125
    %v158 = vpack.c.b16 %v128, %v127
    %v159 = vpack.c.b16 %v130, %v129
    %v160 = vpack.c.b16 %v132, %v131
    %v161 = vpack.c.b16 %v134, %v133
    %v162 = vpack.c.b16 %v136, %v135
    %v163 = vpack.c.b16 %v138, %v137
    %v164 = vpack.c.b16 %v140, %v139
    %v165 = vpack.c.b16 %v142, %v141
    %v166 = vpack.c.b16 %v144, %v143
    %v167 = vpack.c.b16 %v146, %v145
    %v168 = vpack.c.b16 %v148, %v147
    %v169 = vpack.c.b16 %v150, %v149
    %v170 = vpack.c.b16 %v152, %v151
    %v171 = vpack.c.b16 %v154, %v153
    %v172 = vpack.c.b16 %v156, %v155
    %189 = vmatprep.subr.bf16.mxu0 0
    %190 = vmatpush1.bf16.msra.mxu0 %v157
    %191 = vmatprep.subr.bf16.mxu0 0
    %192 = vmatpush1.bf16.msra.mxu0 %v158
    %193 = vmatprep.subr.bf16.mxu0 0
    %194 = vmatpush1.bf16.msra.mxu0 %v159
    %195 = vmatprep.subr.bf16.mxu0 0
    %196 = vmatpush1.bf16.msra.mxu0 %v160
    %197 = vmatprep.subr.bf16.mxu0 0
    %198 = vmatpush1.bf16.msra.mxu0 %v161
    %199 = vmatprep.subr.bf16.mxu0 0
    %200 = vmatpush1.bf16.msra.mxu0 %v162
    %201 = vmatprep.subr.bf16.mxu0 0
    %202 = vmatpush1.bf16.msra.mxu0 %v163
    %203 = vmatprep.subr.bf16.mxu0 0
    %204 = vmatpush1.bf16.msra.mxu0 %v164
    %205 = vmatprep.subr.bf16.mxu0 0
    %206 = vmatpush1.bf16.msra.mxu0 %v165
    %207 = vmatprep.subr.bf16.mxu0 0
    %208 = vmatpush1.bf16.msra.mxu0 %v166
    %209 = vmatprep.subr.bf16.mxu0 0
    %210 = vmatpush1.bf16.msra.mxu0 %v167
    %211 = vmatprep.subr.bf16.mxu0 0
    %212 = vmatpush1.bf16.msra.mxu0 %v168
    %213 = vmatprep.subr.bf16.mxu0 0
    %214 = vmatpush1.bf16.msra.mxu0 %v169
    %215 = vmatprep.subr.bf16.mxu0 0
    %216 = vmatpush1.bf16.msra.mxu0 %v170
    %217 = vmatprep.subr.bf16.mxu0 0
    %218 = vmatpush1.bf16.msra.mxu0 %v171
    %219 = vmatprep.subr.bf16.mxu0 0
    %220 = vmatpush1.bf16.msra.mxu0 %v172
    %221 = vmatprep.mubr.bf16.mxu0 %v90
    %222 = vmatmul.mubr.bf16.gmra.mrb[0].mxu0 %v83
    %v223 = vpop.f32.mrb[0].mxu0
    %v224 = vadd.f32 0.0, %v223
    %v225 = vpop.f32.mrb[0].mxu0
    %v226 = vpop.f32.mrb[0].mxu0
    %v227 = vpop.f32.mrb[0].mxu0
    %228 = vdwg.mxu0
    %v229 = vadd.f32 %v34, %v224
    %vm230 = vcmask 517120
    %231 = vst.msk [vmem:[#allocation2] sm:$0x3] %vm230, %v229
    // Predicated region
    $region22: #{bert_encoder_forward.23} parent=1 // pred_check
      %p232 = pneg %p28
    $region23: #{bert_encoder_forward.23} parent=1 // pred_check_branch
      %234 = sbr.rel (%p232) target = $region25
    $region24: #{bert_encoder_forward.23} parent=1 // pred_region
      %v235 = vld [vmem:[#allocation2] sm:$0x3]
      %v236 = vld [vmem:[#allocation3] sm:$0x1]
      %v238 = vlaneseq
      %v239 = vshrl.u32 %v238, 7
      %v240 = vsub.s32 0, %v239
      %v241 = vrot.slane %v236, %v240
      %v243 = vadd.f32 %v235, %v241
      %244 = vst.msk [vmem:[#allocation6] sm:$0x3] %vm230, %v243
    $region25: #{bert_encoder_forward.23} parent=1 // pred_fallthru
      _
    // Predicated region
    $region26: #{bert_encoder_forward.23} parent=1 // pred_check
      _
    $region27: #{bert_encoder_forward.23} parent=1 // pred_check_branch
      %246 = sbr.rel (0) target = $region29
    $region28: #{bert_encoder_forward.23} parent=1 // pred_region
      %s248 = ssub.s32 32, 32
      %249 = vsyncadd [#allocation5], %s248
      %s251 = sshll.u32 [#allocation6], 4
      %s252 = int_to_ptr.vmem [resolvable:$true] %s251
      %254 = dma.vmem_to_hbm [thread:$0]  %s252, 32, %s3, [#allocation5]
    $region29: #{bert_encoder_forward.23} parent=1 // pred_fallthru
      _
    // Predicated region
    $region30: #{bert_encoder_forward.23} parent=1 // pred_check
      _
    $region31: #{bert_encoder_forward.23} parent=1 // pred_check_branch
      %256 = sbr.rel (0) target = $region33
    $region32: #{bert_encoder_forward.23} parent=1 // pred_region
      %257 = dma.done [#allocation5], 32
    $region33: #{bert_encoder_forward.23} parent=1 // pred_fallthru
      _
    %258 = vsyncpa [#allocation4], 1
    %259 = vsyncpa [#allocation5], 1

</llo_original>
